<compile_context>
chip_gen: v5e
topology: v5e:2x2
jax: 0.10.0
libtpu: 0.0.40
codegen_flags: <defaults>
</compile_context>

<pallas_src>
import math

import jax
import jax.numpy as jnp
from jax.experimental import pallas as pl
from jax.experimental.pallas import tpu as pltpu

BN_EPS = 1e-5
NEG_SLOPE = 0.2
LANE = 128


def _leaky_relu(x):
    return jnp.where(x > 0, x, NEG_SLOPE * x)


# ----------------------------------------------------------------------------
# Kernel 1: layers 1-4 (latent -> 1024 hidden), single VMEM-resident call.
# ----------------------------------------------------------------------------
def trunk_kernel(z_ref,
                 w1_ref, b1_ref,
                 w2_ref, b2_ref, g2_ref, be2_ref,
                 w3_ref, b3_ref, g3_ref, be3_ref,
                 w4_ref, b4_ref, g4_ref, be4_ref,
                 h_ref):
    def linear(x, w_ref, b_ref):
        # bf16 operands, fp32 accumulation on the MXU.
        return jnp.dot(x.astype(jnp.bfloat16), w_ref[...],
                       preferred_element_type=jnp.float32) + b_ref[...]

    def bn_train_folded(x, g_ref, be_ref):
        # Training-mode BatchNorm1d (biased batch variance) folded into one
        # per-element FMA: y = x * scale + shift.
        # NOTE: batch size 1 would give var = 0 (rsqrt(eps) blow-up), matching
        # PyTorch's degenerate behaviour; avoid batch=1 in training mode.
        mean = jnp.mean(x, axis=0, keepdims=True)
        var = jnp.mean((x - mean) ** 2, axis=0, keepdims=True)
        scale = g_ref[...] * jax.lax.rsqrt(var + BN_EPS)
        shift = be_ref[...] - mean * scale
        return x * scale + shift

    x = z_ref[...].astype(jnp.float32)
    x = _leaky_relu(linear(x, w1_ref, b1_ref))                                 # latent -> 128
    x = _leaky_relu(bn_train_folded(linear(x, w2_ref, b2_ref), g2_ref, be2_ref))  # 128 -> 256
    x = _leaky_relu(bn_train_folded(linear(x, w3_ref, b3_ref), g3_ref, be3_ref))  # 256 -> 512
    x = _leaky_relu(bn_train_folded(linear(x, w4_ref, b4_ref), g4_ref, be4_ref))  # 512 -> 1024
    h_ref[...] = x.astype(h_ref.dtype)


# ----------------------------------------------------------------------------
# Kernel 2: final Linear(1024, out_pad) + Sigmoid, gridded over output columns.
# ----------------------------------------------------------------------------
def final_kernel(h_ref, w5_ref, b5_ref, o_ref):
    x = jnp.dot(h_ref[...], w5_ref[...],
                preferred_element_type=jnp.float32) + b5_ref[...]
    # sigmoid = 1 / (1 + exp(-x)): exp on EUP, approx reciprocal on EUP
    # (keeps the VALU slots free on the largest tensor).
    o_ref[...] = pl.reciprocal(1.0 + jnp.exp(-x), approx=True).astype(o_ref.dtype)


# ----------------------------------------------------------------------------
# Parameters (weights stored transposed as (in, out), bf16; bias/BN in fp32).
# ----------------------------------------------------------------------------
def init_z_decoder_params(key, latent_dim, img_shape):
    out_dim = int(math.prod(img_shape))
    out_pad = pl.cdiv(out_dim, LANE) * LANE
    dims = [latent_dim, 128, 256, 512, 1024, out_dim]
    params = []
    keys = jax.random.split(key, len(dims) - 1)
    for i, (fan_in, fan_out) in enumerate(zip(dims[:-1], dims[1:])):
        kw, kb = jax.random.split(keys[i])
        bound = 1.0 / math.sqrt(fan_in)
        w = jax.random.uniform(kw, (fan_in, fan_out), jnp.float32, -bound, bound)
        b = jax.random.uniform(kb, (1, fan_out), jnp.float32, -bound, bound)
        if i == 4 and out_pad != out_dim:
            # Lane-pad the final layer's columns once at init time so the
            # kernel's output stores stay unmasked (lane-dense).
            w = jnp.pad(w, ((0, 0), (0, out_pad - out_dim)))
            b = jnp.pad(b, ((0, 0), (0, out_pad - out_dim)))
        params.append(w.astype(jnp.bfloat16))
        params.append(b)
        if i in (1, 2, 3):
            params.append(jnp.ones((1, fan_out), jnp.float32))   # gamma
            params.append(jnp.zeros((1, fan_out), jnp.float32))  # beta
    return tuple(params)


# ----------------------------------------------------------------------------
# Forward pass.
# ----------------------------------------------------------------------------
def _pick_tile_n(out_pad):
    for tn in (512, 256, 128):
        if out_pad % tn == 0:
            return tn
    return out_pad


def z_decoder_forward(latent, params, img_shape):
    batch = latent.shape[0]
    out_dim = int(math.prod(img_shape))
    out_pad = pl.cdiv(out_dim, LANE) * LANE
    tn = _pick_tile_n(out_pad)

    trunk_params = params[:-2]
    w5, b5 = params[-2], params[-1]

    # ---- layers 1..4 (tiny, single grid point, everything in VMEM) ----
    h = pl.pallas_call(
        trunk_kernel,
        out_shape=jax.ShapeDtypeStruct((batch, 1024), jnp.bfloat16),
        in_specs=[pl.BlockSpec(memory_space=pltpu.MemorySpace.VMEM)]
        * (1 + len(trunk_params)),
        out_specs=pl.BlockSpec(memory_space=pltpu.MemorySpace.VMEM),
        compiler_params=pltpu.CompilerParams(
            vmem_limit_bytes=32 * 1024 * 1024),
    )(latent, *trunk_params)

    # ---- final Linear(1024, out_pad) + Sigmoid, N-tiled & double-buffered ----
    flat = pl.pallas_call(
        final_kernel,
        out_shape=jax.ShapeDtypeStruct((batch, out_pad), jnp.float32),
        grid=(out_pad // tn,),
        in_specs=[
            pl.BlockSpec((batch, 1024), lambda j: (0, 0)),   # h (resident)
            pl.BlockSpec((1024, tn), lambda j: (0, j)),      # W5 tile (pipelined)
            pl.BlockSpec((1, tn), lambda j: (0, j)),         # b5 tile
        ],
        out_specs=pl.BlockSpec((batch, tn), lambda j: (0, j)),
        compiler_params=pltpu.CompilerParams(
            dimension_semantics=("parallel",),               # v7x: split tiles across TCs
            vmem_limit_bytes=32 * 1024 * 1024),
    )(h, w5, b5)

    # Drop lane padding, then x.view(-1, C, H, W).
    return flat[:, :out_dim].reshape(batch, img_shape[0], img_shape[1], img_shape[2])


if __name__ == "__main__":
    img_shape = (1, 16, 16)   # (C, H, W) -> prod = 256
    latent_dim = 32
    batch = 8

    key = jax.random.PRNGKey(0)
    k_z, k_p = jax.random.split(key)
    latent = jax.random.normal(k_z, (batch, latent_dim), jnp.float32)
    params = init_z_decoder_params(k_p, latent_dim, img_shape)

    out = z_decoder_forward(latent, params, img_shape)
    out = jax.block_until_ready(out)
    assert out.shape == (batch, *img_shape), out.shape
    assert bool(jnp.all(jnp.isfinite(out)))
    print("KERNEL_OK")
</pallas_src>

<mosaic_0001>
module attributes {stable_mosaic.version = 11 : i64} {
  func.func @trunk_kernel(%arg0: memref<8x32xf32, #tpu.memory_space<vmem>>, %arg1: memref<32x128xbf16, #tpu.memory_space<vmem>>, %arg2: memref<1x128xf32, #tpu.memory_space<vmem>>, %arg3: memref<128x256xbf16, #tpu.memory_space<vmem>>, %arg4: memref<1x256xf32, #tpu.memory_space<vmem>>, %arg5: memref<1x256xf32, #tpu.memory_space<vmem>>, %arg6: memref<1x256xf32, #tpu.memory_space<vmem>>, %arg7: memref<256x512xbf16, #tpu.memory_space<vmem>>, %arg8: memref<1x512xf32, #tpu.memory_space<vmem>>, %arg9: memref<1x512xf32, #tpu.memory_space<vmem>>, %arg10: memref<1x512xf32, #tpu.memory_space<vmem>>, %arg11: memref<512x1024xbf16, #tpu.memory_space<vmem>>, %arg12: memref<1x1024xf32, #tpu.memory_space<vmem>>, %arg13: memref<1x1024xf32, #tpu.memory_space<vmem>>, %arg14: memref<1x1024xf32, #tpu.memory_space<vmem>>, %arg15: memref<8x1024xbf16, #tpu.memory_space<vmem>>) attributes {dimension_semantics = [], scalar_prefetch = 0 : i64, scratch_operands = 0 : i64, tpu.core_type = #tpu.core_type<tc>} {
    %c0 = arith.constant 0 : index
    %c0_0 = arith.constant 0 : index
    %0 = vector.load %arg0[%c0, %c0_0] : memref<8x32xf32, #tpu.memory_space<vmem>>, vector<8x32xf32>
    %1 = arith.truncf %0 : vector<8x32xf32> to vector<8x32xbf16>
    %c0_1 = arith.constant 0 : index
    %c0_2 = arith.constant 0 : index
    %2 = vector.load %arg1[%c0_1, %c0_2] : memref<32x128xbf16, #tpu.memory_space<vmem>>, vector<32x128xbf16>
    %cst = arith.constant dense<0.000000e+00> : vector<8x128xf32>
    %3 = tpu.matmul %1, %2, %cst {dimension_numbers = #tpu.dot_dimension_numbers<[1], [0], [0], [1], [0, 0, 1, 1], [], []>} : vector<8x32xbf16>, vector<32x128xbf16>, vector<8x128xf32> -> vector<8x128xf32>
    %c0_3 = arith.constant 0 : index
    %c0_4 = arith.constant 0 : index
    %4 = vector.load %arg2[%c0_3, %c0_4] : memref<1x128xf32, #tpu.memory_space<vmem>>, vector<1x128xf32>
    %5 = vector.broadcast %4 : vector<1x128xf32> to vector<8x128xf32>
    %6 = arith.addf %3, %5 : vector<8x128xf32>
    %cst_5 = arith.constant 0.000000e+00 : f32
    %7 = vector.broadcast %cst_5 : f32 to vector<8x128xf32>
    %8 = arith.cmpf ogt, %6, %7 : vector<8x128xf32>
    %cst_6 = arith.constant 2.000000e-01 : f32
    %9 = vector.broadcast %cst_6 : f32 to vector<8x128xf32>
    %10 = arith.mulf %9, %6 : vector<8x128xf32>
    %11 = arith.select %8, %6, %10 : vector<8x128xi1>, vector<8x128xf32>
    %12 = arith.truncf %11 : vector<8x128xf32> to vector<8x128xbf16>
    %c0_7 = arith.constant 0 : index
    %c0_8 = arith.constant 0 : index
    %13 = vector.load %arg3[%c0_7, %c0_8] : memref<128x256xbf16, #tpu.memory_space<vmem>>, vector<128x256xbf16>
    %cst_9 = arith.constant dense<0.000000e+00> : vector<8x256xf32>
    %14 = tpu.matmul %12, %13, %cst_9 {dimension_numbers = #tpu.dot_dimension_numbers<[1], [0], [0], [1], [0, 0, 1, 1], [], []>} : vector<8x128xbf16>, vector<128x256xbf16>, vector<8x256xf32> -> vector<8x256xf32>
    %c0_10 = arith.constant 0 : index
    %c0_11 = arith.constant 0 : index
    %15 = vector.load %arg4[%c0_10, %c0_11] : memref<1x256xf32, #tpu.memory_space<vmem>>, vector<1x256xf32>
    %16 = vector.broadcast %15 : vector<1x256xf32> to vector<8x256xf32>
    %17 = arith.addf %14, %16 : vector<8x256xf32>
    %cst_12 = arith.constant dense<0.000000e+00> : vector<256xf32>
    %18 = vector.multi_reduction <add>, %17, %cst_12 [0] : vector<8x256xf32> to vector<256xf32>
    %19 = vector.shape_cast %18 : vector<256xf32> to vector<1x256xf32>
    %cst_13 = arith.constant 8.000000e+00 : f32
    %20 = vector.broadcast %cst_13 : f32 to vector<1x256xf32>
    %21 = arith.divf %19, %20 : vector<1x256xf32>
    %22 = vector.broadcast %21 : vector<1x256xf32> to vector<8x256xf32>
    %23 = arith.subf %17, %22 : vector<8x256xf32>
    %24 = arith.mulf %23, %23 : vector<8x256xf32>
    %cst_14 = arith.constant dense<0.000000e+00> : vector<256xf32>
    %25 = vector.multi_reduction <add>, %24, %cst_14 [0] : vector<8x256xf32> to vector<256xf32>
    %26 = vector.shape_cast %25 : vector<256xf32> to vector<1x256xf32>
    %cst_15 = arith.constant 8.000000e+00 : f32
    %27 = vector.broadcast %cst_15 : f32 to vector<1x256xf32>
    %28 = arith.divf %26, %27 : vector<1x256xf32>
    %c0_16 = arith.constant 0 : index
    %c0_17 = arith.constant 0 : index
    %29 = vector.load %arg5[%c0_16, %c0_17] : memref<1x256xf32, #tpu.memory_space<vmem>>, vector<1x256xf32>
    %cst_18 = arith.constant 9.99999974E-6 : f32
    %30 = vector.broadcast %cst_18 : f32 to vector<1x256xf32>
    %31 = arith.addf %28, %30 : vector<1x256xf32>
    %32 = math.rsqrt %31 : vector<1x256xf32>
    %33 = arith.mulf %29, %32 : vector<1x256xf32>
    %c0_19 = arith.constant 0 : index
    %c0_20 = arith.constant 0 : index
    %34 = vector.load %arg6[%c0_19, %c0_20] : memref<1x256xf32, #tpu.memory_space<vmem>>, vector<1x256xf32>
    %35 = arith.mulf %21, %33 : vector<1x256xf32>
    %36 = arith.subf %34, %35 : vector<1x256xf32>
    %37 = vector.broadcast %33 : vector<1x256xf32> to vector<8x256xf32>
    %38 = arith.mulf %17, %37 : vector<8x256xf32>
    %39 = vector.broadcast %36 : vector<1x256xf32> to vector<8x256xf32>
    %40 = arith.addf %38, %39 : vector<8x256xf32>
    %cst_21 = arith.constant 0.000000e+00 : f32
    %41 = vector.broadcast %cst_21 : f32 to vector<8x256xf32>
    %42 = arith.cmpf ogt, %40, %41 : vector<8x256xf32>
    %cst_22 = arith.constant 2.000000e-01 : f32
    %43 = vector.broadcast %cst_22 : f32 to vector<8x256xf32>
    %44 = arith.mulf %43, %40 : vector<8x256xf32>
    %45 = arith.select %42, %40, %44 : vector<8x256xi1>, vector<8x256xf32>
    %46 = arith.truncf %45 : vector<8x256xf32> to vector<8x256xbf16>
    %c0_23 = arith.constant 0 : index
    %c0_24 = arith.constant 0 : index
    %47 = vector.load %arg7[%c0_23, %c0_24] : memref<256x512xbf16, #tpu.memory_space<vmem>>, vector<256x512xbf16>
    %cst_25 = arith.constant dense<0.000000e+00> : vector<8x512xf32>
    %48 = tpu.matmul %46, %47, %cst_25 {dimension_numbers = #tpu.dot_dimension_numbers<[1], [0], [0], [1], [0, 0, 1, 1], [], []>} : vector<8x256xbf16>, vector<256x512xbf16>, vector<8x512xf32> -> vector<8x512xf32>
    %c0_26 = arith.constant 0 : index
    %c0_27 = arith.constant 0 : index
    %49 = vector.load %arg8[%c0_26, %c0_27] : memref<1x512xf32, #tpu.memory_space<vmem>>, vector<1x512xf32>
    %50 = vector.broadcast %49 : vector<1x512xf32> to vector<8x512xf32>
    %51 = arith.addf %48, %50 : vector<8x512xf32>
    %cst_28 = arith.constant dense<0.000000e+00> : vector<512xf32>
    %52 = vector.multi_reduction <add>, %51, %cst_28 [0] : vector<8x512xf32> to vector<512xf32>
    %53 = vector.shape_cast %52 : vector<512xf32> to vector<1x512xf32>
    %cst_29 = arith.constant 8.000000e+00 : f32
    %54 = vector.broadcast %cst_29 : f32 to vector<1x512xf32>
    %55 = arith.divf %53, %54 : vector<1x512xf32>
    %56 = vector.broadcast %55 : vector<1x512xf32> to vector<8x512xf32>
    %57 = arith.subf %51, %56 : vector<8x512xf32>
    %58 = arith.mulf %57, %57 : vector<8x512xf32>
    %cst_30 = arith.constant dense<0.000000e+00> : vector<512xf32>
    %59 = vector.multi_reduction <add>, %58, %cst_30 [0] : vector<8x512xf32> to vector<512xf32>
    %60 = vector.shape_cast %59 : vector<512xf32> to vector<1x512xf32>
    %cst_31 = arith.constant 8.000000e+00 : f32
    %61 = vector.broadcast %cst_31 : f32 to vector<1x512xf32>
    %62 = arith.divf %60, %61 : vector<1x512xf32>
    %c0_32 = arith.constant 0 : index
    %c0_33 = arith.constant 0 : index
    %63 = vector.load %arg9[%c0_32, %c0_33] : memref<1x512xf32, #tpu.memory_space<vmem>>, vector<1x512xf32>
    %cst_34 = arith.constant 9.99999974E-6 : f32
    %64 = vector.broadcast %cst_34 : f32 to vector<1x512xf32>
    %65 = arith.addf %62, %64 : vector<1x512xf32>
    %66 = math.rsqrt %65 : vector<1x512xf32>
    %67 = arith.mulf %63, %66 : vector<1x512xf32>
    %c0_35 = arith.constant 0 : index
    %c0_36 = arith.constant 0 : index
    %68 = vector.load %arg10[%c0_35, %c0_36] : memref<1x512xf32, #tpu.memory_space<vmem>>, vector<1x512xf32>
    %69 = arith.mulf %55, %67 : vector<1x512xf32>
    %70 = arith.subf %68, %69 : vector<1x512xf32>
    %71 = vector.broadcast %67 : vector<1x512xf32> to vector<8x512xf32>
    %72 = arith.mulf %51, %71 : vector<8x512xf32>
    %73 = vector.broadcast %70 : vector<1x512xf32> to vector<8x512xf32>
    %74 = arith.addf %72, %73 : vector<8x512xf32>
    %cst_37 = arith.constant 0.000000e+00 : f32
    %75 = vector.broadcast %cst_37 : f32 to vector<8x512xf32>
    %76 = arith.cmpf ogt, %74, %75 : vector<8x512xf32>
    %cst_38 = arith.constant 2.000000e-01 : f32
    %77 = vector.broadcast %cst_38 : f32 to vector<8x512xf32>
    %78 = arith.mulf %77, %74 : vector<8x512xf32>
    %79 = arith.select %76, %74, %78 : vector<8x512xi1>, vector<8x512xf32>
    %80 = arith.truncf %79 : vector<8x512xf32> to vector<8x512xbf16>
    %c0_39 = arith.constant 0 : index
    %c0_40 = arith.constant 0 : index
    %81 = vector.load %arg11[%c0_39, %c0_40] : memref<512x1024xbf16, #tpu.memory_space<vmem>>, vector<512x1024xbf16>
    %cst_41 = arith.constant dense<0.000000e+00> : vector<8x1024xf32>
    %82 = tpu.matmul %80, %81, %cst_41 {dimension_numbers = #tpu.dot_dimension_numbers<[1], [0], [0], [1], [0, 0, 1, 1], [], []>} : vector<8x512xbf16>, vector<512x1024xbf16>, vector<8x1024xf32> -> vector<8x1024xf32>
    %c0_42 = arith.constant 0 : index
    %c0_43 = arith.constant 0 : index
    %83 = vector.load %arg12[%c0_42, %c0_43] : memref<1x1024xf32, #tpu.memory_space<vmem>>, vector<1x1024xf32>
    %84 = vector.broadcast %83 : vector<1x1024xf32> to vector<8x1024xf32>
    %85 = arith.addf %82, %84 : vector<8x1024xf32>
    %cst_44 = arith.constant dense<0.000000e+00> : vector<1024xf32>
    %86 = vector.multi_reduction <add>, %85, %cst_44 [0] : vector<8x1024xf32> to vector<1024xf32>
    %87 = vector.shape_cast %86 : vector<1024xf32> to vector<1x1024xf32>
    %cst_45 = arith.constant 8.000000e+00 : f32
    %88 = vector.broadcast %cst_45 : f32 to vector<1x1024xf32>
    %89 = arith.divf %87, %88 : vector<1x1024xf32>
    %90 = vector.broadcast %89 : vector<1x1024xf32> to vector<8x1024xf32>
    %91 = arith.subf %85, %90 : vector<8x1024xf32>
    %92 = arith.mulf %91, %91 : vector<8x1024xf32>
    %cst_46 = arith.constant dense<0.000000e+00> : vector<1024xf32>
    %93 = vector.multi_reduction <add>, %92, %cst_46 [0] : vector<8x1024xf32> to vector<1024xf32>
    %94 = vector.shape_cast %93 : vector<1024xf32> to vector<1x1024xf32>
    %cst_47 = arith.constant 8.000000e+00 : f32
    %95 = vector.broadcast %cst_47 : f32 to vector<1x1024xf32>
    %96 = arith.divf %94, %95 : vector<1x1024xf32>
    %c0_48 = arith.constant 0 : index
    %c0_49 = arith.constant 0 : index
    %97 = vector.load %arg13[%c0_48, %c0_49] : memref<1x1024xf32, #tpu.memory_space<vmem>>, vector<1x1024xf32>
    %cst_50 = arith.constant 9.99999974E-6 : f32
    %98 = vector.broadcast %cst_50 : f32 to vector<1x1024xf32>
    %99 = arith.addf %96, %98 : vector<1x1024xf32>
    %100 = math.rsqrt %99 : vector<1x1024xf32>
    %101 = arith.mulf %97, %100 : vector<1x1024xf32>
    %c0_51 = arith.constant 0 : index
    %c0_52 = arith.constant 0 : index
    %102 = vector.load %arg14[%c0_51, %c0_52] : memref<1x1024xf32, #tpu.memory_space<vmem>>, vector<1x1024xf32>
    %103 = arith.mulf %89, %101 : vector<1x1024xf32>
    %104 = arith.subf %102, %103 : vector<1x1024xf32>
    %105 = vector.broadcast %101 : vector<1x1024xf32> to vector<8x1024xf32>
    %106 = arith.mulf %85, %105 : vector<8x1024xf32>
    %107 = vector.broadcast %104 : vector<1x1024xf32> to vector<8x1024xf32>
    %108 = arith.addf %106, %107 : vector<8x1024xf32>
    %cst_53 = arith.constant 0.000000e+00 : f32
    %109 = vector.broadcast %cst_53 : f32 to vector<8x1024xf32>
    %110 = arith.cmpf ogt, %108, %109 : vector<8x1024xf32>
    %cst_54 = arith.constant 2.000000e-01 : f32
    %111 = vector.broadcast %cst_54 : f32 to vector<8x1024xf32>
    %112 = arith.mulf %111, %108 : vector<8x1024xf32>
    %113 = arith.select %110, %108, %112 : vector<8x1024xi1>, vector<8x1024xf32>
    %114 = arith.truncf %113 : vector<8x1024xf32> to vector<8x1024xbf16>
    %c0_55 = arith.constant 0 : index
    %c0_56 = arith.constant 0 : index
    %115 = vector.load %arg15[%c0_55, %c0_56] : memref<8x1024xbf16, #tpu.memory_space<vmem>>, vector<8x1024xbf16>
    tpu.vector_store %arg15[%c0_55, %c0_56], %114 {strides = array<i32>} : memref<8x1024xbf16, #tpu.memory_space<vmem>>, vector<8x1024xbf16>,
    return
  }
}

</mosaic_0001>

<llo_original>
// kernel: tpu_custom_call.1
$region0: #{tpu_custom_call.1}
  #allocation0 [shape = 'u32[]', space=smem, size = 0x4, offset = 0x4, fixed_abs, tag = 'smem constant byte address 0x4 - core index']
  #allocation1 [shape = 'u32[72,128]{1,0:T(1,128)}', space=vmem, size = 0x9000, scoped, tag = 'internal scratch']
  %s0 = inlined_call_operand.hbm [shape: f32[8,32], index: 0, kind: input, shape index: {}]
  %s1 = inlined_call_operand.hbm [shape: bf16[32,128], index: 1, kind: input, shape index: {}]
  %s2 = inlined_call_operand.vmem [shape: f32[1,128], index: 2, kind: input, shape index: {}]
  %s3 = inlined_call_operand.hbm [shape: bf16[128,256], index: 3, kind: input, shape index: {}]
  %s4 = inlined_call_operand.vmem [shape: f32[1,256], index: 4, kind: input, shape index: {}]
  %s5 = inlined_call_operand.hbm [shape: f32[1,256], index: 5, kind: input, shape index: {}]
  %s6 = inlined_call_operand.hbm [shape: f32[1,256], index: 6, kind: input, shape index: {}]
  %s7 = inlined_call_operand.hbm [shape: bf16[256,512], index: 7, kind: input, shape index: {}]
  %s8 = inlined_call_operand.hbm [shape: f32[1,512], index: 8, kind: input, shape index: {}]
  %s9 = inlined_call_operand.hbm [shape: f32[1,512], index: 9, kind: input, shape index: {}]
  %s10 = inlined_call_operand.hbm [shape: f32[1,512], index: 10, kind: input, shape index: {}]
  %s11 = inlined_call_operand.hbm [shape: bf16[512,1024], index: 11, kind: input, shape index: {}]
  %s12 = inlined_call_operand.vmem [shape: f32[1,1024], index: 12, kind: input, shape index: {}]
  %s13 = inlined_call_operand.hbm [shape: f32[1,1024], index: 13, kind: input, shape index: {}]
  %s14 = inlined_call_operand.hbm [shape: f32[1,1024], index: 14, kind: input, shape index: {}]
  %s15 = inlined_call_operand.hbm [shape: bf16[8,1024], index: 15, kind: output, shape index: {}]
  %s16 = sld [smem:[#allocation0]]
  $region118: #{tpu_custom_call.1} parent=0
    _
  %s18 = ssub.s32 1, %s16
  %s19 = scalar_select 0, %s18, %s16
  $region1: #{tpu_custom_call.1} parent=0
    #allocation2 [shape = 'u8[4096]{0}', space=vmem, size = 0x1000, scoped, tag = 'input window, operand 0, single buffered']
    #allocation3 [shape = 's32[1]{0}', space=sflag, size = 0x4, scoped, tag = 'scoped memory for tpu_custom_call.1']
    #allocation4 [shape = 's32[1]{0}', space=sflag, size = 0x4, scoped, tag = 'scoped memory for tpu_custom_call.1']
    #allocation5 [shape = 'u8[8192]{0}', space=vmem, size = 0x2000, scoped, tag = 'input window, operand 1, single buffered']
    #allocation6 [shape = 's32[1]{0}', space=sflag, size = 0x4, scoped, tag = 'scoped memory for tpu_custom_call.1']
    #allocation7 [shape = 'u8[65536]{0}', space=vmem, size = 0x10000, scoped, tag = 'input window, operand 3, single buffered']
    #allocation8 [shape = 'u8[1024]{0}', space=vmem, size = 0x400, scoped, tag = 'input window, operand 5, single buffered']
    #allocation9 [shape = 's32[1]{0}', space=sflag, size = 0x4, scoped, tag = 'scoped memory for tpu_custom_call.1']
    #allocation10 [shape = 'u8[1024]{0}', space=vmem, size = 0x400, scoped, tag = 'input window, operand 6, single buffered']
    #allocation11 [shape = 'u8[262144]{0}', space=vmem, size = 0x40000, scoped, tag = 'input window, operand 7, single buffered']
    #allocation12 [shape = 's32[1]{0}', space=sflag, size = 0x4, scoped, tag = 'scoped memory for tpu_custom_call.1']
    #allocation13 [shape = 'u8[2048]{0}', space=vmem, size = 0x800, scoped, tag = 'input window, operand 8, single buffered']
    #allocation14 [shape = 'u8[2048]{0}', space=vmem, size = 0x800, scoped, tag = 'input window, operand 9, single buffered']
    #allocation15 [shape = 's32[1]{0}', space=sflag, size = 0x4, scoped, tag = 'scoped memory for tpu_custom_call.1']
    #allocation16 [shape = 'u8[2048]{0}', space=vmem, size = 0x800, scoped, tag = 'input window, operand 10, single buffered']
    #allocation17 [shape = 'u8[1048576]{0}', space=vmem, size = 0x100000, scoped, tag = 'input window, operand 11, single buffered']
    #allocation18 [shape = 's32[1]{0}', space=sflag, size = 0x4, scoped, tag = 'scoped memory for tpu_custom_call.1']
    #allocation19 [shape = 'u8[4096]{0}', space=vmem, size = 0x1000, scoped, tag = 'input window, operand 13, single buffered']
    #allocation20 [shape = 'u8[4096]{0}', space=vmem, size = 0x1000, scoped, tag = 'input window, operand 14, single buffered']
    #allocation21 [shape = 's32[1]{0}', space=sflag, size = 0x4, scoped, tag = 'scoped memory for tpu_custom_call.1']
    #allocation22 [shape = 'u8[16384]{0}', space=vmem, size = 0x4000, scoped, tag = 'output window, operand 0, single buffered']
    %20 = vsyncpa [#allocation3], 0
    %21 = vsyncpa [#allocation6], 0
    %22 = vsyncpa [#allocation9], 0
    %23 = vsyncpa [#allocation12], 0
    %24 = vsyncpa [#allocation15], 0
    %25 = vsyncpa [#allocation18], 0
    %26 = vsyncpa [#allocation21], 0
    %27 = vsyncpa [#allocation4], 0
    // Predicated region
    $region2: #{tpu_custom_call.1} parent=1 // pred_check
      _
    $region3: #{tpu_custom_call.1} parent=1 // pred_check_branch
      %29 = sbr.rel (0) target = $region5
    $region4: #{tpu_custom_call.1} parent=1 // pred_region
      %31 = vsyncadd [#allocation3], 0
      %s33 = sshll.u32 %s0, 4
      %s34 = int_to_ptr.hbm [resolvable:$true] %s33
      %s35 = sshll.u32 [#allocation2], 4
      %s36 = int_to_ptr.vmem [resolvable:$true] %s35
      %38 = dma.hbm_to_vmem [thread:$0]  %s34, 128, %s36, [#allocation3]
    $region5: #{tpu_custom_call.1} parent=1 // pred_fallthru
      _
    // Predicated region
    $region6: #{tpu_custom_call.1} parent=1 // pred_check
      _
    $region7: #{tpu_custom_call.1} parent=1 // pred_check_branch
      %40 = sbr.rel (0) target = $region9
    $region8: #{tpu_custom_call.1} parent=1 // pred_region
      %42 = vsyncadd [#allocation6], 0
      %s43 = sshll.u32 %s1, 4
      %s44 = int_to_ptr.hbm [resolvable:$true] %s43
      %s45 = sshll.u32 [#allocation5], 4
      %s46 = int_to_ptr.vmem [resolvable:$true] %s45
      %51 = dma.hbm_to_vmem [thread:$0]  %s44, 256, %s46, [#allocation6], 64, 64, 4
    $region9: #{tpu_custom_call.1} parent=1 // pred_fallthru
      _
    // Predicated region
    $region10: #{tpu_custom_call.1} parent=1 // pred_check
      _
    $region11: #{tpu_custom_call.1} parent=1 // pred_check_branch
      %53 = sbr.rel (0) target = $region13
    $region12: #{tpu_custom_call.1} parent=1 // pred_region
      _
    $region13: #{tpu_custom_call.1} parent=1 // pred_fallthru
      _
    // Predicated region
    $region14: #{tpu_custom_call.1} parent=1 // pred_check
      _
    $region15: #{tpu_custom_call.1} parent=1 // pred_check_branch
      %55 = sbr.rel (0) target = $region17
    $region16: #{tpu_custom_call.1} parent=1 // pred_region
      %57 = vsyncadd [#allocation6], 0
      %s58 = sshll.u32 %s3, 4
      %s59 = int_to_ptr.hbm [resolvable:$true] %s58
      %s60 = sshll.u32 [#allocation7], 4
      %s61 = int_to_ptr.vmem [resolvable:$true] %s60
      %66 = dma.hbm_to_vmem [thread:$0]  %s59, 2048, %s61, [#allocation6], 128, 128, 8
    $region17: #{tpu_custom_call.1} parent=1 // pred_fallthru
      _
    // Predicated region
    $region18: #{tpu_custom_call.1} parent=1 // pred_check
      _
    $region19: #{tpu_custom_call.1} parent=1 // pred_check_branch
      %68 = sbr.rel (0) target = $region21
    $region20: #{tpu_custom_call.1} parent=1 // pred_region
      _
    $region21: #{tpu_custom_call.1} parent=1 // pred_fallthru
      _
    // Predicated region
    $region22: #{tpu_custom_call.1} parent=1 // pred_check
      _
    $region23: #{tpu_custom_call.1} parent=1 // pred_check_branch
      %70 = sbr.rel (0) target = $region25
    $region24: #{tpu_custom_call.1} parent=1 // pred_region
      %72 = vsyncadd [#allocation9], 0
      %s74 = sshll.u32 %s5, 4
      %s75 = int_to_ptr.hbm [resolvable:$true] %s74
      %s76 = sshll.u32 [#allocation8], 4
      %s77 = int_to_ptr.vmem [resolvable:$true] %s76
      %79 = dma.hbm_to_vmem [thread:$0]  %s75, 32, %s77, [#allocation9]
    $region25: #{tpu_custom_call.1} parent=1 // pred_fallthru
      _
    // Predicated region
    $region26: #{tpu_custom_call.1} parent=1 // pred_check
      _
    $region27: #{tpu_custom_call.1} parent=1 // pred_check_branch
      %81 = sbr.rel (0) target = $region29
    $region28: #{tpu_custom_call.1} parent=1 // pred_region
      %83 = vsyncadd [#allocation9], 0
      %s85 = sshll.u32 %s6, 4
      %s86 = int_to_ptr.hbm [resolvable:$true] %s85
      %s87 = sshll.u32 [#allocation10], 4
      %s88 = int_to_ptr.vmem [resolvable:$true] %s87
      %90 = dma.hbm_to_vmem [thread:$0]  %s86, 32, %s88, [#allocation9]
    $region29: #{tpu_custom_call.1} parent=1 // pred_fallthru
      _
    // Predicated region
    $region30: #{tpu_custom_call.1} parent=1 // pred_check
      _
    $region31: #{tpu_custom_call.1} parent=1 // pred_check_branch
      %92 = sbr.rel (0) target = $region33
    $region32: #{tpu_custom_call.1} parent=1 // pred_region
      %94 = vsyncadd [#allocation12], 0
      %s95 = sshll.u32 %s7, 4
      %s96 = int_to_ptr.hbm [resolvable:$true] %s95
      %s97 = sshll.u32 [#allocation11], 4
      %s98 = int_to_ptr.vmem [resolvable:$true] %s97
      %103 = dma.hbm_to_vmem [thread:$0]  %s96, 8192, %s98, [#allocation12], 256, 256, 16
    $region33: #{tpu_custom_call.1} parent=1 // pred_fallthru
      _
    // Predicated region
    $region34: #{tpu_custom_call.1} parent=1 // pred_check
      _
    $region35: #{tpu_custom_call.1} parent=1 // pred_check_branch
      %105 = sbr.rel (0) target = $region37
    $region36: #{tpu_custom_call.1} parent=1 // pred_region
      %107 = vsyncadd [#allocation12], 0
      %s109 = sshll.u32 %s8, 4
      %s110 = int_to_ptr.hbm [resolvable:$true] %s109
      %s111 = sshll.u32 [#allocation13], 4
      %s112 = int_to_ptr.vmem [resolvable:$true] %s111
      %114 = dma.hbm_to_vmem [thread:$0]  %s110, 64, %s112, [#allocation12]
    $region37: #{tpu_custom_call.1} parent=1 // pred_fallthru
      _
    // Predicated region
    $region38: #{tpu_custom_call.1} parent=1 // pred_check
      _
    $region39: #{tpu_custom_call.1} parent=1 // pred_check_branch
      %116 = sbr.rel (0) target = $region41
    $region40: #{tpu_custom_call.1} parent=1 // pred_region
      %118 = vsyncadd [#allocation15], 0
      %s120 = sshll.u32 %s9, 4
      %s121 = int_to_ptr.hbm [resolvable:$true] %s120
      %s122 = sshll.u32 [#allocation14], 4
      %s123 = int_to_ptr.vmem [resolvable:$true] %s122
      %125 = dma.hbm_to_vmem [thread:$0]  %s121, 64, %s123, [#allocation15]
    $region41: #{tpu_custom_call.1} parent=1 // pred_fallthru
      _
    // Predicated region
    $region42: #{tpu_custom_call.1} parent=1 // pred_check
      _
    $region43: #{tpu_custom_call.1} parent=1 // pred_check_branch
      %127 = sbr.rel (0) target = $region45
    $region44: #{tpu_custom_call.1} parent=1 // pred_region
      %129 = vsyncadd [#allocation15], 0
      %s131 = sshll.u32 %s10, 4
      %s132 = int_to_ptr.hbm [resolvable:$true] %s131
      %s133 = sshll.u32 [#allocation16], 4
      %s134 = int_to_ptr.vmem [resolvable:$true] %s133
      %136 = dma.hbm_to_vmem [thread:$0]  %s132, 64, %s134, [#allocation15]
    $region45: #{tpu_custom_call.1} parent=1 // pred_fallthru
      _
    // Predicated region
    $region46: #{tpu_custom_call.1} parent=1 // pred_check
      _
    $region47: #{tpu_custom_call.1} parent=1 // pred_check_branch
      %138 = sbr.rel (0) target = $region49
    $region48: #{tpu_custom_call.1} parent=1 // pred_region
      %140 = vsyncadd [#allocation18], 0
      %s141 = sshll.u32 %s11, 4
      %s142 = int_to_ptr.hbm [resolvable:$true] %s141
      %s143 = sshll.u32 [#allocation17], 4
      %s144 = int_to_ptr.vmem [resolvable:$true] %s143
      %149 = dma.hbm_to_vmem [thread:$0]  %s142, 32768, %s144, [#allocation18], 512, 512, 32
    $region49: #{tpu_custom_call.1} parent=1 // pred_fallthru
      _
    // Predicated region
    $region50: #{tpu_custom_call.1} parent=1 // pred_check
      _
    $region51: #{tpu_custom_call.1} parent=1 // pred_check_branch
      %151 = sbr.rel (0) target = $region53
    $region52: #{tpu_custom_call.1} parent=1 // pred_region
      _
    $region53: #{tpu_custom_call.1} parent=1 // pred_fallthru
      _
    // Predicated region
    $region54: #{tpu_custom_call.1} parent=1 // pred_check
      _
    $region55: #{tpu_custom_call.1} parent=1 // pred_check_branch
      %153 = sbr.rel (0) target = $region57
    $region56: #{tpu_custom_call.1} parent=1 // pred_region
      %155 = vsyncadd [#allocation18], 0
      %s157 = sshll.u32 %s13, 4
      %s158 = int_to_ptr.hbm [resolvable:$true] %s157
      %s159 = sshll.u32 [#allocation19], 4
      %s160 = int_to_ptr.vmem [resolvable:$true] %s159
      %162 = dma.hbm_to_vmem [thread:$0]  %s158, 128, %s160, [#allocation18]
    $region57: #{tpu_custom_call.1} parent=1 // pred_fallthru
      _
    // Predicated region
    $region58: #{tpu_custom_call.1} parent=1 // pred_check
      _
    $region59: #{tpu_custom_call.1} parent=1 // pred_check_branch
      %164 = sbr.rel (0) target = $region61
    $region60: #{tpu_custom_call.1} parent=1 // pred_region
      %166 = vsyncadd [#allocation21], 0
      %s168 = sshll.u32 %s14, 4
      %s169 = int_to_ptr.hbm [resolvable:$true] %s168
      %s170 = sshll.u32 [#allocation20], 4
      %s171 = int_to_ptr.vmem [resolvable:$true] %s170
      %173 = dma.hbm_to_vmem [thread:$0]  %s169, 128, %s171, [#allocation21]
    $region61: #{tpu_custom_call.1} parent=1 // pred_fallthru
      _
    // Predicated region
    $region62: #{tpu_custom_call.1} parent=1 // pred_check
      _
    $region63: #{tpu_custom_call.1} parent=1 // pred_check_branch
      %175 = sbr.rel (0) target = $region65
    $region64: #{tpu_custom_call.1} parent=1 // pred_region
      %177 = dma.done [#allocation3], 128
    $region65: #{tpu_custom_call.1} parent=1 // pred_fallthru
      _
    // Predicated region
    $region66: #{tpu_custom_call.1} parent=1 // pred_check
      _
    $region67: #{tpu_custom_call.1} parent=1 // pred_check_branch
      %179 = sbr.rel (0) target = $region69
    $region68: #{tpu_custom_call.1} parent=1 // pred_region
      %181 = dma.done [#allocation6], 256
    $region69: #{tpu_custom_call.1} parent=1 // pred_fallthru
      _
    // Predicated region
    $region70: #{tpu_custom_call.1} parent=1 // pred_check
      _
    $region71: #{tpu_custom_call.1} parent=1 // pred_check_branch
      %183 = sbr.rel (0) target = $region73
    $region72: #{tpu_custom_call.1} parent=1 // pred_region
      %185 = dma.done [#allocation6], 2048
    $region73: #{tpu_custom_call.1} parent=1 // pred_fallthru
      _
    // Predicated region
    $region74: #{tpu_custom_call.1} parent=1 // pred_check
      _
    $region75: #{tpu_custom_call.1} parent=1 // pred_check_branch
      %187 = sbr.rel (0) target = $region77
    $region76: #{tpu_custom_call.1} parent=1 // pred_region
      %189 = dma.done [#allocation9], 32
    $region77: #{tpu_custom_call.1} parent=1 // pred_fallthru
      _
    // Predicated region
    $region78: #{tpu_custom_call.1} parent=1 // pred_check
      _
    $region79: #{tpu_custom_call.1} parent=1 // pred_check_branch
      %191 = sbr.rel (0) target = $region81
    $region80: #{tpu_custom_call.1} parent=1 // pred_region
      %193 = dma.done [#allocation9], 32
    $region81: #{tpu_custom_call.1} parent=1 // pred_fallthru
      _
    // Predicated region
    $region82: #{tpu_custom_call.1} parent=1 // pred_check
      _
    $region83: #{tpu_custom_call.1} parent=1 // pred_check_branch
      %195 = sbr.rel (0) target = $region85
    $region84: #{tpu_custom_call.1} parent=1 // pred_region
      %197 = dma.done [#allocation12], 8192
    $region85: #{tpu_custom_call.1} parent=1 // pred_fallthru
      _
    // Predicated region
    $region86: #{tpu_custom_call.1} parent=1 // pred_check
      _
    $region87: #{tpu_custom_call.1} parent=1 // pred_check_branch
      %199 = sbr.rel (0) target = $region89
    $region88: #{tpu_custom_call.1} parent=1 // pred_region
      %201 = dma.done [#allocation12], 64
    $region89: #{tpu_custom_call.1} parent=1 // pred_fallthru
      _
    // Predicated region
    $region90: #{tpu_custom_call.1} parent=1 // pred_check
      _
    $region91: #{tpu_custom_call.1} parent=1 // pred_check_branch
      %203 = sbr.rel (0) target = $region93
    $region92: #{tpu_custom_call.1} parent=1 // pred_region
      %205 = dma.done [#allocation15], 64
    $region93: #{tpu_custom_call.1} parent=1 // pred_fallthru
      _
    // Predicated region
    $region94: #{tpu_custom_call.1} parent=1 // pred_check
      _
    $region95: #{tpu_custom_call.1} parent=1 // pred_check_branch
      %207 = sbr.rel (0) target = $region97
    $region96: #{tpu_custom_call.1} parent=1 // pred_region
      %209 = dma.done [#allocation15], 64
    $region97: #{tpu_custom_call.1} parent=1 // pred_fallthru
      _
    // Predicated region
    $region98: #{tpu_custom_call.1} parent=1 // pred_check
      _
    $region99: #{tpu_custom_call.1} parent=1 // pred_check_branch
      %211 = sbr.rel (0) target = $region101
    $region100: #{tpu_custom_call.1} parent=1 // pred_region
      %213 = dma.done [#allocation18], 32768
    $region101: #{tpu_custom_call.1} parent=1 // pred_fallthru
      _
    // Predicated region
    $region102: #{tpu_custom_call.1} parent=1 // pred_check
      _
    $region103: #{tpu_custom_call.1} parent=1 // pred_check_branch
      %215 = sbr.rel (0) target = $region105
    $region104: #{tpu_custom_call.1} parent=1 // pred_region
      %217 = dma.done [#allocation18], 128
    $region105: #{tpu_custom_call.1} parent=1 // pred_fallthru
      _
    // Predicated region
    $region106: #{tpu_custom_call.1} parent=1 // pred_check
      _
    $region107: #{tpu_custom_call.1} parent=1 // pred_check_branch
      %219 = sbr.rel (0) target = $region109
    $region108: #{tpu_custom_call.1} parent=1 // pred_region
      %221 = dma.done [#allocation21], 128
    $region109: #{tpu_custom_call.1} parent=1 // pred_fallthru
      _
    %v223 = vld [vmem:[#allocation2] sm:$0xff]
    %v224 = vpack.c.bf16 %v223, %v223
    %v225 = vld [vmem:[#allocation5] sm:$0xf]
    %v226 = vld [vmem:[#allocation5 + $0x4] sm:$0xf]
    %v227 = vld [vmem:[#allocation5 + $0x8] sm:$0xf]
    %v228 = vld [vmem:[#allocation5 + $0xc] sm:$0xf]
    %v229 = vld [vmem:[%s2] sm:$0x1]
    %v231 = vperm.slane %v229, 0
    %v237 = vunpack.c.l.b16 %v225
    %v238 = vunpack.c.l.b16 %v226
    %v239 = vunpack.c.l.b16 %v227
    %v240 = vunpack.c.l.b16 %v228
    %v241 = vpack.c.b16 %v238, %v237
    %v242 = vpack.c.b16 %v240, %v239
    %vm245 = vcmask 261120
    %v247 = vsel %vm245, %v224, 0
    %249 = vmatpush.bf16.msra.mxu0 0
    %250 = vmatpush.bf16.msra.mxu0 0
    %251 = vmatpush.bf16.msra.mxu0 0
    %252 = vmatpush.bf16.msra.mxu0 0
    %253 = vmatpush.bf16.msra.mxu0 0
    %254 = vmatpush.bf16.msra.mxu0 0
    %255 = vmatpush.bf16.msra.mxu0 %v242
    %256 = vmatpush.bf16.msra.mxu0 %v241
    %257 = vmatmul.bf16.gmra.mxu0 %v247
    %v258 = vpop.f32.mrf.mxu0
    %v259 = vadd.f32 %v231, %v258
    %v260 = vpop.f32.mrf.mxu0
    %261 = vdwg.mxu0
    %vm262 = vcmp.gt.f32.partialorder %v259, 0.0
    %v263 = vmul.f32 %v259, 0.2
    %v264 = vsel %vm262, %v259, %v263
    %v265 = vpack.c.bf16 %v264, %v264
    %v266 = vld [vmem:[#allocation7] sm:$0xff]
    %v267 = vld [vmem:[#allocation7 + $0x8] sm:$0xff]
    %v268 = vld [vmem:[#allocation7 + $0x10] sm:$0xff]
    %v269 = vld [vmem:[#allocation7 + $0x18] sm:$0xff]
    %v270 = vld [vmem:[#allocation7 + $0x20] sm:$0xff]
    %v271 = vld [vmem:[#allocation7 + $0x28] sm:$0xff]
    %v272 = vld [vmem:[#allocation7 + $0x30] sm:$0xff]
    %v273 = vld [vmem:[#allocation7 + $0x38] sm:$0xff]
    %v274 = vld [vmem:[#allocation7 + $0x40] sm:$0xff]
    %v275 = vld [vmem:[#allocation7 + $0x48] sm:$0xff]
    %v276 = vld [vmem:[#allocation7 + $0x50] sm:$0xff]
    %v277 = vld [vmem:[#allocation7 + $0x58] sm:$0xff]
    %v278 = vld [vmem:[#allocation7 + $0x60] sm:$0xff]
    %v279 = vld [vmem:[#allocation7 + $0x68] sm:$0xff]
    %v280 = vld [vmem:[#allocation7 + $0x70] sm:$0xff]
    %v281 = vld [vmem:[#allocation7 + $0x78] sm:$0xff]
    %v282 = vld [vmem:[%s4] sm:$0x3]
    %v284 = vperm.slane %v282, 0
    %v285 = vperm.slane %v282, 1
    %v304 = vunpack.c.l.b16 %v266
    %v305 = vunpack.c.h.b16 %v266
    %v306 = vunpack.c.l.b16 %v267
    %v307 = vunpack.c.h.b16 %v267
    %v308 = vunpack.c.l.b16 %v268
    %v309 = vunpack.c.h.b16 %v268
    %v310 = vunpack.c.l.b16 %v269
    %v311 = vunpack.c.h.b16 %v269
    %v312 = vunpack.c.l.b16 %v270
    %v313 = vunpack.c.h.b16 %v270
    %v314 = vunpack.c.l.b16 %v271
    %v315 = vunpack.c.h.b16 %v271
    %v316 = vunpack.c.l.b16 %v272
    %v317 = vunpack.c.h.b16 %v272
    %v318 = vunpack.c.l.b16 %v273
    %v319 = vunpack.c.h.b16 %v273
    %v320 = vunpack.c.l.b16 %v274
    %v321 = vunpack.c.h.b16 %v274
    %v322 = vunpack.c.l.b16 %v275
    %v323 = vunpack.c.h.b16 %v275
    %v324 = vunpack.c.l.b16 %v276
    %v325 = vunpack.c.h.b16 %v276
    %v326 = vunpack.c.l.b16 %v277
    %v327 = vunpack.c.h.b16 %v277
    %v328 = vunpack.c.l.b16 %v278
    %v329 = vunpack.c.h.b16 %v278
    %v330 = vunpack.c.l.b16 %v279
    %v331 = vunpack.c.h.b16 %v279
    %v332 = vunpack.c.l.b16 %v280
    %v333 = vunpack.c.h.b16 %v280
    %v334 = vunpack.c.l.b16 %v281
    %v335 = vunpack.c.h.b16 %v281
    %v336 = vpack.c.b16 %v306, %v304
    %v337 = vpack.c.b16 %v307, %v305
    %v338 = vpack.c.b16 %v310, %v308
    %v339 = vpack.c.b16 %v311, %v309
    %v340 = vpack.c.b16 %v314, %v312
    %v341 = vpack.c.b16 %v315, %v313
    %v342 = vpack.c.b16 %v318, %v316
    %v343 = vpack.c.b16 %v319, %v317
    %v344 = vpack.c.b16 %v322, %v320
    %v345 = vpack.c.b16 %v323, %v321
    %v346 = vpack.c.b16 %v326, %v324
    %v347 = vpack.c.b16 %v327, %v325
    %v348 = vpack.c.b16 %v330, %v328
    %v349 = vpack.c.b16 %v331, %v329
    %v350 = vpack.c.b16 %v334, %v332
    %v351 = vpack.c.b16 %v335, %v333
    %368 = vmatpush.bf16.msra.mxu0 %v350
    %369 = vmatpush.bf16.msra.mxu0 %v348
    %370 = vmatpush.bf16.msra.mxu0 %v346
    %371 = vmatpush.bf16.msra.mxu0 %v344
    %372 = vmatpush.bf16.msra.mxu0 %v342
    %373 = vmatpush.bf16.msra.mxu0 %v340
    %374 = vmatpush.bf16.msra.mxu0 %v338
    %375 = vmatpush.bf16.msra.mxu0 %v336
    %376 = vmatmul.bf16.gmra.mxu0 %v265
    %v377 = vpop.f32.mrf.mxu0
    %v378 = vadd.f32 %v284, %v377
    %v379 = vpop.f32.mrf.mxu0
    %380 = vdwg.mxu0
    %381 = vmatpush.bf16.msra.mxu0 %v351
    %382 = vmatpush.bf16.msra.mxu0 %v349
    %383 = vmatpush.bf16.msra.mxu0 %v347
    %384 = vmatpush.bf16.msra.mxu0 %v345
    %385 = vmatpush.bf16.msra.mxu0 %v343
    %386 = vmatpush.bf16.msra.mxu0 %v341
    %387 = vmatpush.bf16.msra.mxu0 %v339
    %388 = vmatpush.bf16.msra.mxu0 %v337
    %389 = vmatmul.bf16.gmra.mxu0 %v265
    %v390 = vpop.f32.mrf.mxu0
    %v391 = vadd.f32 %v285, %v390
    %v392 = vpop.f32.mrf.mxu0
    %393 = vdwg.mxu0
    %v394 = vrot.slane %v378, 4
    %v395 = vadd.f32 %v378, %v394
    %v396 = vrot.slane %v395, 2
    %v397 = vadd.f32 %v395, %v396
    %v398 = vrot.slane %v397, 1
    %v399 = vadd.f32 %v397, %v398
    %v400 = vrot.slane %v391, 4
    %v401 = vadd.f32 %v391, %v400
    %v402 = vrot.slane %v401, 2
    %v403 = vadd.f32 %v401, %v402
    %v404 = vrot.slane %v403, 1
    %v405 = vadd.f32 %v403, %v404
    %v406 = vrcp.pop 8.0
    %v407 = vmul.f32 8.0, %v406
    %v408 = vsub.f32 1.0, %v407
    %v409 = vmul.f32 %v406, %v408
    %v410 = vadd.f32 %v406, %v409
    %vm411 = vweird.f32 %v406
    %v412 = vsel %vm411, %v406, %v410
    %v413 = vmul.f32 %v399, %v412
    %v414 = vmul.f32 %v405, %v412
    %v415 = vsub.f32 %v378, %v413
    %v416 = vsub.f32 %v391, %v414
    %v417 = vmul.f32 %v415, %v415
    %v418 = vmul.f32 %v416, %v416
    %v419 = vrot.slane %v417, 4
    %v420 = vadd.f32 %v417, %v419
    %v421 = vrot.slane %v420, 2
    %v422 = vadd.f32 %v420, %v421
    %v423 = vrot.slane %v422, 1
    %v424 = vadd.f32 %v422, %v423
    %v425 = vrot.slane %v418, 4
    %v426 = vadd.f32 %v418, %v425
    %v427 = vrot.slane %v426, 2
    %v428 = vadd.f32 %v426, %v427
    %v429 = vrot.slane %v428, 1
    %v430 = vadd.f32 %v428, %v429
    %v431 = vmul.f32 %v424, %v412
    %v432 = vmul.f32 %v430, %v412
    %v433 = vld [vmem:[#allocation8] sm:$0x3]
    %v434 = vadd.f32 %v431, 1e-05
    %v435 = vadd.f32 %v432, 1e-05
    %v436 = vrsqrt.pop %v434
    %v437 = vmul.f32 %v436, %v434
    %v438 = vmul.f32 %v437, %v436
    %v439 = vmul.f32 0.5, %v438
    %v440 = vsub.f32 1.5, %v439
    %v441 = vmul.f32 %v436, %v440
    %vm442 = vweird.f32 %v434
    %vm443 = vweird.f32 %v436
    %vm444 = vmor %vm442, %vm443
    %v445 = vsel %vm444, %v436, %v441
    %v446 = vrsqrt.pop %v435
    %v447 = vmul.f32 %v446, %v435
    %v448 = vmul.f32 %v447, %v446
    %v449 = vmul.f32 0.5, %v448
    %v450 = vsub.f32 1.5, %v449
    %v451 = vmul.f32 %v446, %v450
    %vm452 = vweird.f32 %v435
    %vm453 = vweird.f32 %v446
    %vm454 = vmor %vm452, %vm453
    %v455 = vsel %vm454, %v446, %v451
    %v458 = vrot.slane %v455, 7
    %vm459 = vcmask 1040384
    %v460 = vsel %vm459, %v445, %v458
    %v462 = vmul.f32 %v433, %v460
    %v463 = vld [vmem:[#allocation10] sm:$0x3]
    %v465 = vperm.slane %v462, 0
    %v466 = vperm.slane %v462, 1
    %v469 = vmul.f32 %v413, %v465
    %v470 = vmul.f32 %v414, %v466
    %v473 = vrot.slane %v470, 7
    %v474 = vsel %vm459, %v469, %v473
    %v476 = vsub.f32 %v463, %v474
    %v477 = vmul.f32 %v378, %v465
    %v478 = vmul.f32 %v391, %v466
    %v480 = vperm.slane %v476, 0
    %v481 = vperm.slane %v476, 1
    %v484 = vadd.f32 %v477, %v480
    %v485 = vadd.f32 %v478, %v481
    %vm486 = vcmp.gt.f32.partialorder %v484, 0.0
    %vm487 = vcmp.gt.f32.partialorder %v485, 0.0
    %v488 = vmul.f32 %v484, 0.2
    %v489 = vmul.f32 %v485, 0.2
    %v490 = vsel %vm486, %v484, %v488
    %v491 = vsel %vm487, %v485, %v489
    %v492 = vpack.c.bf16 %v490, %v490
    %v493 = vpack.c.bf16 %v491, %v491
    %v494 = vld [vmem:[#allocation11] sm:$0xff]
    %v495 = vld [vmem:[#allocation11 + $0x8] sm:$0xff]
    %v496 = vld [vmem:[#allocation11 + $0x10] sm:$0xff]
    %v497 = vld [vmem:[#allocation11 + $0x18] sm:$0xff]
    %v498 = vld [vmem:[#allocation11 + $0x20] sm:$0xff]
    %v499 = vld [vmem:[#allocation11 + $0x28] sm:$0xff]
    %v500 = vld [vmem:[#allocation11 + $0x30] sm:$0xff]
    %v501 = vld [vmem:[#allocation11 + $0x38] sm:$0xff]
    %v502 = vld [vmem:[#allocation11 + $0x40] sm:$0xff]
    %v503 = vld [vmem:[#allocation11 + $0x48] sm:$0xff]
    %v504 = vld [vmem:[#allocation11 + $0x50] sm:$0xff]
    %v505 = vld [vmem:[#allocation11 + $0x58] sm:$0xff]
    %v506 = vld [vmem:[#allocation11 + $0x60] sm:$0xff]
    %v507 = vld [vmem:[#allocation11 + $0x68] sm:$0xff]
    %v508 = vld [vmem:[#allocation11 + $0x70] sm:$0xff]
    %v509 = vld [vmem:[#allocation11 + $0x78] sm:$0xff]
    %v510 = vld [vmem:[#allocation11 + $0x80] sm:$0xff]
    %v511 = vld [vmem:[#allocation11 + $0x88] sm:$0xff]
    %v512 = vld [vmem:[#allocation11 + $0x90] sm:$0xff]
    %v513 = vld [vmem:[#allocation11 + $0x98] sm:$0xff]
    %v514 = vld [vmem:[#allocation11 + $0xa0] sm:$0xff]
    %v515 = vld [vmem:[#allocation11 + $0xa8] sm:$0xff]
    %v516 = vld [vmem:[#allocation11 + $0xb0] sm:$0xff]
    %v517 = vld [vmem:[#allocation11 + $0xb8] sm:$0xff]
    %v518 = vld [vmem:[#allocation11 + $0xc0] sm:$0xff]
    %v519 = vld [vmem:[#allocation11 + $0xc8] sm:$0xff]
    %v520 = vld [vmem:[#allocation11 + $0xd0] sm:$0xff]
    %v521 = vld [vmem:[#allocation11 + $0xd8] sm:$0xff]
    %v522 = vld [vmem:[#allocation11 + $0xe0] sm:$0xff]
    %v523 = vld [vmem:[#allocation11 + $0xe8] sm:$0xff]
    %v524 = vld [vmem:[#allocation11 + $0xf0] sm:$0xff]
    %v525 = vld [vmem:[#allocation11 + $0xf8] sm:$0xff]
    %v526 = vld [vmem:[#allocation11 + $0x100] sm:$0xff]
    %v527 = vld [vmem:[#allocation11 + $0x108] sm:$0xff]
    %v528 = vld [vmem:[#allocation11 + $0x110] sm:$0xff]
    %v529 = vld [vmem:[#allocation11 + $0x118] sm:$0xff]
    %v530 = vld [vmem:[#allocation11 + $0x120] sm:$0xff]
    %v531 = vld [vmem:[#allocation11 + $0x128] sm:$0xff]
    %v532 = vld [vmem:[#allocation11 + $0x130] sm:$0xff]
    %v533 = vld [vmem:[#allocation11 + $0x138] sm:$0xff]
    %v534 = vld [vmem:[#allocation11 + $0x140] sm:$0xff]
    %v535 = vld [vmem:[#allocation11 + $0x148] sm:$0xff]
    %v536 = vld [vmem:[#allocation11 + $0x150] sm:$0xff]
    %v537 = vld [vmem:[#allocation11 + $0x158] sm:$0xff]
    %v538 = vld [vmem:[#allocation11 + $0x160] sm:$0xff]
    %v539 = vld [vmem:[#allocation11 + $0x168] sm:$0xff]
    %v540 = vld [vmem:[#allocation11 + $0x170] sm:$0xff]
    %v541 = vld [vmem:[#allocation11 + $0x178] sm:$0xff]
    %v542 = vld [vmem:[#allocation11 + $0x180] sm:$0xff]
    %v543 = vld [vmem:[#allocation11 + $0x188] sm:$0xff]
    %v544 = vld [vmem:[#allocation11 + $0x190] sm:$0xff]
    %v545 = vld [vmem:[#allocation11 + $0x198] sm:$0xff]
    %v546 = vld [vmem:[#allocation11 + $0x1a0] sm:$0xff]
    %v547 = vld [vmem:[#allocation11 + $0x1a8] sm:$0xff]
    %v548 = vld [vmem:[#allocation11 + $0x1b0] sm:$0xff]
    %v549 = vld [vmem:[#allocation11 + $0x1b8] sm:$0xff]
    %v550 = vld [vmem:[#allocation11 + $0x1c0] sm:$0xff]
    %v551 = vld [vmem:[#allocation11 + $0x1c8] sm:$0xff]
    %v552 = vld [vmem:[#allocation11 + $0x1d0] sm:$0xff]
    %v553 = vld [vmem:[#allocation11 + $0x1d8] sm:$0xff]
    %v554 = vld [vmem:[#allocation11 + $0x1e0] sm:$0xff]
    %v555 = vld [vmem:[#allocation11 + $0x1e8] sm:$0xff]
    %v556 = vld [vmem:[#allocation11 + $0x1f0] sm:$0xff]
    %v557 = vld [vmem:[#allocation11 + $0x1f8] sm:$0xff]
    %v558 = vld [vmem:[#allocation13] sm:$0xf]
    %v560 = vperm.slane %v558, 0
    %v561 = vperm.slane %v558, 1
    %v562 = vperm.slane %v558, 2
    %v563 = vperm.slane %v558, 3
    %v632 = vunpack.c.l.b16 %v494
    %v633 = vunpack.c.h.b16 %v494
    %v634 = vunpack.c.l.b16 %v495
    %v635 = vunpack.c.h.b16 %v495
    %v636 = vunpack.c.l.b16 %v496
    %v637 = vunpack.c.h.b16 %v496
    %v638 = vunpack.c.l.b16 %v497
    %v639 = vunpack.c.h.b16 %v497
    %v640 = vunpack.c.l.b16 %v498
    %v641 = vunpack.c.h.b16 %v498
    %v642 = vunpack.c.l.b16 %v499
    %v643 = vunpack.c.h.b16 %v499
    %v644 = vunpack.c.l.b16 %v500
    %v645 = vunpack.c.h.b16 %v500
    %v646 = vunpack.c.l.b16 %v501
    %v647 = vunpack.c.h.b16 %v501
    %v648 = vunpack.c.l.b16 %v502
    %v649 = vunpack.c.h.b16 %v502
    %v650 = vunpack.c.l.b16 %v503
    %v651 = vunpack.c.h.b16 %v503
    %v652 = vunpack.c.l.b16 %v504
    %v653 = vunpack.c.h.b16 %v504
    %v654 = vunpack.c.l.b16 %v505
    %v655 = vunpack.c.h.b16 %v505
    %v656 = vunpack.c.l.b16 %v506
    %v657 = vunpack.c.h.b16 %v506
    %v658 = vunpack.c.l.b16 %v507
    %v659 = vunpack.c.h.b16 %v507
    %v660 = vunpack.c.l.b16 %v508
    %v661 = vunpack.c.h.b16 %v508
    %v662 = vunpack.c.l.b16 %v509
    %v663 = vunpack.c.h.b16 %v509
    %v664 = vunpack.c.l.b16 %v510
    %v665 = vunpack.c.h.b16 %v510
    %v666 = vunpack.c.l.b16 %v511
    %v667 = vunpack.c.h.b16 %v511
    %v668 = vunpack.c.l.b16 %v512
    %v669 = vunpack.c.h.b16 %v512
    %v670 = vunpack.c.l.b16 %v513
    %v671 = vunpack.c.h.b16 %v513
    %v672 = vunpack.c.l.b16 %v514
    %v673 = vunpack.c.h.b16 %v514
    %v674 = vunpack.c.l.b16 %v515
    %v675 = vunpack.c.h.b16 %v515
    %v676 = vunpack.c.l.b16 %v516
    %v677 = vunpack.c.h.b16 %v516
    %v678 = vunpack.c.l.b16 %v517
    %v679 = vunpack.c.h.b16 %v517
    %v680 = vunpack.c.l.b16 %v518
    %v681 = vunpack.c.h.b16 %v518
    %v682 = vunpack.c.l.b16 %v519
    %v683 = vunpack.c.h.b16 %v519
    %v684 = vunpack.c.l.b16 %v520
    %v685 = vunpack.c.h.b16 %v520
    %v686 = vunpack.c.l.b16 %v521
    %v687 = vunpack.c.h.b16 %v521
    %v688 = vunpack.c.l.b16 %v522
    %v689 = vunpack.c.h.b16 %v522
    %v690 = vunpack.c.l.b16 %v523
    %v691 = vunpack.c.h.b16 %v523
    %v692 = vunpack.c.l.b16 %v524
    %v693 = vunpack.c.h.b16 %v524
    %v694 = vunpack.c.l.b16 %v525
    %v695 = vunpack.c.h.b16 %v525
    %v696 = vunpack.c.l.b16 %v526
    %v697 = vunpack.c.h.b16 %v526
    %v698 = vunpack.c.l.b16 %v527
    %v699 = vunpack.c.h.b16 %v527
    %v700 = vunpack.c.l.b16 %v528
    %v701 = vunpack.c.h.b16 %v528
    %v702 = vunpack.c.l.b16 %v529
    %v703 = vunpack.c.h.b16 %v529
    %v704 = vunpack.c.l.b16 %v530
    %v705 = vunpack.c.h.b16 %v530
    %v706 = vunpack.c.l.b16 %v531
    %v707 = vunpack.c.h.b16 %v531
    %v708 = vunpack.c.l.b16 %v532
    %v709 = vunpack.c.h.b16 %v532
    %v710 = vunpack.c.l.b16 %v533
    %v711 = vunpack.c.h.b16 %v533
    %v712 = vunpack.c.l.b16 %v534
    %v713 = vunpack.c.h.b16 %v534
    %v714 = vunpack.c.l.b16 %v535
    %v715 = vunpack.c.h.b16 %v535
    %v716 = vunpack.c.l.b16 %v536
    %v717 = vunpack.c.h.b16 %v536
    %v718 = vunpack.c.l.b16 %v537
    %v719 = vunpack.c.h.b16 %v537
    %v720 = vunpack.c.l.b16 %v538
    %v721 = vunpack.c.h.b16 %v538
    %v722 = vunpack.c.l.b16 %v539
    %v723 = vunpack.c.h.b16 %v539
    %v724 = vunpack.c.l.b16 %v540
    %v725 = vunpack.c.h.b16 %v540
    %v726 = vunpack.c.l.b16 %v541
    %v727 = vunpack.c.h.b16 %v541
    %v728 = vunpack.c.l.b16 %v542
    %v729 = vunpack.c.h.b16 %v542
    %v730 = vunpack.c.l.b16 %v543
    %v731 = vunpack.c.h.b16 %v543
    %v732 = vunpack.c.l.b16 %v544
    %v733 = vunpack.c.h.b16 %v544
    %v734 = vunpack.c.l.b16 %v545
    %v735 = vunpack.c.h.b16 %v545
    %v736 = vunpack.c.l.b16 %v546
    %v737 = vunpack.c.h.b16 %v546
    %v738 = vunpack.c.l.b16 %v547
    %v739 = vunpack.c.h.b16 %v547
    %v740 = vunpack.c.l.b16 %v548
    %v741 = vunpack.c.h.b16 %v548
    %v742 = vunpack.c.l.b16 %v549
    %v743 = vunpack.c.h.b16 %v549
    %v744 = vunpack.c.l.b16 %v550
    %v745 = vunpack.c.h.b16 %v550
    %v746 = vunpack.c.l.b16 %v551
    %v747 = vunpack.c.h.b16 %v551
    %v748 = vunpack.c.l.b16 %v552
    %v749 = vunpack.c.h.b16 %v552
    %v750 = vunpack.c.l.b16 %v553
    %v751 = vunpack.c.h.b16 %v553
    %v752 = vunpack.c.l.b16 %v554
    %v753 = vunpack.c.h.b16 %v554
    %v754 = vunpack.c.l.b16 %v555
    %v755 = vunpack.c.h.b16 %v555
    %v756 = vunpack.c.l.b16 %v556
    %v757 = vunpack.c.h.b16 %v556
    %v758 = vunpack.c.l.b16 %v557
    %v759 = vunpack.c.h.b16 %v557
    %v760 = vpack.c.b16 %v636, %v632
    %v761 = vpack.c.b16 %v637, %v633
    %v762 = vpack.c.b16 %v638, %v634
    %v763 = vpack.c.b16 %v639, %v635
    %v764 = vpack.c.b16 %v644, %v640
    %v765 = vpack.c.b16 %v645, %v641
    %v766 = vpack.c.b16 %v646, %v642
    %v767 = vpack.c.b16 %v647, %v643
    %v768 = vpack.c.b16 %v652, %v648
    %v769 = vpack.c.b16 %v653, %v649
    %v770 = vpack.c.b16 %v654, %v650
    %v771 = vpack.c.b16 %v655, %v651
    %v772 = vpack.c.b16 %v660, %v656
    %v773 = vpack.c.b16 %v661, %v657
    %v774 = vpack.c.b16 %v662, %v658
    %v775 = vpack.c.b16 %v663, %v659
    %v776 = vpack.c.b16 %v668, %v664
    %v777 = vpack.c.b16 %v669, %v665
    %v778 = vpack.c.b16 %v670, %v666
    %v779 = vpack.c.b16 %v671, %v667
    %v780 = vpack.c.b16 %v676, %v672
    %v781 = vpack.c.b16 %v677, %v673
    %v782 = vpack.c.b16 %v678, %v674
    %v783 = vpack.c.b16 %v679, %v675
    %v784 = vpack.c.b16 %v684, %v680
    %v785 = vpack.c.b16 %v685, %v681
    %v786 = vpack.c.b16 %v686, %v682
    %v787 = vpack.c.b16 %v687, %v683
    %v788 = vpack.c.b16 %v692, %v688
    %v789 = vpack.c.b16 %v693, %v689
    %v790 = vpack.c.b16 %v694, %v690
    %v791 = vpack.c.b16 %v695, %v691
    %v792 = vpack.c.b16 %v700, %v696
    %v793 = vpack.c.b16 %v701, %v697
    %v794 = vpack.c.b16 %v702, %v698
    %v795 = vpack.c.b16 %v703, %v699
    %v796 = vpack.c.b16 %v708, %v704
    %v797 = vpack.c.b16 %v709, %v705
    %v798 = vpack.c.b16 %v710, %v706
    %v799 = vpack.c.b16 %v711, %v707
    %v800 = vpack.c.b16 %v716, %v712
    %v801 = vpack.c.b16 %v717, %v713
    %v802 = vpack.c.b16 %v718, %v714
    %v803 = vpack.c.b16 %v719, %v715
    %v804 = vpack.c.b16 %v724, %v720
    %v805 = vpack.c.b16 %v725, %v721
    %v806 = vpack.c.b16 %v726, %v722
    %v807 = vpack.c.b16 %v727, %v723
    %v808 = vpack.c.b16 %v732, %v728
    %v809 = vpack.c.b16 %v733, %v729
    %v810 = vpack.c.b16 %v734, %v730
    %v811 = vpack.c.b16 %v735, %v731
    %v812 = vpack.c.b16 %v740, %v736
    %v813 = vpack.c.b16 %v741, %v737
    %v814 = vpack.c.b16 %v742, %v738
    %v815 = vpack.c.b16 %v743, %v739
    %v816 = vpack.c.b16 %v748, %v744
    %v817 = vpack.c.b16 %v749, %v745
    %v818 = vpack.c.b16 %v750, %v746
    %v819 = vpack.c.b16 %v751, %v747
    %v820 = vpack.c.b16 %v756, %v752
    %v821 = vpack.c.b16 %v757, %v753
    %v822 = vpack.c.b16 %v758, %v754
    %v823 = vpack.c.b16 %v759, %v755
    %888 = vmatpush.bf16.msra.mxu0 %v788
    %889 = vmatpush.bf16.msra.mxu0 %v784
    %890 = vmatpush.bf16.msra.mxu0 %v780
    %891 = vmatpush.bf16.msra.mxu0 %v776
    %892 = vmatpush.bf16.msra.mxu0 %v772
    %893 = vmatpush.bf16.msra.mxu0 %v768
    %894 = vmatpush.bf16.msra.mxu0 %v764
    %895 = vmatpush.bf16.msra.mxu0 %v760
    %896 = vmatmul.bf16.gmra.mxu0 %v492
    %v897 = vpop.f32.mrf.mxu0
    %v898 = vadd.f32 %v560, %v897
    %v899 = vpop.f32.mrf.mxu0
    %900 = vdwg.mxu0
    %901 = vmatpush.bf16.msra.mxu0 %v820
    %902 = vmatpush.bf16.msra.mxu0 %v816
    %903 = vmatpush.bf16.msra.mxu0 %v812
    %904 = vmatpush.bf16.msra.mxu0 %v808
    %905 = vmatpush.bf16.msra.mxu0 %v804
    %906 = vmatpush.bf16.msra.mxu0 %v800
    %907 = vmatpush.bf16.msra.mxu0 %v796
    %908 = vmatpush.bf16.msra.mxu0 %v792
    %909 = vmatmul.bf16.gmra.mxu0 %v493
    %v910 = vpop.f32.mrf.mxu0
    %v911 = vadd.f32 %v898, %v910
    %v912 = vpop.f32.mrf.mxu0
    %913 = vdwg.mxu0
    %914 = vmatpush.bf16.msra.mxu0 %v789
    %915 = vmatpush.bf16.msra.mxu0 %v785
    %916 = vmatpush.bf16.msra.mxu0 %v781
    %917 = vmatpush.bf16.msra.mxu0 %v777
    %918 = vmatpush.bf16.msra.mxu0 %v773
    %919 = vmatpush.bf16.msra.mxu0 %v769
    %920 = vmatpush.bf16.msra.mxu0 %v765
    %921 = vmatpush.bf16.msra.mxu0 %v761
    %922 = vmatmul.bf16.gmra.mxu0 %v492
    %v923 = vpop.f32.mrf.mxu0
    %v924 = vadd.f32 %v561, %v923
    %v925 = vpop.f32.mrf.mxu0
    %926 = vdwg.mxu0
    %927 = vmatpush.bf16.msra.mxu0 %v821
    %928 = vmatpush.bf16.msra.mxu0 %v817
    %929 = vmatpush.bf16.msra.mxu0 %v813
    %930 = vmatpush.bf16.msra.mxu0 %v809
    %931 = vmatpush.bf16.msra.mxu0 %v805
    %932 = vmatpush.bf16.msra.mxu0 %v801
    %933 = vmatpush.bf16.msra.mxu0 %v797
    %934 = vmatpush.bf16.msra.mxu0 %v793
    %935 = vmatmul.bf16.gmra.mxu0 %v493
    %v936 = vpop.f32.mrf.mxu0
    %v937 = vadd.f32 %v924, %v936
    %v938 = vpop.f32.mrf.mxu0
    %939 = vdwg.mxu0
    %940 = vmatpush.bf16.msra.mxu0 %v790
    %941 = vmatpush.bf16.msra.mxu0 %v786
    %942 = vmatpush.bf16.msra.mxu0 %v782
    %943 = vmatpush.bf16.msra.mxu0 %v778
    %944 = vmatpush.bf16.msra.mxu0 %v774
    %945 = vmatpush.bf16.msra.mxu0 %v770
    %946 = vmatpush.bf16.msra.mxu0 %v766
    %947 = vmatpush.bf16.msra.mxu0 %v762
    %948 = vmatmul.bf16.gmra.mxu0 %v492
    %v949 = vpop.f32.mrf.mxu0
    %v950 = vadd.f32 %v562, %v949
    %v951 = vpop.f32.mrf.mxu0
    %952 = vdwg.mxu0
    %953 = vmatpush.bf16.msra.mxu0 %v822
    %954 = vmatpush.bf16.msra.mxu0 %v818
    %955 = vmatpush.bf16.msra.mxu0 %v814
    %956 = vmatpush.bf16.msra.mxu0 %v810
    %957 = vmatpush.bf16.msra.mxu0 %v806
    %958 = vmatpush.bf16.msra.mxu0 %v802
    %959 = vmatpush.bf16.msra.mxu0 %v798
    %960 = vmatpush.bf16.msra.mxu0 %v794
    %961 = vmatmul.bf16.gmra.mxu0 %v493
    %v962 = vpop.f32.mrf.mxu0
    %v963 = vadd.f32 %v950, %v962
    %v964 = vpop.f32.mrf.mxu0
    %965 = vdwg.mxu0
    %966 = vmatpush.bf16.msra.mxu0 %v791
    %967 = vmatpush.bf16.msra.mxu0 %v787
    %968 = vmatpush.bf16.msra.mxu0 %v783
    %969 = vmatpush.bf16.msra.mxu0 %v779
    %970 = vmatpush.bf16.msra.mxu0 %v775
    %971 = vmatpush.bf16.msra.mxu0 %v771
    %972 = vmatpush.bf16.msra.mxu0 %v767
    %973 = vmatpush.bf16.msra.mxu0 %v763
    %974 = vmatmul.bf16.gmra.mxu0 %v492
    %v975 = vpop.f32.mrf.mxu0
    %v976 = vadd.f32 %v563, %v975
    %v977 = vpop.f32.mrf.mxu0
    %978 = vdwg.mxu0
    %979 = vmatpush.bf16.msra.mxu0 %v823
    %980 = vmatpush.bf16.msra.mxu0 %v819
    %981 = vmatpush.bf16.msra.mxu0 %v815
    %982 = vmatpush.bf16.msra.mxu0 %v811
    %983 = vmatpush.bf16.msra.mxu0 %v807
    %984 = vmatpush.bf16.msra.mxu0 %v803
    %985 = vmatpush.bf16.msra.mxu0 %v799
    %986 = vmatpush.bf16.msra.mxu0 %v795
    %987 = vmatmul.bf16.gmra.mxu0 %v493
    %v988 = vpop.f32.mrf.mxu0
    %v989 = vadd.f32 %v976, %v988
    %v990 = vpop.f32.mrf.mxu0
    %991 = vdwg.mxu0
    %v992 = vrot.slane %v911, 4
    %v993 = vadd.f32 %v911, %v992
    %v994 = vrot.slane %v993, 2
    %v995 = vadd.f32 %v993, %v994
    %v996 = vrot.slane %v995, 1
    %v997 = vadd.f32 %v995, %v996
    %v998 = vrot.slane %v937, 4
    %v999 = vadd.f32 %v937, %v998
    %v1000 = vrot.slane %v999, 2
    %v1001 = vadd.f32 %v999, %v1000
    %v1002 = vrot.slane %v1001, 1
    %v1003 = vadd.f32 %v1001, %v1002
    %v1004 = vrot.slane %v963, 4
    %v1005 = vadd.f32 %v963, %v1004
    %v1006 = vrot.slane %v1005, 2
    %v1007 = vadd.f32 %v1005, %v1006
    %v1008 = vrot.slane %v1007, 1
    %v1009 = vadd.f32 %v1007, %v1008
    %v1010 = vrot.slane %v989, 4
    %v1011 = vadd.f32 %v989, %v1010
    %v1012 = vrot.slane %v1011, 2
    %v1013 = vadd.f32 %v1011, %v1012
    %v1014 = vrot.slane %v1013, 1
    %v1015 = vadd.f32 %v1013, %v1014
    %v1016 = vmul.f32 %v997, %v412
    %v1017 = vmul.f32 %v1003, %v412
    %v1018 = vmul.f32 %v1009, %v412
    %v1019 = vmul.f32 %v1015, %v412
    %v1020 = vsub.f32 %v911, %v1016
    %v1021 = vsub.f32 %v937, %v1017
    %v1022 = vsub.f32 %v963, %v1018
    %v1023 = vsub.f32 %v989, %v1019
    %v1024 = vmul.f32 %v1020, %v1020
    %v1025 = vmul.f32 %v1021, %v1021
    %v1026 = vmul.f32 %v1022, %v1022
    %v1027 = vmul.f32 %v1023, %v1023
    %v1028 = vrot.slane %v1024, 4
    %v1029 = vadd.f32 %v1024, %v1028
    %v1030 = vrot.slane %v1029, 2
    %v1031 = vadd.f32 %v1029, %v1030
    %v1032 = vrot.slane %v1031, 1
    %v1033 = vadd.f32 %v1031, %v1032
    %v1034 = vrot.slane %v1025, 4
    %v1035 = vadd.f32 %v1025, %v1034
    %v1036 = vrot.slane %v1035, 2
    %v1037 = vadd.f32 %v1035, %v1036
    %v1038 = vrot.slane %v1037, 1
    %v1039 = vadd.f32 %v1037, %v1038
    %v1040 = vrot.slane %v1026, 4
    %v1041 = vadd.f32 %v1026, %v1040
    %v1042 = vrot.slane %v1041, 2
    %v1043 = vadd.f32 %v1041, %v1042
    %v1044 = vrot.slane %v1043, 1
    %v1045 = vadd.f32 %v1043, %v1044
    %v1046 = vrot.slane %v1027, 4
    %v1047 = vadd.f32 %v1027, %v1046
    %v1048 = vrot.slane %v1047, 2
    %v1049 = vadd.f32 %v1047, %v1048
    %v1050 = vrot.slane %v1049, 1
    %v1051 = vadd.f32 %v1049, %v1050
    %v1052 = vmul.f32 %v1033, %v412
    %v1053 = vmul.f32 %v1039, %v412
    %v1054 = vmul.f32 %v1045, %v412
    %v1055 = vmul.f32 %v1051, %v412
    %v1056 = vld [vmem:[#allocation14] sm:$0xf]
    %v1057 = vadd.f32 %v1052, 1e-05
    %v1058 = vadd.f32 %v1053, 1e-05
    %v1059 = vadd.f32 %v1054, 1e-05
    %v1060 = vadd.f32 %v1055, 1e-05
    %v1061 = vrsqrt.pop %v1057
    %v1062 = vmul.f32 %v1061, %v1057
    %v1063 = vmul.f32 %v1062, %v1061
    %v1064 = vmul.f32 0.5, %v1063
    %v1065 = vsub.f32 1.5, %v1064
    %v1066 = vmul.f32 %v1061, %v1065
    %vm1067 = vweird.f32 %v1057
    %vm1068 = vweird.f32 %v1061
    %vm1069 = vmor %vm1067, %vm1068
    %v1070 = vsel %vm1069, %v1061, %v1066
    %v1071 = vrsqrt.pop %v1058
    %v1072 = vmul.f32 %v1071, %v1058
    %v1073 = vmul.f32 %v1072, %v1071
    %v1074 = vmul.f32 0.5, %v1073
    %v1075 = vsub.f32 1.5, %v1074
    %v1076 = vmul.f32 %v1071, %v1075
    %vm1077 = vweird.f32 %v1058
    %vm1078 = vweird.f32 %v1071
    %vm1079 = vmor %vm1077, %vm1078
    %v1080 = vsel %vm1079, %v1071, %v1076
    %v1081 = vrsqrt.pop %v1059
    %v1082 = vmul.f32 %v1081, %v1059
    %v1083 = vmul.f32 %v1082, %v1081
    %v1084 = vmul.f32 0.5, %v1083
    %v1085 = vsub.f32 1.5, %v1084
    %v1086 = vmul.f32 %v1081, %v1085
    %vm1087 = vweird.f32 %v1059
    %vm1088 = vweird.f32 %v1081
    %vm1089 = vmor %vm1087, %vm1088
    %v1090 = vsel %vm1089, %v1081, %v1086
    %v1091 = vrsqrt.pop %v1060
    %v1092 = vmul.f32 %v1091, %v1060
    %v1093 = vmul.f32 %v1092, %v1091
    %v1094 = vmul.f32 0.5, %v1093
    %v1095 = vsub.f32 1.5, %v1094
    %v1096 = vmul.f32 %v1091, %v1095
    %vm1097 = vweird.f32 %v1060
    %vm1098 = vweird.f32 %v1091
    %vm1099 = vmor %vm1097, %vm1098
    %v1100 = vsel %vm1099, %v1091, %v1096
    %v1105 = vrot.slane %v1080, 7
    %v1106 = vrot.slane %v1090, 6
    %v1107 = vrot.slane %v1100, 5
    %v1108 = vsel %vm459, %v1070, %v1105
    %vm1109 = vcmask 1042434
    %v1110 = vsel %vm1109, %v1106, %v1107
    %vm1111 = vcmask 1041408
    %v1112 = vsel %vm1111, %v1108, %v1110
    %v1114 = vmul.f32 %v1056, %v1112
    %v1115 = vld [vmem:[#allocation16] sm:$0xf]
    %v1117 = vperm.slane %v1114, 0
    %v1118 = vperm.slane %v1114, 1
    %v1119 = vperm.slane %v1114, 2
    %v1120 = vperm.slane %v1114, 3
    %v1125 = vmul.f32 %v1016, %v1117
    %v1126 = vmul.f32 %v1017, %v1118
    %v1127 = vmul.f32 %v1018, %v1119
    %v1128 = vmul.f32 %v1019, %v1120
    %v1133 = vrot.slane %v1126, 7
    %v1134 = vrot.slane %v1127, 6
    %v1135 = vrot.slane %v1128, 5
    %v1136 = vsel %vm459, %v1125, %v1133
    %v1137 = vsel %vm1109, %v1134, %v1135
    %v1138 = vsel %vm1111, %v1136, %v1137
    %v1140 = vsub.f32 %v1115, %v1138
    %v1141 = vmul.f32 %v911, %v1117
    %v1142 = vmul.f32 %v937, %v1118
    %v1143 = vmul.f32 %v963, %v1119
    %v1144 = vmul.f32 %v989, %v1120
    %v1146 = vperm.slane %v1140, 0
    %v1147 = vperm.slane %v1140, 1
    %v1148 = vperm.slane %v1140, 2
    %v1149 = vperm.slane %v1140, 3
    %v1154 = vadd.f32 %v1141, %v1146
    %v1155 = vadd.f32 %v1142, %v1147
    %v1156 = vadd.f32 %v1143, %v1148
    %v1157 = vadd.f32 %v1144, %v1149
    %vm1158 = vcmp.gt.f32.partialorder %v1154, 0.0
    %vm1159 = vcmp.gt.f32.partialorder %v1155, 0.0
    %vm1160 = vcmp.gt.f32.partialorder %v1156, 0.0
    %vm1161 = vcmp.gt.f32.partialorder %v1157, 0.0
    %v1162 = vmul.f32 %v1154, 0.2
    %v1163 = vmul.f32 %v1155, 0.2
    %v1164 = vmul.f32 %v1156, 0.2
    %v1165 = vmul.f32 %v1157, 0.2
    %v1166 = vsel %vm1158, %v1154, %v1162
    %v1167 = vsel %vm1159, %v1155, %v1163
    %v1168 = vsel %vm1160, %v1156, %v1164
    %v1169 = vsel %vm1161, %v1157, %v1165
    %v1170 = vpack.c.bf16 %v1166, %v1166
    %v1171 = vpack.c.bf16 %v1167, %v1167
    %v1172 = vpack.c.bf16 %v1168, %v1168
    %v1173 = vpack.c.bf16 %v1169, %v1169
    %v1174 = vld [vmem:[#allocation17] sm:$0xff]
    %v1175 = vld [vmem:[#allocation17 + $0x8] sm:$0xff]
    %v1176 = vld [vmem:[#allocation17 + $0x10] sm:$0xff]
    %v1177 = vld [vmem:[#allocation17 + $0x18] sm:$0xff]
    %v1178 = vld [vmem:[#allocation17 + $0x20] sm:$0xff]
    %v1179 = vld [vmem:[#allocation17 + $0x28] sm:$0xff]
    %v1180 = vld [vmem:[#allocation17 + $0x30] sm:$0xff]
    %v1181 = vld [vmem:[#allocation17 + $0x38] sm:$0xff]
    %v1182 = vld [vmem:[#allocation17 + $0x40] sm:$0xff]
    %v1183 = vld [vmem:[#allocation17 + $0x48] sm:$0xff]
    %v1184 = vld [vmem:[#allocation17 + $0x50] sm:$0xff]
    %v1185 = vld [vmem:[#allocation17 + $0x58] sm:$0xff]
    %v1186 = vld [vmem:[#allocation17 + $0x60] sm:$0xff]
    %v1187 = vld [vmem:[#allocation17 + $0x68] sm:$0xff]
    %v1188 = vld [vmem:[#allocation17 + $0x70] sm:$0xff]
    %v1189 = vld [vmem:[#allocation17 + $0x78] sm:$0xff]
    %v1190 = vld [vmem:[#allocation17 + $0x80] sm:$0xff]
    %v1191 = vld [vmem:[#allocation17 + $0x88] sm:$0xff]
    %v1192 = vld [vmem:[#allocation17 + $0x90] sm:$0xff]
    %v1193 = vld [vmem:[#allocation17 + $0x98] sm:$0xff]
    %v1194 = vld [vmem:[#allocation17 + $0xa0] sm:$0xff]
    %v1195 = vld [vmem:[#allocation17 + $0xa8] sm:$0xff]
    %v1196 = vld [vmem:[#allocation17 + $0xb0] sm:$0xff]
    %v1197 = vld [vmem:[#allocation17 + $0xb8] sm:$0xff]
    %v1198 = vld [vmem:[#allocation17 + $0xc0] sm:$0xff]
    %v1199 = vld [vmem:[#allocation17 + $0xc8] sm:$0xff]
    %v1200 = vld [vmem:[#allocation17 + $0xd0] sm:$0xff]
    %v1201 = vld [vmem:[#allocation17 + $0xd8] sm:$0xff]
    %v1202 = vld [vmem:[#allocation17 + $0xe0] sm:$0xff]
    %v1203 = vld [vmem:[#allocation17 + $0xe8] sm:$0xff]
    %v1204 = vld [vmem:[#allocation17 + $0xf0] sm:$0xff]
    %v1205 = vld [vmem:[#allocation17 + $0xf8] sm:$0xff]
    %v1206 = vld [vmem:[#allocation17 + $0x100] sm:$0xff]
    %v1207 = vld [vmem:[#allocation17 + $0x108] sm:$0xff]
    %v1208 = vld [vmem:[#allocation17 + $0x110] sm:$0xff]
    %v1209 = vld [vmem:[#allocation17 + $0x118] sm:$0xff]
    %v1210 = vld [vmem:[#allocation17 + $0x120] sm:$0xff]
    %v1211 = vld [vmem:[#allocation17 + $0x128] sm:$0xff]
    %v1212 = vld [vmem:[#allocation17 + $0x130] sm:$0xff]
    %v1213 = vld [vmem:[#allocation17 + $0x138] sm:$0xff]
    %v1214 = vld [vmem:[#allocation17 + $0x140] sm:$0xff]
    %v1215 = vld [vmem:[#allocation17 + $0x148] sm:$0xff]
    %v1216 = vld [vmem:[#allocation17 + $0x150] sm:$0xff]
    %v1217 = vld [vmem:[#allocation17 + $0x158] sm:$0xff]
    %v1218 = vld [vmem:[#allocation17 + $0x160] sm:$0xff]
    %v1219 = vld [vmem:[#allocation17 + $0x168] sm:$0xff]
    %v1220 = vld [vmem:[#allocation17 + $0x170] sm:$0xff]
    %v1221 = vld [vmem:[#allocation17 + $0x178] sm:$0xff]
    %v1222 = vld [vmem:[#allocation17 + $0x180] sm:$0xff]
    %v1223 = vld [vmem:[#allocation17 + $0x188] sm:$0xff]
    %v1224 = vld [vmem:[#allocation17 + $0x190] sm:$0xff]
    %v1225 = vld [vmem:[#allocation17 + $0x198] sm:$0xff]
    %v1226 = vld [vmem:[#allocation17 + $0x1a0] sm:$0xff]
    %v1227 = vld [vmem:[#allocation17 + $0x1a8] sm:$0xff]
    %v1228 = vld [vmem:[#allocation17 + $0x1b0] sm:$0xff]
    %v1229 = vld [vmem:[#allocation17 + $0x1b8] sm:$0xff]
    %v1230 = vld [vmem:[#allocation17 + $0x1c0] sm:$0xff]
    %v1231 = vld [vmem:[#allocation17 + $0x1c8] sm:$0xff]
    %v1232 = vld [vmem:[#allocation17 + $0x1d0] sm:$0xff]
    %v1233 = vld [vmem:[#allocation17 + $0x1d8] sm:$0xff]
    %v1234 = vld [vmem:[#allocation17 + $0x1e0] sm:$0xff]
    %v1235 = vld [vmem:[#allocation17 + $0x1e8] sm:$0xff]
    %v1236 = vld [vmem:[#allocation17 + $0x1f0] sm:$0xff]
    %v1237 = vld [vmem:[#allocation17 + $0x1f8] sm:$0xff]
    %v1238 = vld [vmem:[#allocation17 + $0x200] sm:$0xff]
    %v1239 = vld [vmem:[#allocation17 + $0x208] sm:$0xff]
    %v1240 = vld [vmem:[#allocation17 + $0x210] sm:$0xff]
    %v1241 = vld [vmem:[#allocation17 + $0x218] sm:$0xff]
    %v1242 = vld [vmem:[#allocation17 + $0x220] sm:$0xff]
    %v1243 = vld [vmem:[#allocation17 + $0x228] sm:$0xff]
    %v1244 = vld [vmem:[#allocation17 + $0x230] sm:$0xff]
    %v1245 = vld [vmem:[#allocation17 + $0x238] sm:$0xff]
    %v1246 = vld [vmem:[#allocation17 + $0x240] sm:$0xff]
    %v1247 = vld [vmem:[#allocation17 + $0x248] sm:$0xff]
    %v1248 = vld [vmem:[#allocation17 + $0x250] sm:$0xff]
    %v1249 = vld [vmem:[#allocation17 + $0x258] sm:$0xff]
    %v1250 = vld [vmem:[#allocation17 + $0x260] sm:$0xff]
    %v1251 = vld [vmem:[#allocation17 + $0x268] sm:$0xff]
    %v1252 = vld [vmem:[#allocation17 + $0x270] sm:$0xff]
    %v1253 = vld [vmem:[#allocation17 + $0x278] sm:$0xff]
    %v1254 = vld [vmem:[#allocation17 + $0x280] sm:$0xff]
    %v1255 = vld [vmem:[#allocation17 + $0x288] sm:$0xff]
    %v1256 = vld [vmem:[#allocation17 + $0x290] sm:$0xff]
    %v1257 = vld [vmem:[#allocation17 + $0x298] sm:$0xff]
    %v1258 = vld [vmem:[#allocation17 + $0x2a0] sm:$0xff]
    %v1259 = vld [vmem:[#allocation17 + $0x2a8] sm:$0xff]
    %v1260 = vld [vmem:[#allocation17 + $0x2b0] sm:$0xff]
    %v1261 = vld [vmem:[#allocation17 + $0x2b8] sm:$0xff]
    %v1262 = vld [vmem:[#allocation17 + $0x2c0] sm:$0xff]
    %v1263 = vld [vmem:[#allocation17 + $0x2c8] sm:$0xff]
    %v1264 = vld [vmem:[#allocation17 + $0x2d0] sm:$0xff]
    %v1265 = vld [vmem:[#allocation17 + $0x2d8] sm:$0xff]
    %v1266 = vld [vmem:[#allocation17 + $0x2e0] sm:$0xff]
    %v1267 = vld [vmem:[#allocation17 + $0x2e8] sm:$0xff]
    %v1268 = vld [vmem:[#allocation17 + $0x2f0] sm:$0xff]
    %v1269 = vld [vmem:[#allocation17 + $0x2f8] sm:$0xff]
    %v1270 = vld [vmem:[#allocation17 + $0x300] sm:$0xff]
    %v1271 = vld [vmem:[#allocation17 + $0x308] sm:$0xff]
    %v1272 = vld [vmem:[#allocation17 + $0x310] sm:$0xff]
    %v1273 = vld [vmem:[#allocation17 + $0x318] sm:$0xff]
    %v1274 = vld [vmem:[#allocation17 + $0x320] sm:$0xff]
    %v1275 = vld [vmem:[#allocation17 + $0x328] sm:$0xff]
    %v1276 = vld [vmem:[#allocation17 + $0x330] sm:$0xff]
    %v1277 = vld [vmem:[#allocation17 + $0x338] sm:$0xff]
    %v1278 = vld [vmem:[#allocation17 + $0x340] sm:$0xff]
    %v1279 = vld [vmem:[#allocation17 + $0x348] sm:$0xff]
    %v1280 = vld [vmem:[#allocation17 + $0x350] sm:$0xff]
    %v1281 = vld [vmem:[#allocation17 + $0x358] sm:$0xff]
    %v1282 = vld [vmem:[#allocation17 + $0x360] sm:$0xff]
    %v1283 = vld [vmem:[#allocation17 + $0x368] sm:$0xff]
    %v1284 = vld [vmem:[#allocation17 + $0x370] sm:$0xff]
    %v1285 = vld [vmem:[#allocation17 + $0x378] sm:$0xff]
    %v1286 = vld [vmem:[#allocation17 + $0x380] sm:$0xff]
    %v1287 = vld [vmem:[#allocation17 + $0x388] sm:$0xff]
    %v1288 = vld [vmem:[#allocation17 + $0x390] sm:$0xff]
    %v1289 = vld [vmem:[#allocation17 + $0x398] sm:$0xff]
    %v1290 = vld [vmem:[#allocation17 + $0x3a0] sm:$0xff]
    %v1291 = vld [vmem:[#allocation17 + $0x3a8] sm:$0xff]
    %v1292 = vld [vmem:[#allocation17 + $0x3b0] sm:$0xff]
    %v1293 = vld [vmem:[#allocation17 + $0x3b8] sm:$0xff]
    %v1294 = vld [vmem:[#allocation17 + $0x3c0] sm:$0xff]
    %v1295 = vld [vmem:[#allocation17 + $0x3c8] sm:$0xff]
    %v1296 = vld [vmem:[#allocation17 + $0x3d0] sm:$0xff]
    %v1297 = vld [vmem:[#allocation17 + $0x3d8] sm:$0xff]
    %v1298 = vld [vmem:[#allocation17 + $0x3e0] sm:$0xff]
    %v1299 = vld [vmem:[#allocation17 + $0x3e8] sm:$0xff]
    %v1300 = vld [vmem:[#allocation17 + $0x3f0] sm:$0xff]
    %v1301 = vld [vmem:[#allocation17 + $0x3f8] sm:$0xff]
    %v1302 = vld [vmem:[#allocation17 + $0x400] sm:$0xff]
    %v1303 = vld [vmem:[#allocation17 + $0x408] sm:$0xff]
    %v1304 = vld [vmem:[#allocation17 + $0x410] sm:$0xff]
    %v1305 = vld [vmem:[#allocation17 + $0x418] sm:$0xff]
    %v1306 = vld [vmem:[#allocation17 + $0x420] sm:$0xff]
    %v1307 = vld [vmem:[#allocation17 + $0x428] sm:$0xff]
    %v1308 = vld [vmem:[#allocation17 + $0x430] sm:$0xff]
    %v1309 = vld [vmem:[#allocation17 + $0x438] sm:$0xff]
    %v1310 = vld [vmem:[#allocation17 + $0x440] sm:$0xff]
    %v1311 = vld [vmem:[#allocation17 + $0x448] sm:$0xff]
    %v1312 = vld [vmem:[#allocation17 + $0x450] sm:$0xff]
    %v1313 = vld [vmem:[#allocation17 + $0x458] sm:$0xff]
    %v1314 = vld [vmem:[#allocation17 + $0x460] sm:$0xff]
    %v1315 = vld [vmem:[#allocation17 + $0x468] sm:$0xff]
    %v1316 = vld [vmem:[#allocation17 + $0x470] sm:$0xff]
    %v1317 = vld [vmem:[#allocation17 + $0x478] sm:$0xff]
    %v1318 = vld [vmem:[#allocation17 + $0x480] sm:$0xff]
    %v1319 = vld [vmem:[#allocation17 + $0x488] sm:$0xff]
    %v1320 = vld [vmem:[#allocation17 + $0x490] sm:$0xff]
    %v1321 = vld [vmem:[#allocation17 + $0x498] sm:$0xff]
    %v1322 = vld [vmem:[#allocation17 + $0x4a0] sm:$0xff]
    %v1323 = vld [vmem:[#allocation17 + $0x4a8] sm:$0xff]
    %v1324 = vld [vmem:[#allocation17 + $0x4b0] sm:$0xff]
    %v1325 = vld [vmem:[#allocation17 + $0x4b8] sm:$0xff]
    %v1326 = vld [vmem:[#allocation17 + $0x4c0] sm:$0xff]
    %v1327 = vld [vmem:[#allocation17 + $0x4c8] sm:$0xff]
    %v1328 = vld [vmem:[#allocation17 + $0x4d0] sm:$0xff]
    %v1329 = vld [vmem:[#allocation17 + $0x4d8] sm:$0xff]
    %v1330 = vld [vmem:[#allocation17 + $0x4e0] sm:$0xff]
    %v1331 = vld [vmem:[#allocation17 + $0x4e8] sm:$0xff]
    %v1332 = vld [vmem:[#allocation17 + $0x4f0] sm:$0xff]
    %v1333 = vld [vmem:[#allocation17 + $0x4f8] sm:$0xff]
    %v1334 = vld [vmem:[#allocation17 + $0x500] sm:$0xff]
    %v1335 = vld [vmem:[#allocation17 + $0x508] sm:$0xff]
    %v1336 = vld [vmem:[#allocation17 + $0x510] sm:$0xff]
    %v1337 = vld [vmem:[#allocation17 + $0x518] sm:$0xff]
    %v1338 = vld [vmem:[#allocation17 + $0x520] sm:$0xff]
    %v1339 = vld [vmem:[#allocation17 + $0x528] sm:$0xff]
    %v1340 = vld [vmem:[#allocation17 + $0x530] sm:$0xff]
    %v1341 = vld [vmem:[#allocation17 + $0x538] sm:$0xff]
    %v1342 = vld [vmem:[#allocation17 + $0x540] sm:$0xff]
    %v1343 = vld [vmem:[#allocation17 + $0x548] sm:$0xff]
    %v1344 = vld [vmem:[#allocation17 + $0x550] sm:$0xff]
    %v1345 = vld [vmem:[#allocation17 + $0x558] sm:$0xff]
    %v1346 = vld [vmem:[#allocation17 + $0x560] sm:$0xff]
    %v1347 = vld [vmem:[#allocation17 + $0x568] sm:$0xff]
    %v1348 = vld [vmem:[#allocation17 + $0x570] sm:$0xff]
    %v1349 = vld [vmem:[#allocation17 + $0x578] sm:$0xff]
    %v1350 = vld [vmem:[#allocation17 + $0x580] sm:$0xff]
    %v1351 = vld [vmem:[#allocation17 + $0x588] sm:$0xff]
    %v1352 = vld [vmem:[#allocation17 + $0x590] sm:$0xff]
    %v1353 = vld [vmem:[#allocation17 + $0x598] sm:$0xff]
    %v1354 = vld [vmem:[#allocation17 + $0x5a0] sm:$0xff]
    %v1355 = vld [vmem:[#allocation17 + $0x5a8] sm:$0xff]
    %v1356 = vld [vmem:[#allocation17 + $0x5b0] sm:$0xff]
    %v1357 = vld [vmem:[#allocation17 + $0x5b8] sm:$0xff]
    %v1358 = vld [vmem:[#allocation17 + $0x5c0] sm:$0xff]
    %v1359 = vld [vmem:[#allocation17 + $0x5c8] sm:$0xff]
    %v1360 = vld [vmem:[#allocation17 + $0x5d0] sm:$0xff]
    %v1361 = vld [vmem:[#allocation17 + $0x5d8] sm:$0xff]
    %v1362 = vld [vmem:[#allocation17 + $0x5e0] sm:$0xff]
    %v1363 = vld [vmem:[#allocation17 + $0x5e8] sm:$0xff]
    %v1364 = vld [vmem:[#allocation17 + $0x5f0] sm:$0xff]
    %v1365 = vld [vmem:[#allocation17 + $0x5f8] sm:$0xff]
    %v1366 = vld [vmem:[#allocation17 + $0x600] sm:$0xff]
    %v1367 = vld [vmem:[#allocation17 + $0x608] sm:$0xff]
    %v1368 = vld [vmem:[#allocation17 + $0x610] sm:$0xff]
    %v1369 = vld [vmem:[#allocation17 + $0x618] sm:$0xff]
    %v1370 = vld [vmem:[#allocation17 + $0x620] sm:$0xff]
    %v1371 = vld [vmem:[#allocation17 + $0x628] sm:$0xff]
    %v1372 = vld [vmem:[#allocation17 + $0x630] sm:$0xff]
    %v1373 = vld [vmem:[#allocation17 + $0x638] sm:$0xff]
    %v1374 = vld [vmem:[#allocation17 + $0x640] sm:$0xff]
    %v1375 = vld [vmem:[#allocation17 + $0x648] sm:$0xff]
    %v1376 = vld [vmem:[#allocation17 + $0x650] sm:$0xff]
    %v1377 = vld [vmem:[#allocation17 + $0x658] sm:$0xff]
    %v1378 = vld [vmem:[#allocation17 + $0x660] sm:$0xff]
    %v1379 = vld [vmem:[#allocation17 + $0x668] sm:$0xff]
    %v1380 = vld [vmem:[#allocation17 + $0x670] sm:$0xff]
    %v1381 = vld [vmem:[#allocation17 + $0x678] sm:$0xff]
    %v1382 = vld [vmem:[#allocation17 + $0x680] sm:$0xff]
    %v1383 = vld [vmem:[#allocation17 + $0x688] sm:$0xff]
    %v1384 = vld [vmem:[#allocation17 + $0x690] sm:$0xff]
    %v1385 = vld [vmem:[#allocation17 + $0x698] sm:$0xff]
    %v1386 = vld [vmem:[#allocation17 + $0x6a0] sm:$0xff]
    %v1387 = vld [vmem:[#allocation17 + $0x6a8] sm:$0xff]
    %v1388 = vld [vmem:[#allocation17 + $0x6b0] sm:$0xff]
    %v1389 = vld [vmem:[#allocation17 + $0x6b8] sm:$0xff]
    %v1390 = vld [vmem:[#allocation17 + $0x6c0] sm:$0xff]
    %v1391 = vld [vmem:[#allocation17 + $0x6c8] sm:$0xff]
    %v1392 = vld [vmem:[#allocation17 + $0x6d0] sm:$0xff]
    %v1393 = vld [vmem:[#allocation17 + $0x6d8] sm:$0xff]
    %v1394 = vld [vmem:[#allocation17 + $0x6e0] sm:$0xff]
    %v1395 = vld [vmem:[#allocation17 + $0x6e8] sm:$0xff]
    %v1396 = vld [vmem:[#allocation17 + $0x6f0] sm:$0xff]
    %v1397 = vld [vmem:[#allocation17 + $0x6f8] sm:$0xff]
    %v1398 = vld [vmem:[#allocation17 + $0x700] sm:$0xff]
    %v1399 = vld [vmem:[#allocation17 + $0x708] sm:$0xff]
    %v1400 = vld [vmem:[#allocation17 + $0x710] sm:$0xff]
    %v1401 = vld [vmem:[#allocation17 + $0x718] sm:$0xff]
    %v1402 = vld [vmem:[#allocation17 + $0x720] sm:$0xff]
    %v1403 = vld [vmem:[#allocation17 + $0x728] sm:$0xff]
    %v1404 = vld [vmem:[#allocation17 + $0x730] sm:$0xff]
    %v1405 = vld [vmem:[#allocation17 + $0x738] sm:$0xff]
    %v1406 = vld [vmem:[#allocation17 + $0x740] sm:$0xff]
    %v1407 = vld [vmem:[#allocation17 + $0x748] sm:$0xff]
    %v1408 = vld [vmem:[#allocation17 + $0x750] sm:$0xff]
    %v1409 = vld [vmem:[#allocation17 + $0x758] sm:$0xff]
    %v1410 = vld [vmem:[#allocation17 + $0x760] sm:$0xff]
    %v1411 = vld [vmem:[#allocation17 + $0x768] sm:$0xff]
    %v1412 = vld [vmem:[#allocation17 + $0x770] sm:$0xff]
    %v1413 = vld [vmem:[#allocation17 + $0x778] sm:$0xff]
    %v1414 = vld [vmem:[#allocation17 + $0x780] sm:$0xff]
    %v1415 = vld [vmem:[#allocation17 + $0x788] sm:$0xff]
    %v1416 = vld [vmem:[#allocation17 + $0x790] sm:$0xff]
    %v1417 = vld [vmem:[#allocation17 + $0x798] sm:$0xff]
    %v1418 = vld [vmem:[#allocation17 + $0x7a0] sm:$0xff]
    %v1419 = vld [vmem:[#allocation17 + $0x7a8] sm:$0xff]
    %v1420 = vld [vmem:[#allocation17 + $0x7b0] sm:$0xff]
    %v1421 = vld [vmem:[#allocation17 + $0x7b8] sm:$0xff]
    %v1422 = vld [vmem:[#allocation17 + $0x7c0] sm:$0xff]
    %v1423 = vld [vmem:[#allocation17 + $0x7c8] sm:$0xff]
    %v1424 = vld [vmem:[#allocation17 + $0x7d0] sm:$0xff]
    %v1425 = vld [vmem:[#allocation17 + $0x7d8] sm:$0xff]
    %v1426 = vld [vmem:[#allocation17 + $0x7e0] sm:$0xff]
    %v1427 = vld [vmem:[#allocation17 + $0x7e8] sm:$0xff]
    %v1428 = vld [vmem:[#allocation17 + $0x7f0] sm:$0xff]
    %v1429 = vld [vmem:[#allocation17 + $0x7f8] sm:$0xff]
    %v1430 = vld [vmem:[%s12] sm:$0xff]
    %v1432 = vperm.slane %v1430, 0
    %v1433 = vperm.slane %v1430, 1
    %v1434 = vperm.slane %v1430, 2
    %v1435 = vperm.slane %v1430, 3
    %v1436 = vperm.slane %v1430, 4
    %v1437 = vperm.slane %v1430, 5
    %v1438 = vperm.slane %v1430, 6
    %v1439 = vperm.slane %v1430, 7
    %v1704 = vunpack.c.l.b16 %v1174
    %v1705 = vunpack.c.h.b16 %v1174
    %v1706 = vunpack.c.l.b16 %v1175
    %v1707 = vunpack.c.h.b16 %v1175
    %v1708 = vunpack.c.l.b16 %v1176
    %v1709 = vunpack.c.h.b16 %v1176
    %v1710 = vunpack.c.l.b16 %v1177
    %v1711 = vunpack.c.h.b16 %v1177
    %v1712 = vunpack.c.l.b16 %v1178
    %v1713 = vunpack.c.h.b16 %v1178
    %v1714 = vunpack.c.l.b16 %v1179
    %v1715 = vunpack.c.h.b16 %v1179
    %v1716 = vunpack.c.l.b16 %v1180
    %v1717 = vunpack.c.h.b16 %v1180
    %v1718 = vunpack.c.l.b16 %v1181
    %v1719 = vunpack.c.h.b16 %v1181
    %v1720 = vunpack.c.l.b16 %v1182
    %v1721 = vunpack.c.h.b16 %v1182
    %v1722 = vunpack.c.l.b16 %v1183
    %v1723 = vunpack.c.h.b16 %v1183
    %v1724 = vunpack.c.l.b16 %v1184
    %v1725 = vunpack.c.h.b16 %v1184
    %v1726 = vunpack.c.l.b16 %v1185
    %v1727 = vunpack.c.h.b16 %v1185
    %v1728 = vunpack.c.l.b16 %v1186
    %v1729 = vunpack.c.h.b16 %v1186
    %v1730 = vunpack.c.l.b16 %v1187
    %v1731 = vunpack.c.h.b16 %v1187
    %v1732 = vunpack.c.l.b16 %v1188
    %v1733 = vunpack.c.h.b16 %v1188
    %v1734 = vunpack.c.l.b16 %v1189
    %v1735 = vunpack.c.h.b16 %v1189
    %v1736 = vunpack.c.l.b16 %v1190
    %v1737 = vunpack.c.h.b16 %v1190
    %v1738 = vunpack.c.l.b16 %v1191
    %v1739 = vunpack.c.h.b16 %v1191
    %v1740 = vunpack.c.l.b16 %v1192
    %v1741 = vunpack.c.h.b16 %v1192
    %v1742 = vunpack.c.l.b16 %v1193
    %v1743 = vunpack.c.h.b16 %v1193
    %v1744 = vunpack.c.l.b16 %v1194
    %v1745 = vunpack.c.h.b16 %v1194
    %v1746 = vunpack.c.l.b16 %v1195
    %v1747 = vunpack.c.h.b16 %v1195
    %v1748 = vunpack.c.l.b16 %v1196
    %v1749 = vunpack.c.h.b16 %v1196
    %v1750 = vunpack.c.l.b16 %v1197
    %v1751 = vunpack.c.h.b16 %v1197
    %v1752 = vunpack.c.l.b16 %v1198
    %v1753 = vunpack.c.h.b16 %v1198
    %v1754 = vunpack.c.l.b16 %v1199
    %v1755 = vunpack.c.h.b16 %v1199
    %v1756 = vunpack.c.l.b16 %v1200
    %v1757 = vunpack.c.h.b16 %v1200
    %v1758 = vunpack.c.l.b16 %v1201
    %v1759 = vunpack.c.h.b16 %v1201
    %v1760 = vunpack.c.l.b16 %v1202
    %v1761 = vunpack.c.h.b16 %v1202
    %v1762 = vunpack.c.l.b16 %v1203
    %v1763 = vunpack.c.h.b16 %v1203
    %v1764 = vunpack.c.l.b16 %v1204
    %v1765 = vunpack.c.h.b16 %v1204
    %v1766 = vunpack.c.l.b16 %v1205
    %v1767 = vunpack.c.h.b16 %v1205
    %v1768 = vunpack.c.l.b16 %v1206
    %v1769 = vunpack.c.h.b16 %v1206
    %v1770 = vunpack.c.l.b16 %v1207
    %v1771 = vunpack.c.h.b16 %v1207
    %v1772 = vunpack.c.l.b16 %v1208
    %v1773 = vunpack.c.h.b16 %v1208
    %v1774 = vunpack.c.l.b16 %v1209
    %v1775 = vunpack.c.h.b16 %v1209
    %v1776 = vunpack.c.l.b16 %v1210
    %v1777 = vunpack.c.h.b16 %v1210
    %v1778 = vunpack.c.l.b16 %v1211
    %v1779 = vunpack.c.h.b16 %v1211
    %v1780 = vunpack.c.l.b16 %v1212
    %v1781 = vunpack.c.h.b16 %v1212
    %v1782 = vunpack.c.l.b16 %v1213
    %v1783 = vunpack.c.h.b16 %v1213
    %v1784 = vunpack.c.l.b16 %v1214
    %v1785 = vunpack.c.h.b16 %v1214
    %v1786 = vunpack.c.l.b16 %v1215
    %v1787 = vunpack.c.h.b16 %v1215
    %v1788 = vunpack.c.l.b16 %v1216
    %v1789 = vunpack.c.h.b16 %v1216
    %v1790 = vunpack.c.l.b16 %v1217
    %v1791 = vunpack.c.h.b16 %v1217
    %v1792 = vunpack.c.l.b16 %v1218
    %v1793 = vunpack.c.h.b16 %v1218
    %v1794 = vunpack.c.l.b16 %v1219
    %v1795 = vunpack.c.h.b16 %v1219
    %v1796 = vunpack.c.l.b16 %v1220
    %v1797 = vunpack.c.h.b16 %v1220
    %v1798 = vunpack.c.l.b16 %v1221
    %v1799 = vunpack.c.h.b16 %v1221
    %v1800 = vunpack.c.l.b16 %v1222
    %v1801 = vunpack.c.h.b16 %v1222
    %v1802 = vunpack.c.l.b16 %v1223
    %v1803 = vunpack.c.h.b16 %v1223
    %v1804 = vunpack.c.l.b16 %v1224
    %v1805 = vunpack.c.h.b16 %v1224
    %v1806 = vunpack.c.l.b16 %v1225
    %v1807 = vunpack.c.h.b16 %v1225
    %v1808 = vunpack.c.l.b16 %v1226
    %v1809 = vunpack.c.h.b16 %v1226
    %v1810 = vunpack.c.l.b16 %v1227
    %v1811 = vunpack.c.h.b16 %v1227
    %v1812 = vunpack.c.l.b16 %v1228
    %v1813 = vunpack.c.h.b16 %v1228
    %v1814 = vunpack.c.l.b16 %v1229
    %v1815 = vunpack.c.h.b16 %v1229
    %v1816 = vunpack.c.l.b16 %v1230
    %v1817 = vunpack.c.h.b16 %v1230
    %v1818 = vunpack.c.l.b16 %v1231
    %v1819 = vunpack.c.h.b16 %v1231
    %v1820 = vunpack.c.l.b16 %v1232
    %v1821 = vunpack.c.h.b16 %v1232
    %v1822 = vunpack.c.l.b16 %v1233
    %v1823 = vunpack.c.h.b16 %v1233
    %v1824 = vunpack.c.l.b16 %v1234
    %v1825 = vunpack.c.h.b16 %v1234
    %v1826 = vunpack.c.l.b16 %v1235
    %v1827 = vunpack.c.h.b16 %v1235
    %v1828 = vunpack.c.l.b16 %v1236
    %v1829 = vunpack.c.h.b16 %v1236
    %v1830 = vunpack.c.l.b16 %v1237
    %v1831 = vunpack.c.h.b16 %v1237
    %v1832 = vunpack.c.l.b16 %v1238
    %v1833 = vunpack.c.h.b16 %v1238
    %v1834 = vunpack.c.l.b16 %v1239
    %v1835 = vunpack.c.h.b16 %v1239
    %v1836 = vunpack.c.l.b16 %v1240
    %v1837 = vunpack.c.h.b16 %v1240
    %v1838 = vunpack.c.l.b16 %v1241
    %v1839 = vunpack.c.h.b16 %v1241
    %v1840 = vunpack.c.l.b16 %v1242
    %v1841 = vunpack.c.h.b16 %v1242
    %v1842 = vunpack.c.l.b16 %v1243
    %v1843 = vunpack.c.h.b16 %v1243
    %v1844 = vunpack.c.l.b16 %v1244
    %v1845 = vunpack.c.h.b16 %v1244
    %v1846 = vunpack.c.l.b16 %v1245
    %v1847 = vunpack.c.h.b16 %v1245
    %v1848 = vunpack.c.l.b16 %v1246
    %v1849 = vunpack.c.h.b16 %v1246
    %v1850 = vunpack.c.l.b16 %v1247
    %v1851 = vunpack.c.h.b16 %v1247
    %v1852 = vunpack.c.l.b16 %v1248
    %v1853 = vunpack.c.h.b16 %v1248
    %v1854 = vunpack.c.l.b16 %v1249
    %v1855 = vunpack.c.h.b16 %v1249
    %v1856 = vunpack.c.l.b16 %v1250
    %v1857 = vunpack.c.h.b16 %v1250
    %v1858 = vunpack.c.l.b16 %v1251
    %v1859 = vunpack.c.h.b16 %v1251
    %v1860 = vunpack.c.l.b16 %v1252
    %v1861 = vunpack.c.h.b16 %v1252
    %v1862 = vunpack.c.l.b16 %v1253
    %v1863 = vunpack.c.h.b16 %v1253
    %v1864 = vunpack.c.l.b16 %v1254
    %v1865 = vunpack.c.h.b16 %v1254
    %v1866 = vunpack.c.l.b16 %v1255
    %v1867 = vunpack.c.h.b16 %v1255
    %v1868 = vunpack.c.l.b16 %v1256
    %v1869 = vunpack.c.h.b16 %v1256
    %v1870 = vunpack.c.l.b16 %v1257
    %v1871 = vunpack.c.h.b16 %v1257
    %v1872 = vunpack.c.l.b16 %v1258
    %v1873 = vunpack.c.h.b16 %v1258
    %v1874 = vunpack.c.l.b16 %v1259
    %v1875 = vunpack.c.h.b16 %v1259
    %v1876 = vunpack.c.l.b16 %v1260
    %v1877 = vunpack.c.h.b16 %v1260
    %v1878 = vunpack.c.l.b16 %v1261
    %v1879 = vunpack.c.h.b16 %v1261
    %v1880 = vunpack.c.l.b16 %v1262
    %v1881 = vunpack.c.h.b16 %v1262
    %v1882 = vunpack.c.l.b16 %v1263
    %v1883 = vunpack.c.h.b16 %v1263
    %v1884 = vunpack.c.l.b16 %v1264
    %v1885 = vunpack.c.h.b16 %v1264
    %v1886 = vunpack.c.l.b16 %v1265
    %v1887 = vunpack.c.h.b16 %v1265
    %v1888 = vunpack.c.l.b16 %v1266
    %v1889 = vunpack.c.h.b16 %v1266
    %v1890 = vunpack.c.l.b16 %v1267
    %v1891 = vunpack.c.h.b16 %v1267
    %v1892 = vunpack.c.l.b16 %v1268
    %v1893 = vunpack.c.h.b16 %v1268
    %v1894 = vunpack.c.l.b16 %v1269
    %v1895 = vunpack.c.h.b16 %v1269
    %v1896 = vunpack.c.l.b16 %v1270
    %v1897 = vunpack.c.h.b16 %v1270
    %v1898 = vunpack.c.l.b16 %v1271
    %v1899 = vunpack.c.h.b16 %v1271
    %v1900 = vunpack.c.l.b16 %v1272
    %v1901 = vunpack.c.h.b16 %v1272
    %v1902 = vunpack.c.l.b16 %v1273
    %v1903 = vunpack.c.h.b16 %v1273
    %v1904 = vunpack.c.l.b16 %v1274
    %v1905 = vunpack.c.h.b16 %v1274
    %v1906 = vunpack.c.l.b16 %v1275
    %v1907 = vunpack.c.h.b16 %v1275
    %v1908 = vunpack.c.l.b16 %v1276
    %v1909 = vunpack.c.h.b16 %v1276
    %v1910 = vunpack.c.l.b16 %v1277
    %v1911 = vunpack.c.h.b16 %v1277
    %v1912 = vunpack.c.l.b16 %v1278
    %v1913 = vunpack.c.h.b16 %v1278
    %v1914 = vunpack.c.l.b16 %v1279
    %v1915 = vunpack.c.h.b16 %v1279
    %v1916 = vunpack.c.l.b16 %v1280
    %v1917 = vunpack.c.h.b16 %v1280
    %v1918 = vunpack.c.l.b16 %v1281
    %v1919 = vunpack.c.h.b16 %v1281
    %v1920 = vunpack.c.l.b16 %v1282
    %v1921 = vunpack.c.h.b16 %v1282
    %v1922 = vunpack.c.l.b16 %v1283
    %v1923 = vunpack.c.h.b16 %v1283
    %v1924 = vunpack.c.l.b16 %v1284
    %v1925 = vunpack.c.h.b16 %v1284
    %v1926 = vunpack.c.l.b16 %v1285
    %v1927 = vunpack.c.h.b16 %v1285
    %v1928 = vunpack.c.l.b16 %v1286
    %v1929 = vunpack.c.h.b16 %v1286
    %v1930 = vunpack.c.l.b16 %v1287
    %v1931 = vunpack.c.h.b16 %v1287
    %v1932 = vunpack.c.l.b16 %v1288
    %v1933 = vunpack.c.h.b16 %v1288
    %v1934 = vunpack.c.l.b16 %v1289
    %v1935 = vunpack.c.h.b16 %v1289
    %v1936 = vunpack.c.l.b16 %v1290
    %v1937 = vunpack.c.h.b16 %v1290
    %v1938 = vunpack.c.l.b16 %v1291
    %v1939 = vunpack.c.h.b16 %v1291
    %v1940 = vunpack.c.l.b16 %v1292
    %v1941 = vunpack.c.h.b16 %v1292
    %v1942 = vunpack.c.l.b16 %v1293
    %v1943 = vunpack.c.h.b16 %v1293
    %v1944 = vunpack.c.l.b16 %v1294
    %v1945 = vunpack.c.h.b16 %v1294
    %v1946 = vunpack.c.l.b16 %v1295
    %v1947 = vunpack.c.h.b16 %v1295
    %v1948 = vunpack.c.l.b16 %v1296
    %v1949 = vunpack.c.h.b16 %v1296
    %v1950 = vunpack.c.l.b16 %v1297
    %v1951 = vunpack.c.h.b16 %v1297
    %v1952 = vunpack.c.l.b16 %v1298
    %v1953 = vunpack.c.h.b16 %v1298
    %v1954 = vunpack.c.l.b16 %v1299
    %v1955 = vunpack.c.h.b16 %v1299
    %v1956 = vunpack.c.l.b16 %v1300
    %v1957 = vunpack.c.h.b16 %v1300
    %v1958 = vunpack.c.l.b16 %v1301
    %v1959 = vunpack.c.h.b16 %v1301
    %v1960 = vunpack.c.l.b16 %v1302
    %v1961 = vunpack.c.h.b16 %v1302
    %v1962 = vunpack.c.l.b16 %v1303
    %v1963 = vunpack.c.h.b16 %v1303
    %v1964 = vunpack.c.l.b16 %v1304
    %v1965 = vunpack.c.h.b16 %v1304
    %v1966 = vunpack.c.l.b16 %v1305
    %v1967 = vunpack.c.h.b16 %v1305
    %v1968 = vunpack.c.l.b16 %v1306
    %v1969 = vunpack.c.h.b16 %v1306
    %v1970 = vunpack.c.l.b16 %v1307
    %v1971 = vunpack.c.h.b16 %v1307
    %v1972 = vunpack.c.l.b16 %v1308
    %v1973 = vunpack.c.h.b16 %v1308
    %v1974 = vunpack.c.l.b16 %v1309
    %v1975 = vunpack.c.h.b16 %v1309
    %v1976 = vunpack.c.l.b16 %v1310
    %v1977 = vunpack.c.h.b16 %v1310
    %v1978 = vunpack.c.l.b16 %v1311
    %v1979 = vunpack.c.h.b16 %v1311
    %v1980 = vunpack.c.l.b16 %v1312
    %v1981 = vunpack.c.h.b16 %v1312
    %v1982 = vunpack.c.l.b16 %v1313
    %v1983 = vunpack.c.h.b16 %v1313
    %v1984 = vunpack.c.l.b16 %v1314
    %v1985 = vunpack.c.h.b16 %v1314
    %v1986 = vunpack.c.l.b16 %v1315
    %v1987 = vunpack.c.h.b16 %v1315
    %v1988 = vunpack.c.l.b16 %v1316
    %v1989 = vunpack.c.h.b16 %v1316
    %v1990 = vunpack.c.l.b16 %v1317
    %v1991 = vunpack.c.h.b16 %v1317
    %v1992 = vunpack.c.l.b16 %v1318
    %v1993 = vunpack.c.h.b16 %v1318
    %v1994 = vunpack.c.l.b16 %v1319
    %v1995 = vunpack.c.h.b16 %v1319
    %v1996 = vunpack.c.l.b16 %v1320
    %v1997 = vunpack.c.h.b16 %v1320
    %v1998 = vunpack.c.l.b16 %v1321
    %v1999 = vunpack.c.h.b16 %v1321
    %v2000 = vunpack.c.l.b16 %v1322
    %v2001 = vunpack.c.h.b16 %v1322
    %v2002 = vunpack.c.l.b16 %v1323
    %v2003 = vunpack.c.h.b16 %v1323
    %v2004 = vunpack.c.l.b16 %v1324
    %v2005 = vunpack.c.h.b16 %v1324
    %v2006 = vunpack.c.l.b16 %v1325
    %v2007 = vunpack.c.h.b16 %v1325
    %v2008 = vunpack.c.l.b16 %v1326
    %v2009 = vunpack.c.h.b16 %v1326
    %v2010 = vunpack.c.l.b16 %v1327
    %v2011 = vunpack.c.h.b16 %v1327
    %v2012 = vunpack.c.l.b16 %v1328
    %v2013 = vunpack.c.h.b16 %v1328
    %v2014 = vunpack.c.l.b16 %v1329
    %v2015 = vunpack.c.h.b16 %v1329
    %v2016 = vunpack.c.l.b16 %v1330
    %v2017 = vunpack.c.h.b16 %v1330
    %v2018 = vunpack.c.l.b16 %v1331
    %v2019 = vunpack.c.h.b16 %v1331
    %v2020 = vunpack.c.l.b16 %v1332
    %v2021 = vunpack.c.h.b16 %v1332
    %v2022 = vunpack.c.l.b16 %v1333
    %v2023 = vunpack.c.h.b16 %v1333
    %v2024 = vunpack.c.l.b16 %v1334
    %v2025 = vunpack.c.h.b16 %v1334
    %v2026 = vunpack.c.l.b16 %v1335
    %v2027 = vunpack.c.h.b16 %v1335
    %v2028 = vunpack.c.l.b16 %v1336
    %v2029 = vunpack.c.h.b16 %v1336
    %v2030 = vunpack.c.l.b16 %v1337
    %v2031 = vunpack.c.h.b16 %v1337
    %v2032 = vunpack.c.l.b16 %v1338
    %v2033 = vunpack.c.h.b16 %v1338
    %v2034 = vunpack.c.l.b16 %v1339
    %v2035 = vunpack.c.h.b16 %v1339
    %v2036 = vunpack.c.l.b16 %v1340
    %v2037 = vunpack.c.h.b16 %v1340
    %v2038 = vunpack.c.l.b16 %v1341
    %v2039 = vunpack.c.h.b16 %v1341
    %v2040 = vunpack.c.l.b16 %v1342
    %v2041 = vunpack.c.h.b16 %v1342
    %v2042 = vunpack.c.l.b16 %v1343
    %v2043 = vunpack.c.h.b16 %v1343
    %v2044 = vunpack.c.l.b16 %v1344
    %v2045 = vunpack.c.h.b16 %v1344
    %v2046 = vunpack.c.l.b16 %v1345
    %v2047 = vunpack.c.h.b16 %v1345
    %v2048 = vunpack.c.l.b16 %v1346
    %v2049 = vunpack.c.h.b16 %v1346
    %v2050 = vunpack.c.l.b16 %v1347
    %v2051 = vunpack.c.h.b16 %v1347
    %v2052 = vunpack.c.l.b16 %v1348
    %v2053 = vunpack.c.h.b16 %v1348
    %v2054 = vunpack.c.l.b16 %v1349
    %v2055 = vunpack.c.h.b16 %v1349
    %v2056 = vunpack.c.l.b16 %v1350
    %v2057 = vunpack.c.h.b16 %v1350
    %v2058 = vunpack.c.l.b16 %v1351
    %v2059 = vunpack.c.h.b16 %v1351
    %v2060 = vunpack.c.l.b16 %v1352
    %v2061 = vunpack.c.h.b16 %v1352
    %v2062 = vunpack.c.l.b16 %v1353
    %v2063 = vunpack.c.h.b16 %v1353
    %v2064 = vunpack.c.l.b16 %v1354
    %v2065 = vunpack.c.h.b16 %v1354
    %v2066 = vunpack.c.l.b16 %v1355
    %v2067 = vunpack.c.h.b16 %v1355
    %v2068 = vunpack.c.l.b16 %v1356
    %v2069 = vunpack.c.h.b16 %v1356
    %v2070 = vunpack.c.l.b16 %v1357
    %v2071 = vunpack.c.h.b16 %v1357
    %v2072 = vunpack.c.l.b16 %v1358
    %v2073 = vunpack.c.h.b16 %v1358
    %v2074 = vunpack.c.l.b16 %v1359
    %v2075 = vunpack.c.h.b16 %v1359
    %v2076 = vunpack.c.l.b16 %v1360
    %v2077 = vunpack.c.h.b16 %v1360
    %v2078 = vunpack.c.l.b16 %v1361
    %v2079 = vunpack.c.h.b16 %v1361
    %v2080 = vunpack.c.l.b16 %v1362
    %v2081 = vunpack.c.h.b16 %v1362
    %v2082 = vunpack.c.l.b16 %v1363
    %v2083 = vunpack.c.h.b16 %v1363
    %v2084 = vunpack.c.l.b16 %v1364
    %v2085 = vunpack.c.h.b16 %v1364
    %v2086 = vunpack.c.l.b16 %v1365
    %v2087 = vunpack.c.h.b16 %v1365
    %v2088 = vunpack.c.l.b16 %v1366
    %v2089 = vunpack.c.h.b16 %v1366
    %v2090 = vunpack.c.l.b16 %v1367
    %v2091 = vunpack.c.h.b16 %v1367
    %v2092 = vunpack.c.l.b16 %v1368
    %v2093 = vunpack.c.h.b16 %v1368
    %v2094 = vunpack.c.l.b16 %v1369
    %v2095 = vunpack.c.h.b16 %v1369
    %v2096 = vunpack.c.l.b16 %v1370
    %v2097 = vunpack.c.h.b16 %v1370
    %v2098 = vunpack.c.l.b16 %v1371
    %v2099 = vunpack.c.h.b16 %v1371
    %v2100 = vunpack.c.l.b16 %v1372
    %v2101 = vunpack.c.h.b16 %v1372
    %v2102 = vunpack.c.l.b16 %v1373
    %v2103 = vunpack.c.h.b16 %v1373
    %v2104 = vunpack.c.l.b16 %v1374
    %v2105 = vunpack.c.h.b16 %v1374
    %v2106 = vunpack.c.l.b16 %v1375
    %v2107 = vunpack.c.h.b16 %v1375
    %v2108 = vunpack.c.l.b16 %v1376
    %v2109 = vunpack.c.h.b16 %v1376
    %v2110 = vunpack.c.l.b16 %v1377
    %v2111 = vunpack.c.h.b16 %v1377
    %v2112 = vunpack.c.l.b16 %v1378
    %v2113 = vunpack.c.h.b16 %v1378
    %v2114 = vunpack.c.l.b16 %v1379
    %v2115 = vunpack.c.h.b16 %v1379
    %v2116 = vunpack.c.l.b16 %v1380
    %v2117 = vunpack.c.h.b16 %v1380
    %v2118 = vunpack.c.l.b16 %v1381
    %v2119 = vunpack.c.h.b16 %v1381
    %v2120 = vunpack.c.l.b16 %v1382
    %v2121 = vunpack.c.h.b16 %v1382
    %v2122 = vunpack.c.l.b16 %v1383
    %v2123 = vunpack.c.h.b16 %v1383
    %v2124 = vunpack.c.l.b16 %v1384
    %v2125 = vunpack.c.h.b16 %v1384
    %v2126 = vunpack.c.l.b16 %v1385
    %v2127 = vunpack.c.h.b16 %v1385
    %v2128 = vunpack.c.l.b16 %v1386
    %v2129 = vunpack.c.h.b16 %v1386
    %v2130 = vunpack.c.l.b16 %v1387
    %v2131 = vunpack.c.h.b16 %v1387
    %v2132 = vunpack.c.l.b16 %v1388
    %v2133 = vunpack.c.h.b16 %v1388
    %v2134 = vunpack.c.l.b16 %v1389
    %v2135 = vunpack.c.h.b16 %v1389
    %v2136 = vunpack.c.l.b16 %v1390
    %v2137 = vunpack.c.h.b16 %v1390
    %v2138 = vunpack.c.l.b16 %v1391
    %v2139 = vunpack.c.h.b16 %v1391
    %v2140 = vunpack.c.l.b16 %v1392
    %v2141 = vunpack.c.h.b16 %v1392
    %v2142 = vunpack.c.l.b16 %v1393
    %v2143 = vunpack.c.h.b16 %v1393
    %v2144 = vunpack.c.l.b16 %v1394
    %v2145 = vunpack.c.h.b16 %v1394
    %v2146 = vunpack.c.l.b16 %v1395
    %v2147 = vunpack.c.h.b16 %v1395
    %v2148 = vunpack.c.l.b16 %v1396
    %v2149 = vunpack.c.h.b16 %v1396
    %v2150 = vunpack.c.l.b16 %v1397
    %v2151 = vunpack.c.h.b16 %v1397
    %v2152 = vunpack.c.l.b16 %v1398
    %v2153 = vunpack.c.h.b16 %v1398
    %v2154 = vunpack.c.l.b16 %v1399
    %v2155 = vunpack.c.h.b16 %v1399
    %v2156 = vunpack.c.l.b16 %v1400
    %v2157 = vunpack.c.h.b16 %v1400
    %v2158 = vunpack.c.l.b16 %v1401
    %v2159 = vunpack.c.h.b16 %v1401
    %v2160 = vunpack.c.l.b16 %v1402
    %v2161 = vunpack.c.h.b16 %v1402
    %v2162 = vunpack.c.l.b16 %v1403
    %v2163 = vunpack.c.h.b16 %v1403
    %v2164 = vunpack.c.l.b16 %v1404
    %v2165 = vunpack.c.h.b16 %v1404
    %v2166 = vunpack.c.l.b16 %v1405
    %v2167 = vunpack.c.h.b16 %v1405
    %v2168 = vunpack.c.l.b16 %v1406
    %v2169 = vunpack.c.h.b16 %v1406
    %v2170 = vunpack.c.l.b16 %v1407
    %v2171 = vunpack.c.h.b16 %v1407
    %v2172 = vunpack.c.l.b16 %v1408
    %v2173 = vunpack.c.h.b16 %v1408
    %v2174 = vunpack.c.l.b16 %v1409
    %v2175 = vunpack.c.h.b16 %v1409
    %v2176 = vunpack.c.l.b16 %v1410
    %v2177 = vunpack.c.h.b16 %v1410
    %v2178 = vunpack.c.l.b16 %v1411
    %v2179 = vunpack.c.h.b16 %v1411
    %v2180 = vunpack.c.l.b16 %v1412
    %v2181 = vunpack.c.h.b16 %v1412
    %v2182 = vunpack.c.l.b16 %v1413
    %v2183 = vunpack.c.h.b16 %v1413
    %v2184 = vunpack.c.l.b16 %v1414
    %v2185 = vunpack.c.h.b16 %v1414
    %v2186 = vunpack.c.l.b16 %v1415
    %v2187 = vunpack.c.h.b16 %v1415
    %v2188 = vunpack.c.l.b16 %v1416
    %v2189 = vunpack.c.h.b16 %v1416
    %v2190 = vunpack.c.l.b16 %v1417
    %v2191 = vunpack.c.h.b16 %v1417
    %v2192 = vunpack.c.l.b16 %v1418
    %v2193 = vunpack.c.h.b16 %v1418
    %v2194 = vunpack.c.l.b16 %v1419
    %v2195 = vunpack.c.h.b16 %v1419
    %v2196 = vunpack.c.l.b16 %v1420
    %v2197 = vunpack.c.h.b16 %v1420
    %v2198 = vunpack.c.l.b16 %v1421
    %v2199 = vunpack.c.h.b16 %v1421
    %v2200 = vunpack.c.l.b16 %v1422
    %v2201 = vunpack.c.h.b16 %v1422
    %v2202 = vunpack.c.l.b16 %v1423
    %v2203 = vunpack.c.h.b16 %v1423
    %v2204 = vunpack.c.l.b16 %v1424
    %v2205 = vunpack.c.h.b16 %v1424
    %v2206 = vunpack.c.l.b16 %v1425
    %v2207 = vunpack.c.h.b16 %v1425
    %v2208 = vunpack.c.l.b16 %v1426
    %v2209 = vunpack.c.h.b16 %v1426
    %v2210 = vunpack.c.l.b16 %v1427
    %v2211 = vunpack.c.h.b16 %v1427
    %v2212 = vunpack.c.l.b16 %v1428
    %v2213 = vunpack.c.h.b16 %v1428
    %v2214 = vunpack.c.l.b16 %v1429
    %v2215 = vunpack.c.h.b16 %v1429
    %v2216 = vpack.c.b16 %v1712, %v1704
    %v2217 = vpack.c.b16 %v1713, %v1705
    %v2218 = vpack.c.b16 %v1714, %v1706
    %v2219 = vpack.c.b16 %v1715, %v1707
    %v2220 = vpack.c.b16 %v1716, %v1708
    %v2221 = vpack.c.b16 %v1717, %v1709
    %v2222 = vpack.c.b16 %v1718, %v1710
    %v2223 = vpack.c.b16 %v1719, %v1711
    %v2224 = vpack.c.b16 %v1728, %v1720
    %v2225 = vpack.c.b16 %v1729, %v1721
    %v2226 = vpack.c.b16 %v1730, %v1722
    %v2227 = vpack.c.b16 %v1731, %v1723
    %v2228 = vpack.c.b16 %v1732, %v1724
    %v2229 = vpack.c.b16 %v1733, %v1725
    %v2230 = vpack.c.b16 %v1734, %v1726
    %v2231 = vpack.c.b16 %v1735, %v1727
    %v2232 = vpack.c.b16 %v1744, %v1736
    %v2233 = vpack.c.b16 %v1745, %v1737
    %v2234 = vpack.c.b16 %v1746, %v1738
    %v2235 = vpack.c.b16 %v1747, %v1739
    %v2236 = vpack.c.b16 %v1748, %v1740
    %v2237 = vpack.c.b16 %v1749, %v1741
    %v2238 = vpack.c.b16 %v1750, %v1742
    %v2239 = vpack.c.b16 %v1751, %v1743
    %v2240 = vpack.c.b16 %v1760, %v1752
    %v2241 = vpack.c.b16 %v1761, %v1753
    %v2242 = vpack.c.b16 %v1762, %v1754
    %v2243 = vpack.c.b16 %v1763, %v1755
    %v2244 = vpack.c.b16 %v1764, %v1756
    %v2245 = vpack.c.b16 %v1765, %v1757
    %v2246 = vpack.c.b16 %v1766, %v1758
    %v2247 = vpack.c.b16 %v1767, %v1759
    %v2248 = vpack.c.b16 %v1776, %v1768
    %v2249 = vpack.c.b16 %v1777, %v1769
    %v2250 = vpack.c.b16 %v1778, %v1770
    %v2251 = vpack.c.b16 %v1779, %v1771
    %v2252 = vpack.c.b16 %v1780, %v1772
    %v2253 = vpack.c.b16 %v1781, %v1773
    %v2254 = vpack.c.b16 %v1782, %v1774
    %v2255 = vpack.c.b16 %v1783, %v1775
    %v2256 = vpack.c.b16 %v1792, %v1784
    %v2257 = vpack.c.b16 %v1793, %v1785
    %v2258 = vpack.c.b16 %v1794, %v1786
    %v2259 = vpack.c.b16 %v1795, %v1787
    %v2260 = vpack.c.b16 %v1796, %v1788
    %v2261 = vpack.c.b16 %v1797, %v1789
    %v2262 = vpack.c.b16 %v1798, %v1790
    %v2263 = vpack.c.b16 %v1799, %v1791
    %v2264 = vpack.c.b16 %v1808, %v1800
    %v2265 = vpack.c.b16 %v1809, %v1801
    %v2266 = vpack.c.b16 %v1810, %v1802
    %v2267 = vpack.c.b16 %v1811, %v1803
    %v2268 = vpack.c.b16 %v1812, %v1804
    %v2269 = vpack.c.b16 %v1813, %v1805
    %v2270 = vpack.c.b16 %v1814, %v1806
    %v2271 = vpack.c.b16 %v1815, %v1807
    %v2272 = vpack.c.b16 %v1824, %v1816
    %v2273 = vpack.c.b16 %v1825, %v1817
    %v2274 = vpack.c.b16 %v1826, %v1818
    %v2275 = vpack.c.b16 %v1827, %v1819
    %v2276 = vpack.c.b16 %v1828, %v1820
    %v2277 = vpack.c.b16 %v1829, %v1821
    %v2278 = vpack.c.b16 %v1830, %v1822
    %v2279 = vpack.c.b16 %v1831, %v1823
    %v2280 = vpack.c.b16 %v1840, %v1832
    %v2281 = vpack.c.b16 %v1841, %v1833
    %v2282 = vpack.c.b16 %v1842, %v1834
    %v2283 = vpack.c.b16 %v1843, %v1835
    %v2284 = vpack.c.b16 %v1844, %v1836
    %v2285 = vpack.c.b16 %v1845, %v1837
    %v2286 = vpack.c.b16 %v1846, %v1838
    %v2287 = vpack.c.b16 %v1847, %v1839
    %v2288 = vpack.c.b16 %v1856, %v1848
    %v2289 = vpack.c.b16 %v1857, %v1849
    %v2290 = vpack.c.b16 %v1858, %v1850
    %v2291 = vpack.c.b16 %v1859, %v1851
    %v2292 = vpack.c.b16 %v1860, %v1852
    %v2293 = vpack.c.b16 %v1861, %v1853
    %v2294 = vpack.c.b16 %v1862, %v1854
    %v2295 = vpack.c.b16 %v1863, %v1855
    %v2296 = vpack.c.b16 %v1872, %v1864
    %v2297 = vpack.c.b16 %v1873, %v1865
    %v2298 = vpack.c.b16 %v1874, %v1866
    %v2299 = vpack.c.b16 %v1875, %v1867
    %v2300 = vpack.c.b16 %v1876, %v1868
    %v2301 = vpack.c.b16 %v1877, %v1869
    %v2302 = vpack.c.b16 %v1878, %v1870
    %v2303 = vpack.c.b16 %v1879, %v1871
    %v2304 = vpack.c.b16 %v1888, %v1880
    %v2305 = vpack.c.b16 %v1889, %v1881
    %v2306 = vpack.c.b16 %v1890, %v1882
    %v2307 = vpack.c.b16 %v1891, %v1883
    %v2308 = vpack.c.b16 %v1892, %v1884
    %v2309 = vpack.c.b16 %v1893, %v1885
    %v2310 = vpack.c.b16 %v1894, %v1886
    %v2311 = vpack.c.b16 %v1895, %v1887
    %v2312 = vpack.c.b16 %v1904, %v1896
    %v2313 = vpack.c.b16 %v1905, %v1897
    %v2314 = vpack.c.b16 %v1906, %v1898
    %v2315 = vpack.c.b16 %v1907, %v1899
    %v2316 = vpack.c.b16 %v1908, %v1900
    %v2317 = vpack.c.b16 %v1909, %v1901
    %v2318 = vpack.c.b16 %v1910, %v1902
    %v2319 = vpack.c.b16 %v1911, %v1903
    %v2320 = vpack.c.b16 %v1920, %v1912
    %v2321 = vpack.c.b16 %v1921, %v1913
    %v2322 = vpack.c.b16 %v1922, %v1914
    %v2323 = vpack.c.b16 %v1923, %v1915
    %v2324 = vpack.c.b16 %v1924, %v1916
    %v2325 = vpack.c.b16 %v1925, %v1917
    %v2326 = vpack.c.b16 %v1926, %v1918
    %v2327 = vpack.c.b16 %v1927, %v1919
    %v2328 = vpack.c.b16 %v1936, %v1928
    %v2329 = vpack.c.b16 %v1937, %v1929
    %v2330 = vpack.c.b16 %v1938, %v1930
    %v2331 = vpack.c.b16 %v1939, %v1931
    %v2332 = vpack.c.b16 %v1940, %v1932
    %v2333 = vpack.c.b16 %v1941, %v1933
    %v2334 = vpack.c.b16 %v1942, %v1934
    %v2335 = vpack.c.b16 %v1943, %v1935
    %v2336 = vpack.c.b16 %v1952, %v1944
    %v2337 = vpack.c.b16 %v1953, %v1945
    %v2338 = vpack.c.b16 %v1954, %v1946
    %v2339 = vpack.c.b16 %v1955, %v1947
    %v2340 = vpack.c.b16 %v1956, %v1948
    %v2341 = vpack.c.b16 %v1957, %v1949
    %v2342 = vpack.c.b16 %v1958, %v1950
    %v2343 = vpack.c.b16 %v1959, %v1951
    %v2344 = vpack.c.b16 %v1968, %v1960
    %v2345 = vpack.c.b16 %v1969, %v1961
    %v2346 = vpack.c.b16 %v1970, %v1962
    %v2347 = vpack.c.b16 %v1971, %v1963
    %v2348 = vpack.c.b16 %v1972, %v1964
    %v2349 = vpack.c.b16 %v1973, %v1965
    %v2350 = vpack.c.b16 %v1974, %v1966
    %v2351 = vpack.c.b16 %v1975, %v1967
    %v2352 = vpack.c.b16 %v1984, %v1976
    %v2353 = vpack.c.b16 %v1985, %v1977
    %v2354 = vpack.c.b16 %v1986, %v1978
    %v2355 = vpack.c.b16 %v1987, %v1979
    %v2356 = vpack.c.b16 %v1988, %v1980
    %v2357 = vpack.c.b16 %v1989, %v1981
    %v2358 = vpack.c.b16 %v1990, %v1982
    %v2359 = vpack.c.b16 %v1991, %v1983
    %v2360 = vpack.c.b16 %v2000, %v1992
    %v2361 = vpack.c.b16 %v2001, %v1993
    %v2362 = vpack.c.b16 %v2002, %v1994
    %v2363 = vpack.c.b16 %v2003, %v1995
    %v2364 = vpack.c.b16 %v2004, %v1996
    %v2365 = vpack.c.b16 %v2005, %v1997
    %v2366 = vpack.c.b16 %v2006, %v1998
    %v2367 = vpack.c.b16 %v2007, %v1999
    %v2368 = vpack.c.b16 %v2016, %v2008
    %v2369 = vpack.c.b16 %v2017, %v2009
    %v2370 = vpack.c.b16 %v2018, %v2010
    %v2371 = vpack.c.b16 %v2019, %v2011
    %v2372 = vpack.c.b16 %v2020, %v2012
    %v2373 = vpack.c.b16 %v2021, %v2013
    %v2374 = vpack.c.b16 %v2022, %v2014
    %v2375 = vpack.c.b16 %v2023, %v2015
    %v2376 = vpack.c.b16 %v2032, %v2024
    %v2377 = vpack.c.b16 %v2033, %v2025
    %v2378 = vpack.c.b16 %v2034, %v2026
    %v2379 = vpack.c.b16 %v2035, %v2027
    %v2380 = vpack.c.b16 %v2036, %v2028
    %v2381 = vpack.c.b16 %v2037, %v2029
    %v2382 = vpack.c.b16 %v2038, %v2030
    %v2383 = vpack.c.b16 %v2039, %v2031
    %v2384 = vpack.c.b16 %v2048, %v2040
    %v2385 = vpack.c.b16 %v2049, %v2041
    %v2386 = vpack.c.b16 %v2050, %v2042
    %v2387 = vpack.c.b16 %v2051, %v2043
    %v2388 = vpack.c.b16 %v2052, %v2044
    %v2389 = vpack.c.b16 %v2053, %v2045
    %v2390 = vpack.c.b16 %v2054, %v2046
    %v2391 = vpack.c.b16 %v2055, %v2047
    %v2392 = vpack.c.b16 %v2064, %v2056
    %v2393 = vpack.c.b16 %v2065, %v2057
    %v2394 = vpack.c.b16 %v2066, %v2058
    %v2395 = vpack.c.b16 %v2067, %v2059
    %v2396 = vpack.c.b16 %v2068, %v2060
    %v2397 = vpack.c.b16 %v2069, %v2061
    %v2398 = vpack.c.b16 %v2070, %v2062
    %v2399 = vpack.c.b16 %v2071, %v2063
    %v2400 = vpack.c.b16 %v2080, %v2072
    %v2401 = vpack.c.b16 %v2081, %v2073
    %v2402 = vpack.c.b16 %v2082, %v2074
    %v2403 = vpack.c.b16 %v2083, %v2075
    %v2404 = vpack.c.b16 %v2084, %v2076
    %v2405 = vpack.c.b16 %v2085, %v2077
    %v2406 = vpack.c.b16 %v2086, %v2078
    %v2407 = vpack.c.b16 %v2087, %v2079
    %v2408 = vpack.c.b16 %v2096, %v2088
    %v2409 = vpack.c.b16 %v2097, %v2089
    %v2410 = vpack.c.b16 %v2098, %v2090
    %v2411 = vpack.c.b16 %v2099, %v2091
    %v2412 = vpack.c.b16 %v2100, %v2092
    %v2413 = vpack.c.b16 %v2101, %v2093
    %v2414 = vpack.c.b16 %v2102, %v2094
    %v2415 = vpack.c.b16 %v2103, %v2095
    %v2416 = vpack.c.b16 %v2112, %v2104
    %v2417 = vpack.c.b16 %v2113, %v2105
    %v2418 = vpack.c.b16 %v2114, %v2106
    %v2419 = vpack.c.b16 %v2115, %v2107
    %v2420 = vpack.c.b16 %v2116, %v2108
    %v2421 = vpack.c.b16 %v2117, %v2109
    %v2422 = vpack.c.b16 %v2118, %v2110
    %v2423 = vpack.c.b16 %v2119, %v2111
    %v2424 = vpack.c.b16 %v2128, %v2120
    %v2425 = vpack.c.b16 %v2129, %v2121
    %v2426 = vpack.c.b16 %v2130, %v2122
    %v2427 = vpack.c.b16 %v2131, %v2123
    %v2428 = vpack.c.b16 %v2132, %v2124
    %v2429 = vpack.c.b16 %v2133, %v2125
    %v2430 = vpack.c.b16 %v2134, %v2126
    %v2431 = vpack.c.b16 %v2135, %v2127
    %v2432 = vpack.c.b16 %v2144, %v2136
    %v2433 = vpack.c.b16 %v2145, %v2137
    %v2434 = vpack.c.b16 %v2146, %v2138
    %v2435 = vpack.c.b16 %v2147, %v2139
    %v2436 = vpack.c.b16 %v2148, %v2140
    %v2437 = vpack.c.b16 %v2149, %v2141
    %v2438 = vpack.c.b16 %v2150, %v2142
    %v2439 = vpack.c.b16 %v2151, %v2143
    %v2440 = vpack.c.b16 %v2160, %v2152
    %v2441 = vpack.c.b16 %v2161, %v2153
    %v2442 = vpack.c.b16 %v2162, %v2154
    %v2443 = vpack.c.b16 %v2163, %v2155
    %v2444 = vpack.c.b16 %v2164, %v2156
    %v2445 = vpack.c.b16 %v2165, %v2157
    %v2446 = vpack.c.b16 %v2166, %v2158
    %v2447 = vpack.c.b16 %v2167, %v2159
    %v2448 = vpack.c.b16 %v2176, %v2168
    %v2449 = vpack.c.b16 %v2177, %v2169
    %v2450 = vpack.c.b16 %v2178, %v2170
    %v2451 = vpack.c.b16 %v2179, %v2171
    %v2452 = vpack.c.b16 %v2180, %v2172
    %v2453 = vpack.c.b16 %v2181, %v2173
    %v2454 = vpack.c.b16 %v2182, %v2174
    %v2455 = vpack.c.b16 %v2183, %v2175
    %v2456 = vpack.c.b16 %v2192, %v2184
    %v2457 = vpack.c.b16 %v2193, %v2185
    %v2458 = vpack.c.b16 %v2194, %v2186
    %v2459 = vpack.c.b16 %v2195, %v2187
    %v2460 = vpack.c.b16 %v2196, %v2188
    %v2461 = vpack.c.b16 %v2197, %v2189
    %v2462 = vpack.c.b16 %v2198, %v2190
    %v2463 = vpack.c.b16 %v2199, %v2191
    %v2464 = vpack.c.b16 %v2208, %v2200
    %v2465 = vpack.c.b16 %v2209, %v2201
    %v2466 = vpack.c.b16 %v2210, %v2202
    %v2467 = vpack.c.b16 %v2211, %v2203
    %v2468 = vpack.c.b16 %v2212, %v2204
    %v2469 = vpack.c.b16 %v2213, %v2205
    %v2470 = vpack.c.b16 %v2214, %v2206
    %v2471 = vpack.c.b16 %v2215, %v2207
    %2728 = vmatpush.bf16.msra.mxu0 %v2272
    %2729 = vmatpush.bf16.msra.mxu0 %v2264
    %2730 = vmatpush.bf16.msra.mxu0 %v2256
    %2731 = vmatpush.bf16.msra.mxu0 %v2248
    %2732 = vmatpush.bf16.msra.mxu0 %v2240
    %2733 = vmatpush.bf16.msra.mxu0 %v2232
    %2734 = vmatpush.bf16.msra.mxu0 %v2224
    %2735 = vmatpush.bf16.msra.mxu0 %v2216
    %2736 = vmatmul.bf16.gmra.mxu0 %v1170
    %v2737 = vpop.f32.mrf.mxu0
    %v2738 = vadd.f32 %v1432, %v2737
    %v2739 = vpop.f32.mrf.mxu0
    %2740 = vdwg.mxu0
    %2741 = vmatpush.bf16.msra.mxu0 %v2336
    %2742 = vmatpush.bf16.msra.mxu0 %v2328
    %2743 = vmatpush.bf16.msra.mxu0 %v2320
    %2744 = vmatpush.bf16.msra.mxu0 %v2312
    %2745 = vmatpush.bf16.msra.mxu0 %v2304
    %2746 = vmatpush.bf16.msra.mxu0 %v2296
    %2747 = vmatpush.bf16.msra.mxu0 %v2288
    %2748 = vmatpush.bf16.msra.mxu0 %v2280
    %2749 = vmatmul.bf16.gmra.mxu0 %v1171
    %v2750 = vpop.f32.mrf.mxu0
    %v2751 = vadd.f32 %v2738, %v2750
    %v2752 = vpop.f32.mrf.mxu0
    %2753 = vdwg.mxu0
    %2754 = vmatpush.bf16.msra.mxu0 %v2400
    %2755 = vmatpush.bf16.msra.mxu0 %v2392
    %2756 = vmatpush.bf16.msra.mxu0 %v2384
    %2757 = vmatpush.bf16.msra.mxu0 %v2376
    %2758 = vmatpush.bf16.msra.mxu0 %v2368
    %2759 = vmatpush.bf16.msra.mxu0 %v2360
    %2760 = vmatpush.bf16.msra.mxu0 %v2352
    %2761 = vmatpush.bf16.msra.mxu0 %v2344
    %2762 = vmatmul.bf16.gmra.mxu0 %v1172
    %v2763 = vpop.f32.mrf.mxu0
    %v2764 = vadd.f32 %v2751, %v2763
    %v2765 = vpop.f32.mrf.mxu0
    %2766 = vdwg.mxu0
    %2767 = vmatpush.bf16.msra.mxu0 %v2464
    %2768 = vmatpush.bf16.msra.mxu0 %v2456
    %2769 = vmatpush.bf16.msra.mxu0 %v2448
    %2770 = vmatpush.bf16.msra.mxu0 %v2440
    %2771 = vmatpush.bf16.msra.mxu0 %v2432
    %2772 = vmatpush.bf16.msra.mxu0 %v2424
    %2773 = vmatpush.bf16.msra.mxu0 %v2416
    %2774 = vmatpush.bf16.msra.mxu0 %v2408
    %2775 = vmatmul.bf16.gmra.mxu0 %v1173
    %v2776 = vpop.f32.mrf.mxu0
    %v2777 = vadd.f32 %v2764, %v2776
    %v2778 = vpop.f32.mrf.mxu0
    %2779 = vdwg.mxu0
    %2780 = vmatpush.bf16.msra.mxu0 %v2273
    %2781 = vmatpush.bf16.msra.mxu0 %v2265
    %2782 = vmatpush.bf16.msra.mxu0 %v2257
    %2783 = vmatpush.bf16.msra.mxu0 %v2249
    %2784 = vmatpush.bf16.msra.mxu0 %v2241
    %2785 = vmatpush.bf16.msra.mxu0 %v2233
    %2786 = vmatpush.bf16.msra.mxu0 %v2225
    %2787 = vmatpush.bf16.msra.mxu0 %v2217
    %2788 = vmatmul.bf16.gmra.mxu0 %v1170
    %v2789 = vpop.f32.mrf.mxu0
    %v2790 = vadd.f32 %v1433, %v2789
    %v2791 = vpop.f32.mrf.mxu0
    %2792 = vdwg.mxu0
    %2793 = vmatpush.bf16.msra.mxu0 %v2337
    %2794 = vmatpush.bf16.msra.mxu0 %v2329
    %2795 = vmatpush.bf16.msra.mxu0 %v2321
    %2796 = vmatpush.bf16.msra.mxu0 %v2313
    %2797 = vmatpush.bf16.msra.mxu0 %v2305
    %2798 = vmatpush.bf16.msra.mxu0 %v2297
    %2799 = vmatpush.bf16.msra.mxu0 %v2289
    %2800 = vmatpush.bf16.msra.mxu0 %v2281
    %2801 = vmatmul.bf16.gmra.mxu0 %v1171
    %v2802 = vpop.f32.mrf.mxu0
    %v2803 = vadd.f32 %v2790, %v2802
    %v2804 = vpop.f32.mrf.mxu0
    %2805 = vdwg.mxu0
    %2806 = vmatpush.bf16.msra.mxu0 %v2401
    %2807 = vmatpush.bf16.msra.mxu0 %v2393
    %2808 = vmatpush.bf16.msra.mxu0 %v2385
    %2809 = vmatpush.bf16.msra.mxu0 %v2377
    %2810 = vmatpush.bf16.msra.mxu0 %v2369
    %2811 = vmatpush.bf16.msra.mxu0 %v2361
    %2812 = vmatpush.bf16.msra.mxu0 %v2353
    %2813 = vmatpush.bf16.msra.mxu0 %v2345
    %2814 = vmatmul.bf16.gmra.mxu0 %v1172
    %v2815 = vpop.f32.mrf.mxu0
    %v2816 = vadd.f32 %v2803, %v2815
    %v2817 = vpop.f32.mrf.mxu0
    %2818 = vdwg.mxu0
    %2819 = vmatpush.bf16.msra.mxu0 %v2465
    %2820 = vmatpush.bf16.msra.mxu0 %v2457
    %2821 = vmatpush.bf16.msra.mxu0 %v2449
    %2822 = vmatpush.bf16.msra.mxu0 %v2441
    %2823 = vmatpush.bf16.msra.mxu0 %v2433
    %2824 = vmatpush.bf16.msra.mxu0 %v2425
    %2825 = vmatpush.bf16.msra.mxu0 %v2417
    %2826 = vmatpush.bf16.msra.mxu0 %v2409
    %2827 = vmatmul.bf16.gmra.mxu0 %v1173
    %v2828 = vpop.f32.mrf.mxu0
    %v2829 = vadd.f32 %v2816, %v2828
    %v2830 = vpop.f32.mrf.mxu0
    %2831 = vdwg.mxu0
    %2832 = vmatpush.bf16.msra.mxu0 %v2274
    %2833 = vmatpush.bf16.msra.mxu0 %v2266
    %2834 = vmatpush.bf16.msra.mxu0 %v2258
    %2835 = vmatpush.bf16.msra.mxu0 %v2250
    %2836 = vmatpush.bf16.msra.mxu0 %v2242
    %2837 = vmatpush.bf16.msra.mxu0 %v2234
    %2838 = vmatpush.bf16.msra.mxu0 %v2226
    %2839 = vmatpush.bf16.msra.mxu0 %v2218
    %2840 = vmatmul.bf16.gmra.mxu0 %v1170
    %v2841 = vpop.f32.mrf.mxu0
    %v2842 = vadd.f32 %v1434, %v2841
    %v2843 = vpop.f32.mrf.mxu0
    %2844 = vdwg.mxu0
    %2845 = vmatpush.bf16.msra.mxu0 %v2338
    %2846 = vmatpush.bf16.msra.mxu0 %v2330
    %2847 = vmatpush.bf16.msra.mxu0 %v2322
    %2848 = vmatpush.bf16.msra.mxu0 %v2314
    %2849 = vmatpush.bf16.msra.mxu0 %v2306
    %2850 = vmatpush.bf16.msra.mxu0 %v2298
    %2851 = vmatpush.bf16.msra.mxu0 %v2290
    %2852 = vmatpush.bf16.msra.mxu0 %v2282
    %2853 = vmatmul.bf16.gmra.mxu0 %v1171
    %v2854 = vpop.f32.mrf.mxu0
    %v2855 = vadd.f32 %v2842, %v2854
    %v2856 = vpop.f32.mrf.mxu0
    %2857 = vdwg.mxu0
    %2858 = vmatpush.bf16.msra.mxu0 %v2402
    %2859 = vmatpush.bf16.msra.mxu0 %v2394
    %2860 = vmatpush.bf16.msra.mxu0 %v2386
    %2861 = vmatpush.bf16.msra.mxu0 %v2378
    %2862 = vmatpush.bf16.msra.mxu0 %v2370
    %2863 = vmatpush.bf16.msra.mxu0 %v2362
    %2864 = vmatpush.bf16.msra.mxu0 %v2354
    %2865 = vmatpush.bf16.msra.mxu0 %v2346
    %2866 = vmatmul.bf16.gmra.mxu0 %v1172
    %v2867 = vpop.f32.mrf.mxu0
    %v2868 = vadd.f32 %v2855, %v2867
    %v2869 = vpop.f32.mrf.mxu0
    %2870 = vdwg.mxu0
    %2871 = vmatpush.bf16.msra.mxu0 %v2466
    %2872 = vmatpush.bf16.msra.mxu0 %v2458
    %2873 = vmatpush.bf16.msra.mxu0 %v2450
    %2874 = vmatpush.bf16.msra.mxu0 %v2442
    %2875 = vmatpush.bf16.msra.mxu0 %v2434
    %2876 = vmatpush.bf16.msra.mxu0 %v2426
    %2877 = vmatpush.bf16.msra.mxu0 %v2418
    %2878 = vmatpush.bf16.msra.mxu0 %v2410
    %2879 = vmatmul.bf16.gmra.mxu0 %v1173
    %v2880 = vpop.f32.mrf.mxu0
    %v2881 = vadd.f32 %v2868, %v2880
    %v2882 = vpop.f32.mrf.mxu0
    %2883 = vdwg.mxu0
    %2884 = vmatpush.bf16.msra.mxu0 %v2275
    %2885 = vmatpush.bf16.msra.mxu0 %v2267
    %2886 = vmatpush.bf16.msra.mxu0 %v2259
    %2887 = vmatpush.bf16.msra.mxu0 %v2251
    %2888 = vmatpush.bf16.msra.mxu0 %v2243
    %2889 = vmatpush.bf16.msra.mxu0 %v2235
    %2890 = vmatpush.bf16.msra.mxu0 %v2227
    %2891 = vmatpush.bf16.msra.mxu0 %v2219
    %2892 = vmatmul.bf16.gmra.mxu0 %v1170
    %v2893 = vpop.f32.mrf.mxu0
    %v2894 = vadd.f32 %v1435, %v2893
    %v2895 = vpop.f32.mrf.mxu0
    %2896 = vdwg.mxu0
    %2897 = vmatpush.bf16.msra.mxu0 %v2339
    %2898 = vmatpush.bf16.msra.mxu0 %v2331
    %2899 = vmatpush.bf16.msra.mxu0 %v2323
    %2900 = vmatpush.bf16.msra.mxu0 %v2315
    %2901 = vmatpush.bf16.msra.mxu0 %v2307
    %2902 = vmatpush.bf16.msra.mxu0 %v2299
    %2903 = vmatpush.bf16.msra.mxu0 %v2291
    %2904 = vmatpush.bf16.msra.mxu0 %v2283
    %2905 = vmatmul.bf16.gmra.mxu0 %v1171
    %v2906 = vpop.f32.mrf.mxu0
    %v2907 = vadd.f32 %v2894, %v2906
    %v2908 = vpop.f32.mrf.mxu0
    %2909 = vdwg.mxu0
    %2910 = vmatpush.bf16.msra.mxu0 %v2403
    %2911 = vmatpush.bf16.msra.mxu0 %v2395
    %2912 = vmatpush.bf16.msra.mxu0 %v2387
    %2913 = vmatpush.bf16.msra.mxu0 %v2379
    %2914 = vmatpush.bf16.msra.mxu0 %v2371
    %2915 = vmatpush.bf16.msra.mxu0 %v2363
    %2916 = vmatpush.bf16.msra.mxu0 %v2355
    %2917 = vmatpush.bf16.msra.mxu0 %v2347
    %2918 = vmatmul.bf16.gmra.mxu0 %v1172
    %v2919 = vpop.f32.mrf.mxu0
    %v2920 = vadd.f32 %v2907, %v2919
    %v2921 = vpop.f32.mrf.mxu0
    %2922 = vdwg.mxu0
    %2923 = vmatpush.bf16.msra.mxu0 %v2467
    %2924 = vmatpush.bf16.msra.mxu0 %v2459
    %2925 = vmatpush.bf16.msra.mxu0 %v2451
    %2926 = vmatpush.bf16.msra.mxu0 %v2443
    %2927 = vmatpush.bf16.msra.mxu0 %v2435
    %2928 = vmatpush.bf16.msra.mxu0 %v2427
    %2929 = vmatpush.bf16.msra.mxu0 %v2419
    %2930 = vmatpush.bf16.msra.mxu0 %v2411
    %2931 = vmatmul.bf16.gmra.mxu0 %v1173
    %v2932 = vpop.f32.mrf.mxu0
    %v2933 = vadd.f32 %v2920, %v2932
    %v2934 = vpop.f32.mrf.mxu0
    %2935 = vdwg.mxu0
    %2936 = vmatpush.bf16.msra.mxu0 %v2276
    %2937 = vmatpush.bf16.msra.mxu0 %v2268
    %2938 = vmatpush.bf16.msra.mxu0 %v2260
    %2939 = vmatpush.bf16.msra.mxu0 %v2252
    %2940 = vmatpush.bf16.msra.mxu0 %v2244
    %2941 = vmatpush.bf16.msra.mxu0 %v2236
    %2942 = vmatpush.bf16.msra.mxu0 %v2228
    %2943 = vmatpush.bf16.msra.mxu0 %v2220
    %2944 = vmatmul.bf16.gmra.mxu0 %v1170
    %v2945 = vpop.f32.mrf.mxu0
    %v2946 = vadd.f32 %v1436, %v2945
    %v2947 = vpop.f32.mrf.mxu0
    %2948 = vdwg.mxu0
    %2949 = vmatpush.bf16.msra.mxu0 %v2340
    %2950 = vmatpush.bf16.msra.mxu0 %v2332
    %2951 = vmatpush.bf16.msra.mxu0 %v2324
    %2952 = vmatpush.bf16.msra.mxu0 %v2316
    %2953 = vmatpush.bf16.msra.mxu0 %v2308
    %2954 = vmatpush.bf16.msra.mxu0 %v2300
    %2955 = vmatpush.bf16.msra.mxu0 %v2292
    %2956 = vmatpush.bf16.msra.mxu0 %v2284
    %2957 = vmatmul.bf16.gmra.mxu0 %v1171
    %v2958 = vpop.f32.mrf.mxu0
    %v2959 = vadd.f32 %v2946, %v2958
    %v2960 = vpop.f32.mrf.mxu0
    %2961 = vdwg.mxu0
    %2962 = vmatpush.bf16.msra.mxu0 %v2404
    %2963 = vmatpush.bf16.msra.mxu0 %v2396
    %2964 = vmatpush.bf16.msra.mxu0 %v2388
    %2965 = vmatpush.bf16.msra.mxu0 %v2380
    %2966 = vmatpush.bf16.msra.mxu0 %v2372
    %2967 = vmatpush.bf16.msra.mxu0 %v2364
    %2968 = vmatpush.bf16.msra.mxu0 %v2356
    %2969 = vmatpush.bf16.msra.mxu0 %v2348
    %2970 = vmatmul.bf16.gmra.mxu0 %v1172
    %v2971 = vpop.f32.mrf.mxu0
    %v2972 = vadd.f32 %v2959, %v2971
    %v2973 = vpop.f32.mrf.mxu0
    %2974 = vdwg.mxu0
    %2975 = vmatpush.bf16.msra.mxu0 %v2468
    %2976 = vmatpush.bf16.msra.mxu0 %v2460
    %2977 = vmatpush.bf16.msra.mxu0 %v2452
    %2978 = vmatpush.bf16.msra.mxu0 %v2444
    %2979 = vmatpush.bf16.msra.mxu0 %v2436
    %2980 = vmatpush.bf16.msra.mxu0 %v2428
    %2981 = vmatpush.bf16.msra.mxu0 %v2420
    %2982 = vmatpush.bf16.msra.mxu0 %v2412
    %2983 = vmatmul.bf16.gmra.mxu0 %v1173
    %v2984 = vpop.f32.mrf.mxu0
    %v2985 = vadd.f32 %v2972, %v2984
    %v2986 = vpop.f32.mrf.mxu0
    %2987 = vdwg.mxu0
    %2988 = vmatpush.bf16.msra.mxu0 %v2277
    %2989 = vmatpush.bf16.msra.mxu0 %v2269
    %2990 = vmatpush.bf16.msra.mxu0 %v2261
    %2991 = vmatpush.bf16.msra.mxu0 %v2253
    %2992 = vmatpush.bf16.msra.mxu0 %v2245
    %2993 = vmatpush.bf16.msra.mxu0 %v2237
    %2994 = vmatpush.bf16.msra.mxu0 %v2229
    %2995 = vmatpush.bf16.msra.mxu0 %v2221
    %2996 = vmatmul.bf16.gmra.mxu0 %v1170
    %v2997 = vpop.f32.mrf.mxu0
    %v2998 = vadd.f32 %v1437, %v2997
    %v2999 = vpop.f32.mrf.mxu0
    %3000 = vdwg.mxu0
    %3001 = vmatpush.bf16.msra.mxu0 %v2341
    %3002 = vmatpush.bf16.msra.mxu0 %v2333
    %3003 = vmatpush.bf16.msra.mxu0 %v2325
    %3004 = vmatpush.bf16.msra.mxu0 %v2317
    %3005 = vmatpush.bf16.msra.mxu0 %v2309
    %3006 = vmatpush.bf16.msra.mxu0 %v2301
    %3007 = vmatpush.bf16.msra.mxu0 %v2293
    %3008 = vmatpush.bf16.msra.mxu0 %v2285
    %3009 = vmatmul.bf16.gmra.mxu0 %v1171
    %v3010 = vpop.f32.mrf.mxu0
    %v3011 = vadd.f32 %v2998, %v3010
    %v3012 = vpop.f32.mrf.mxu0
    %3013 = vdwg.mxu0
    %3014 = vmatpush.bf16.msra.mxu0 %v2405
    %3015 = vmatpush.bf16.msra.mxu0 %v2397
    %3016 = vmatpush.bf16.msra.mxu0 %v2389
    %3017 = vmatpush.bf16.msra.mxu0 %v2381
    %3018 = vmatpush.bf16.msra.mxu0 %v2373
    %3019 = vmatpush.bf16.msra.mxu0 %v2365
    %3020 = vmatpush.bf16.msra.mxu0 %v2357
    %3021 = vmatpush.bf16.msra.mxu0 %v2349
    %3022 = vmatmul.bf16.gmra.mxu0 %v1172
    %v3023 = vpop.f32.mrf.mxu0
    %v3024 = vadd.f32 %v3011, %v3023
    %v3025 = vpop.f32.mrf.mxu0
    %3026 = vdwg.mxu0
    %3027 = vmatpush.bf16.msra.mxu0 %v2469
    %3028 = vmatpush.bf16.msra.mxu0 %v2461
    %3029 = vmatpush.bf16.msra.mxu0 %v2453
    %3030 = vmatpush.bf16.msra.mxu0 %v2445
    %3031 = vmatpush.bf16.msra.mxu0 %v2437
    %3032 = vmatpush.bf16.msra.mxu0 %v2429
    %3033 = vmatpush.bf16.msra.mxu0 %v2421
    %3034 = vmatpush.bf16.msra.mxu0 %v2413
    %3035 = vmatmul.bf16.gmra.mxu0 %v1173
    %v3036 = vpop.f32.mrf.mxu0
    %v3037 = vadd.f32 %v3024, %v3036
    %v3038 = vpop.f32.mrf.mxu0
    %3039 = vdwg.mxu0
    %3040 = vmatpush.bf16.msra.mxu0 %v2278
    %3041 = vmatpush.bf16.msra.mxu0 %v2270
    %3042 = vmatpush.bf16.msra.mxu0 %v2262
    %3043 = vmatpush.bf16.msra.mxu0 %v2254
    %3044 = vmatpush.bf16.msra.mxu0 %v2246
    %3045 = vmatpush.bf16.msra.mxu0 %v2238
    %3046 = vmatpush.bf16.msra.mxu0 %v2230
    %3047 = vmatpush.bf16.msra.mxu0 %v2222
    %3048 = vmatmul.bf16.gmra.mxu0 %v1170
    %v3049 = vpop.f32.mrf.mxu0
    %v3050 = vadd.f32 %v1438, %v3049
    %v3051 = vpop.f32.mrf.mxu0
    %3052 = vdwg.mxu0
    %3053 = vmatpush.bf16.msra.mxu0 %v2342
    %3054 = vmatpush.bf16.msra.mxu0 %v2334
    %3055 = vmatpush.bf16.msra.mxu0 %v2326
    %3056 = vmatpush.bf16.msra.mxu0 %v2318
    %3057 = vmatpush.bf16.msra.mxu0 %v2310
    %3058 = vmatpush.bf16.msra.mxu0 %v2302
    %3059 = vmatpush.bf16.msra.mxu0 %v2294
    %3060 = vmatpush.bf16.msra.mxu0 %v2286
    %3061 = vmatmul.bf16.gmra.mxu0 %v1171
    %v3062 = vpop.f32.mrf.mxu0
    %v3063 = vadd.f32 %v3050, %v3062
    %v3064 = vpop.f32.mrf.mxu0
    %3065 = vdwg.mxu0
    %3066 = vmatpush.bf16.msra.mxu0 %v2406
    %3067 = vmatpush.bf16.msra.mxu0 %v2398
    %3068 = vmatpush.bf16.msra.mxu0 %v2390
    %3069 = vmatpush.bf16.msra.mxu0 %v2382
    %3070 = vmatpush.bf16.msra.mxu0 %v2374
    %3071 = vmatpush.bf16.msra.mxu0 %v2366
    %3072 = vmatpush.bf16.msra.mxu0 %v2358
    %3073 = vmatpush.bf16.msra.mxu0 %v2350
    %3074 = vmatmul.bf16.gmra.mxu0 %v1172
    %v3075 = vpop.f32.mrf.mxu0
    %v3076 = vadd.f32 %v3063, %v3075
    %v3077 = vpop.f32.mrf.mxu0
    %3078 = vdwg.mxu0
    %3079 = vmatpush.bf16.msra.mxu0 %v2470
    %3080 = vmatpush.bf16.msra.mxu0 %v2462
    %3081 = vmatpush.bf16.msra.mxu0 %v2454
    %3082 = vmatpush.bf16.msra.mxu0 %v2446
    %3083 = vmatpush.bf16.msra.mxu0 %v2438
    %3084 = vmatpush.bf16.msra.mxu0 %v2430
    %3085 = vmatpush.bf16.msra.mxu0 %v2422
    %3086 = vmatpush.bf16.msra.mxu0 %v2414
    %3087 = vmatmul.bf16.gmra.mxu0 %v1173
    %v3088 = vpop.f32.mrf.mxu0
    %v3089 = vadd.f32 %v3076, %v3088
    %v3090 = vpop.f32.mrf.mxu0
    %3091 = vdwg.mxu0
    %3092 = vmatpush.bf16.msra.mxu0 %v2279
    %3093 = vmatpush.bf16.msra.mxu0 %v2271
    %3094 = vmatpush.bf16.msra.mxu0 %v2263
    %3095 = vmatpush.bf16.msra.mxu0 %v2255
    %3096 = vmatpush.bf16.msra.mxu0 %v2247
    %3097 = vmatpush.bf16.msra.mxu0 %v2239
    %3098 = vmatpush.bf16.msra.mxu0 %v2231
    %3099 = vmatpush.bf16.msra.mxu0 %v2223
    %3100 = vmatmul.bf16.gmra.mxu0 %v1170
    %v3101 = vpop.f32.mrf.mxu0
    %v3102 = vadd.f32 %v1439, %v3101
    %v3103 = vpop.f32.mrf.mxu0
    %3104 = vdwg.mxu0
    %3105 = vmatpush.bf16.msra.mxu0 %v2343
    %3106 = vmatpush.bf16.msra.mxu0 %v2335
    %3107 = vmatpush.bf16.msra.mxu0 %v2327
    %3108 = vmatpush.bf16.msra.mxu0 %v2319
    %3109 = vmatpush.bf16.msra.mxu0 %v2311
    %3110 = vmatpush.bf16.msra.mxu0 %v2303
    %3111 = vmatpush.bf16.msra.mxu0 %v2295
    %3112 = vmatpush.bf16.msra.mxu0 %v2287
    %3113 = vmatmul.bf16.gmra.mxu0 %v1171
    %v3114 = vpop.f32.mrf.mxu0
    %v3115 = vadd.f32 %v3102, %v3114
    %v3116 = vpop.f32.mrf.mxu0
    %3117 = vdwg.mxu0
    %3118 = vmatpush.bf16.msra.mxu0 %v2407
    %3119 = vmatpush.bf16.msra.mxu0 %v2399
    %3120 = vmatpush.bf16.msra.mxu0 %v2391
    %3121 = vmatpush.bf16.msra.mxu0 %v2383
    %3122 = vmatpush.bf16.msra.mxu0 %v2375
    %3123 = vmatpush.bf16.msra.mxu0 %v2367
    %3124 = vmatpush.bf16.msra.mxu0 %v2359
    %3125 = vmatpush.bf16.msra.mxu0 %v2351
    %3126 = vmatmul.bf16.gmra.mxu0 %v1172
    %v3127 = vpop.f32.mrf.mxu0
    %v3128 = vadd.f32 %v3115, %v3127
    %v3129 = vpop.f32.mrf.mxu0
    %3130 = vdwg.mxu0
    %3131 = vmatpush.bf16.msra.mxu0 %v2471
    %3132 = vmatpush.bf16.msra.mxu0 %v2463
    %3133 = vmatpush.bf16.msra.mxu0 %v2455
    %3134 = vmatpush.bf16.msra.mxu0 %v2447
    %3135 = vmatpush.bf16.msra.mxu0 %v2439
    %3136 = vmatpush.bf16.msra.mxu0 %v2431
    %3137 = vmatpush.bf16.msra.mxu0 %v2423
    %3138 = vmatpush.bf16.msra.mxu0 %v2415
    %3139 = vmatmul.bf16.gmra.mxu0 %v1173
    %v3140 = vpop.f32.mrf.mxu0
    %v3141 = vadd.f32 %v3128, %v3140
    %v3142 = vpop.f32.mrf.mxu0
    %3143 = vdwg.mxu0
    %v3144 = vrot.slane %v2777, 4
    %v3145 = vadd.f32 %v2777, %v3144
    %v3146 = vrot.slane %v3145, 2
    %v3147 = vadd.f32 %v3145, %v3146
    %v3148 = vrot.slane %v3147, 1
    %v3149 = vadd.f32 %v3147, %v3148
    %v3150 = vrot.slane %v2829, 4
    %v3151 = vadd.f32 %v2829, %v3150
    %v3152 = vrot.slane %v3151, 2
    %v3153 = vadd.f32 %v3151, %v3152
    %v3154 = vrot.slane %v3153, 1
    %v3155 = vadd.f32 %v3153, %v3154
    %v3156 = vrot.slane %v2881, 4
    %v3157 = vadd.f32 %v2881, %v3156
    %v3158 = vrot.slane %v3157, 2
    %v3159 = vadd.f32 %v3157, %v3158
    %v3160 = vrot.slane %v3159, 1
    %v3161 = vadd.f32 %v3159, %v3160
    %v3162 = vrot.slane %v2933, 4
    %v3163 = vadd.f32 %v2933, %v3162
    %v3164 = vrot.slane %v3163, 2
    %v3165 = vadd.f32 %v3163, %v3164
    %v3166 = vrot.slane %v3165, 1
    %v3167 = vadd.f32 %v3165, %v3166
    %v3168 = vrot.slane %v2985, 4
    %v3169 = vadd.f32 %v2985, %v3168
    %v3170 = vrot.slane %v3169, 2
    %v3171 = vadd.f32 %v3169, %v3170
    %v3172 = vrot.slane %v3171, 1
    %v3173 = vadd.f32 %v3171, %v3172
    %v3174 = vrot.slane %v3037, 4
    %v3175 = vadd.f32 %v3037, %v3174
    %v3176 = vrot.slane %v3175, 2
    %v3177 = vadd.f32 %v3175, %v3176
    %v3178 = vrot.slane %v3177, 1
    %v3179 = vadd.f32 %v3177, %v3178
    %v3180 = vrot.slane %v3089, 4
    %v3181 = vadd.f32 %v3089, %v3180
    %v3182 = vrot.slane %v3181, 2
    %v3183 = vadd.f32 %v3181, %v3182
    %v3184 = vrot.slane %v3183, 1
    %v3185 = vadd.f32 %v3183, %v3184
    %v3186 = vrot.slane %v3141, 4
    %v3187 = vadd.f32 %v3141, %v3186
    %v3188 = vrot.slane %v3187, 2
    %v3189 = vadd.f32 %v3187, %v3188
    %v3190 = vrot.slane %v3189, 1
    %v3191 = vadd.f32 %v3189, %v3190
    %v3192 = vmul.f32 %v3149, %v412
    %v3193 = vmul.f32 %v3155, %v412
    %v3194 = vmul.f32 %v3161, %v412
    %v3195 = vmul.f32 %v3167, %v412
    %v3196 = vmul.f32 %v3173, %v412
    %v3197 = vmul.f32 %v3179, %v412
    %v3198 = vmul.f32 %v3185, %v412
    %v3199 = vmul.f32 %v3191, %v412
    %v3200 = vsub.f32 %v2777, %v3192
    %v3201 = vsub.f32 %v2829, %v3193
    %v3202 = vsub.f32 %v2881, %v3194
    %v3203 = vsub.f32 %v2933, %v3195
    %v3204 = vsub.f32 %v2985, %v3196
    %v3205 = vsub.f32 %v3037, %v3197
    %v3206 = vsub.f32 %v3089, %v3198
    %v3207 = vsub.f32 %v3141, %v3199
    %v3208 = vmul.f32 %v3200, %v3200
    %v3209 = vmul.f32 %v3201, %v3201
    %v3210 = vmul.f32 %v3202, %v3202
    %v3211 = vmul.f32 %v3203, %v3203
    %v3212 = vmul.f32 %v3204, %v3204
    %v3213 = vmul.f32 %v3205, %v3205
    %v3214 = vmul.f32 %v3206, %v3206
    %v3215 = vmul.f32 %v3207, %v3207
    %v3216 = vrot.slane %v3208, 4
    %v3217 = vadd.f32 %v3208, %v3216
    %v3218 = vrot.slane %v3217, 2
    %v3219 = vadd.f32 %v3217, %v3218
    %v3220 = vrot.slane %v3219, 1
    %v3221 = vadd.f32 %v3219, %v3220
    %v3222 = vrot.slane %v3209, 4
    %v3223 = vadd.f32 %v3209, %v3222
    %v3224 = vrot.slane %v3223, 2
    %v3225 = vadd.f32 %v3223, %v3224
    %v3226 = vrot.slane %v3225, 1
    %v3227 = vadd.f32 %v3225, %v3226
    %v3228 = vrot.slane %v3210, 4
    %v3229 = vadd.f32 %v3210, %v3228
    %v3230 = vrot.slane %v3229, 2
    %v3231 = vadd.f32 %v3229, %v3230
    %v3232 = vrot.slane %v3231, 1
    %v3233 = vadd.f32 %v3231, %v3232
    %v3234 = vrot.slane %v3211, 4
    %v3235 = vadd.f32 %v3211, %v3234
    %v3236 = vrot.slane %v3235, 2
    %v3237 = vadd.f32 %v3235, %v3236
    %v3238 = vrot.slane %v3237, 1
    %v3239 = vadd.f32 %v3237, %v3238
    %v3240 = vrot.slane %v3212, 4
    %v3241 = vadd.f32 %v3212, %v3240
    %v3242 = vrot.slane %v3241, 2
    %v3243 = vadd.f32 %v3241, %v3242
    %v3244 = vrot.slane %v3243, 1
    %v3245 = vadd.f32 %v3243, %v3244
    %v3246 = vrot.slane %v3213, 4
    %v3247 = vadd.f32 %v3213, %v3246
    %v3248 = vrot.slane %v3247, 2
    %v3249 = vadd.f32 %v3247, %v3248
    %v3250 = vrot.slane %v3249, 1
    %v3251 = vadd.f32 %v3249, %v3250
    %v3252 = vrot.slane %v3214, 4
    %v3253 = vadd.f32 %v3214, %v3252
    %v3254 = vrot.slane %v3253, 2
    %v3255 = vadd.f32 %v3253, %v3254
    %v3256 = vrot.slane %v3255, 1
    %v3257 = vadd.f32 %v3255, %v3256
    %v3258 = vrot.slane %v3215, 4
    %v3259 = vadd.f32 %v3215, %v3258
    %v3260 = vrot.slane %v3259, 2
    %v3261 = vadd.f32 %v3259, %v3260
    %v3262 = vrot.slane %v3261, 1
    %v3263 = vadd.f32 %v3261, %v3262
    %v3264 = vmul.f32 %v3221, %v412
    %v3265 = vmul.f32 %v3227, %v412
    %v3266 = vmul.f32 %v3233, %v412
    %v3267 = vmul.f32 %v3239, %v412
    %v3268 = vmul.f32 %v3245, %v412
    %v3269 = vmul.f32 %v3251, %v412
    %v3270 = vmul.f32 %v3257, %v412
    %v3271 = vmul.f32 %v3263, %v412
    %v3272 = vld [vmem:[#allocation19] sm:$0xff]
    %v3273 = vadd.f32 %v3264, 1e-05
    %v3274 = vadd.f32 %v3265, 1e-05
    %v3275 = vadd.f32 %v3266, 1e-05
    %v3276 = vadd.f32 %v3267, 1e-05
    %v3277 = vadd.f32 %v3268, 1e-05
    %v3278 = vadd.f32 %v3269, 1e-05
    %v3279 = vadd.f32 %v3270, 1e-05
    %v3280 = vadd.f32 %v3271, 1e-05
    %v3281 = vrsqrt.pop %v3273
    %v3282 = vmul.f32 %v3281, %v3273
    %v3283 = vmul.f32 %v3282, %v3281
    %v3284 = vmul.f32 0.5, %v3283
    %v3285 = vsub.f32 1.5, %v3284
    %v3286 = vmul.f32 %v3281, %v3285
    %vm3287 = vweird.f32 %v3273
    %vm3288 = vweird.f32 %v3281
    %vm3289 = vmor %vm3287, %vm3288
    %v3290 = vsel %vm3289, %v3281, %v3286
    %v3291 = vrsqrt.pop %v3274
    %v3292 = vmul.f32 %v3291, %v3274
    %v3293 = vmul.f32 %v3292, %v3291
    %v3294 = vmul.f32 0.5, %v3293
    %v3295 = vsub.f32 1.5, %v3294
    %v3296 = vmul.f32 %v3291, %v3295
    %vm3297 = vweird.f32 %v3274
    %vm3298 = vweird.f32 %v3291
    %vm3299 = vmor %vm3297, %vm3298
    %v3300 = vsel %vm3299, %v3291, %v3296
    %v3301 = vrsqrt.pop %v3275
    %v3302 = vmul.f32 %v3301, %v3275
    %v3303 = vmul.f32 %v3302, %v3301
    %v3304 = vmul.f32 0.5, %v3303
    %v3305 = vsub.f32 1.5, %v3304
    %v3306 = vmul.f32 %v3301, %v3305
    %vm3307 = vweird.f32 %v3275
    %vm3308 = vweird.f32 %v3301
    %vm3309 = vmor %vm3307, %vm3308
    %v3310 = vsel %vm3309, %v3301, %v3306
    %v3311 = vrsqrt.pop %v3276
    %v3312 = vmul.f32 %v3311, %v3276
    %v3313 = vmul.f32 %v3312, %v3311
    %v3314 = vmul.f32 0.5, %v3313
    %v3315 = vsub.f32 1.5, %v3314
    %v3316 = vmul.f32 %v3311, %v3315
    %vm3317 = vweird.f32 %v3276
    %vm3318 = vweird.f32 %v3311
    %vm3319 = vmor %vm3317, %vm3318
    %v3320 = vsel %vm3319, %v3311, %v3316
    %v3321 = vrsqrt.pop %v3277
    %v3322 = vmul.f32 %v3321, %v3277
    %v3323 = vmul.f32 %v3322, %v3321
    %v3324 = vmul.f32 0.5, %v3323
    %v3325 = vsub.f32 1.5, %v3324
    %v3326 = vmul.f32 %v3321, %v3325
    %vm3327 = vweird.f32 %v3277
    %vm3328 = vweird.f32 %v3321
    %vm3329 = vmor %vm3327, %vm3328
    %v3330 = vsel %vm3329, %v3321, %v3326
    %v3331 = vrsqrt.pop %v3278
    %v3332 = vmul.f32 %v3331, %v3278
    %v3333 = vmul.f32 %v3332, %v3331
    %v3334 = vmul.f32 0.5, %v3333
    %v3335 = vsub.f32 1.5, %v3334
    %v3336 = vmul.f32 %v3331, %v3335
    %vm3337 = vweird.f32 %v3278
    %vm3338 = vweird.f32 %v3331
    %vm3339 = vmor %vm3337, %vm3338
    %v3340 = vsel %vm3339, %v3331, %v3336
    %v3341 = vrsqrt.pop %v3279
    %v3342 = vmul.f32 %v3341, %v3279
    %v3343 = vmul.f32 %v3342, %v3341
    %v3344 = vmul.f32 0.5, %v3343
    %v3345 = vsub.f32 1.5, %v3344
    %v3346 = vmul.f32 %v3341, %v3345
    %vm3347 = vweird.f32 %v3279
    %vm3348 = vweird.f32 %v3341
    %vm3349 = vmor %vm3347, %vm3348
    %v3350 = vsel %vm3349, %v3341, %v3346
    %v3351 = vrsqrt.pop %v3280
    %v3352 = vmul.f32 %v3351, %v3280
    %v3353 = vmul.f32 %v3352, %v3351
    %v3354 = vmul.f32 0.5, %v3353
    %v3355 = vsub.f32 1.5, %v3354
    %v3356 = vmul.f32 %v3351, %v3355
    %vm3357 = vweird.f32 %v3280
    %vm3358 = vweird.f32 %v3351
    %vm3359 = vmor %vm3357, %vm3358
    %v3360 = vsel %vm3359, %v3351, %v3356
    %v3369 = vrot.slane %v3300, 7
    %v3370 = vrot.slane %v3310, 6
    %v3371 = vrot.slane %v3320, 5
    %v3372 = vrot.slane %v3330, 4
    %v3373 = vrot.slane %v3340, 3
    %v3374 = vrot.slane %v3350, 2
    %v3375 = vrot.slane %v3360, 1
    %v3376 = vsel %vm459, %v3290, %v3369
    %v3377 = vsel %vm1109, %v3370, %v3371
    %v3378 = vsel %vm1111, %v3376, %v3377
    %vm3379 = vcmask 1044484
    %v3380 = vsel %vm3379, %v3372, %v3373
    %vm3381 = vcmask 1046534
    %v3382 = vsel %vm3381, %v3374, %v3375
    %vm3383 = vcmask 1045508
    %v3384 = vsel %vm3383, %v3380, %v3382
    %vm3385 = vcmask 1043456
    %v3386 = vsel %vm3385, %v3378, %v3384
    %v3388 = vmul.f32 %v3272, %v3386
    %v3389 = vld [vmem:[#allocation20] sm:$0xff]
    %v3391 = vperm.slane %v3388, 0
    %v3392 = vperm.slane %v3388, 1
    %v3393 = vperm.slane %v3388, 2
    %v3394 = vperm.slane %v3388, 3
    %v3395 = vperm.slane %v3388, 4
    %v3396 = vperm.slane %v3388, 5
    %v3397 = vperm.slane %v3388, 6
    %v3398 = vperm.slane %v3388, 7
    %v3407 = vmul.f32 %v3192, %v3391
    %v3408 = vmul.f32 %v3193, %v3392
    %v3409 = vmul.f32 %v3194, %v3393
    %v3410 = vmul.f32 %v3195, %v3394
    %v3411 = vmul.f32 %v3196, %v3395
    %v3412 = vmul.f32 %v3197, %v3396
    %v3413 = vmul.f32 %v3198, %v3397
    %v3414 = vmul.f32 %v3199, %v3398
    %v3423 = vrot.slane %v3408, 7
    %v3424 = vrot.slane %v3409, 6
    %v3425 = vrot.slane %v3410, 5
    %v3426 = vrot.slane %v3411, 4
    %v3427 = vrot.slane %v3412, 3
    %v3428 = vrot.slane %v3413, 2
    %v3429 = vrot.slane %v3414, 1
    %v3430 = vsel %vm459, %v3407, %v3423
    %v3431 = vsel %vm1109, %v3424, %v3425
    %v3432 = vsel %vm1111, %v3430, %v3431
    %v3433 = vsel %vm3379, %v3426, %v3427
    %v3434 = vsel %vm3381, %v3428, %v3429
    %v3435 = vsel %vm3383, %v3433, %v3434
    %v3436 = vsel %vm3385, %v3432, %v3435
    %v3438 = vsub.f32 %v3389, %v3436
    %v3439 = vmul.f32 %v2777, %v3391
    %v3440 = vmul.f32 %v2829, %v3392
    %v3441 = vmul.f32 %v2881, %v3393
    %v3442 = vmul.f32 %v2933, %v3394
    %v3443 = vmul.f32 %v2985, %v3395
    %v3444 = vmul.f32 %v3037, %v3396
    %v3445 = vmul.f32 %v3089, %v3397
    %v3446 = vmul.f32 %v3141, %v3398
    %v3448 = vperm.slane %v3438, 0
    %v3449 = vperm.slane %v3438, 1
    %v3450 = vperm.slane %v3438, 2
    %v3451 = vperm.slane %v3438, 3
    %v3452 = vperm.slane %v3438, 4
    %v3453 = vperm.slane %v3438, 5
    %v3454 = vperm.slane %v3438, 6
    %v3455 = vperm.slane %v3438, 7
    %v3464 = vadd.f32 %v3439, %v3448
    %v3465 = vadd.f32 %v3440, %v3449
    %v3466 = vadd.f32 %v3441, %v3450
    %v3467 = vadd.f32 %v3442, %v3451
    %v3468 = vadd.f32 %v3443, %v3452
    %v3469 = vadd.f32 %v3444, %v3453
    %v3470 = vadd.f32 %v3445, %v3454
    %v3471 = vadd.f32 %v3446, %v3455
    %vm3472 = vcmp.gt.f32.partialorder %v3464, 0.0
    %vm3473 = vcmp.gt.f32.partialorder %v3465, 0.0
    %vm3474 = vcmp.gt.f32.partialorder %v3466, 0.0
    %vm3475 = vcmp.gt.f32.partialorder %v3467, 0.0
    %vm3476 = vcmp.gt.f32.partialorder %v3468, 0.0
    %vm3477 = vcmp.gt.f32.partialorder %v3469, 0.0
    %vm3478 = vcmp.gt.f32.partialorder %v3470, 0.0
    %vm3479 = vcmp.gt.f32.partialorder %v3471, 0.0
    %v3480 = vmul.f32 %v3464, 0.2
    %v3481 = vmul.f32 %v3465, 0.2
    %v3482 = vmul.f32 %v3466, 0.2
    %v3483 = vmul.f32 %v3467, 0.2
    %v3484 = vmul.f32 %v3468, 0.2
    %v3485 = vmul.f32 %v3469, 0.2
    %v3486 = vmul.f32 %v3470, 0.2
    %v3487 = vmul.f32 %v3471, 0.2
    %v3488 = vsel %vm3472, %v3464, %v3480
    %v3489 = vsel %vm3473, %v3465, %v3481
    %v3490 = vsel %vm3474, %v3466, %v3482
    %v3491 = vsel %vm3475, %v3467, %v3483
    %v3492 = vsel %vm3476, %v3468, %v3484
    %v3493 = vsel %vm3477, %v3469, %v3485
    %v3494 = vsel %vm3478, %v3470, %v3486
    %v3495 = vsel %vm3479, %v3471, %v3487
    %v3496 = vpack.c.bf16 %v3489, %v3488
    %v3497 = vpack.c.bf16 %v3491, %v3490
    %v3498 = vpack.c.bf16 %v3493, %v3492
    %v3499 = vpack.c.bf16 %v3495, %v3494
    %3500 = vst [vmem:[#allocation22] sm:$0xff] %v3496
    %3501 = vst [vmem:[#allocation22 + $0x8] sm:$0xff] %v3497
    %3502 = vst [vmem:[#allocation22 + $0x10] sm:$0xff] %v3498
    %3503 = vst [vmem:[#allocation22 + $0x18] sm:$0xff] %v3499
    // Predicated region
    $region110: #{tpu_custom_call.1} parent=1 // pred_check
      _
    $region111: #{tpu_custom_call.1} parent=1 // pred_check_branch
      %3505 = sbr.rel (0) target = $region113
    $region112: #{tpu_custom_call.1} parent=1 // pred_region
      %3507 = vsyncadd [#allocation4], 0
      %s3509 = sshll.u32 [#allocation22], 4
      %s3510 = int_to_ptr.vmem [resolvable:$true] %s3509
      %s3511 = sshll.u32 %s15, 4
      %s3512 = int_to_ptr.hbm [resolvable:$true] %s3511
      %3514 = dma.vmem_to_hbm [thread:$0]  %s3510, 512, %s3512, [#allocation4]
    $region113: #{tpu_custom_call.1} parent=1 // pred_fallthru
      _
    // Predicated region
    $region114: #{tpu_custom_call.1} parent=1 // pred_check
      _
    $region115: #{tpu_custom_call.1} parent=1 // pred_check_branch
      %3516 = sbr.rel (0) target = $region117
    $region116: #{tpu_custom_call.1} parent=1 // pred_region
      %3518 = dma.done [#allocation4], 512
    $region117: #{tpu_custom_call.1} parent=1 // pred_fallthru
      _
    %3519 = vsyncpa [#allocation3], 1
    %3520 = vsyncpa [#allocation6], 1
    %3521 = vsyncpa [#allocation9], 1
    %3522 = vsyncpa [#allocation12], 1
    %3523 = vsyncpa [#allocation15], 1
    %3524 = vsyncpa [#allocation18], 1
    %3525 = vsyncpa [#allocation21], 1
    %3526 = vsyncpa [#allocation4], 1

</llo_original>
